<compile_context>
chip_gen: v6e
topology: v6e:2x2x1
jax: 0.10.0
libtpu: 0.0.40
codegen_flags: <defaults>
</compile_context>

<pallas_src>
import functools

import jax
import jax.numpy as jnp
from jax.experimental import pallas as pl
from jax.experimental.pallas import tpu as pltpu


# --------------------------------------------------------------------------
# In-kernel helpers
# --------------------------------------------------------------------------

def _vpu_matmul(w, x):
    """(Co, Ci) @ (NB, Ci, P) -> (NB, Co, P) as unrolled VPU broadcast-FMAs.

    Ci/Co are tiny (<= 32), so this keeps the work off the MXU (whose column
    streaming would scale with P at <1% array utilization) and keeps full f32
    accuracy (no implicit bf16 MXU truncation)."""
    _, ci = w.shape
    out = w[None, :, 0:1] * x[:, 0:1, :]
    for k in range(1, ci):
        out = out + w[None, :, k:k + 1] * x[:, k:k + 1, :]
    return out


def _fused_cdg_kernel(
        # scalar prefetch
        label_ref,
        # inputs
        x_ref, tgt_ref,
        w0_ref, b0_ref, w1_ref, b1_ref,
        wg_ref, bg_ref, wfc_ref, bfc_ref, wafc_ref, bafc_ref,
        # outputs
        gen_ref, cls_ref, acls_ref, nll_ref, anll_ref, l1_ref,
        # scratch (persist across the HW-tile reduction axis)
        ph1_acc, pg1_acc, l1_acc,
        *, hw_total, tile_hw, num_scales, nb_blk):
    """Grid = (model, batch_block, hw_tile).  Channels-first layout throughout:
    features are (NB, channels, pixels) so pixels sit on the 128-lane axis."""
    b = pl.program_id(1)
    t = pl.program_id(2)
    needs_mask = (hw_total % tile_hw) != 0          # static python bool
    f32 = jnp.float32

    @pl.when(t == 0)
    def _init():
        ph1_acc[...] = jnp.zeros_like(ph1_acc)
        pg1_acc[...] = jnp.zeros_like(pg1_acc)
        l1_acc[...] = jnp.zeros_like(l1_acc)

    x = x_ref[...].astype(f32)                      # (NB, C, P) bf16 -> f32
    w0, b0 = w0_ref[...], b0_ref[...]               # (H1, C), (H1, 1)
    w1, b1 = w1_ref[...], b1_ref[...]               # (H2, H1), (H2, 1)

    # encoder (1x1 conv + relu), entirely in VMEM/vregs, VPU only
    h0 = jnp.maximum(_vpu_matmul(w0, x) + b0, 0.0)      # (NB, H1, P)
    h1 = jnp.maximum(_vpu_matmul(w1, h0) + b1, 0.0)     # (NB, H2, P)

    # translation head (tanh) -- produced in channels-first layout: lane-dense
    # store, gen images stay in native NCHW (flattened HW) end to end.
    gen = jnp.tanh(_vpu_matmul(wg_ref[...], h1) + bg_ref[...])   # (NB, C, P)
    gen_ref[...] = gen.astype(gen_ref.dtype)

    # auxiliary branch: re-encode the generated image with the same encoder
    g0 = jnp.maximum(_vpu_matmul(w0, gen) + b0, 0.0)
    g1 = jnp.maximum(_vpu_matmul(w1, g0) + b1, 0.0)

    # perceptual / content L1 vs. every scale of the other modality
    def tgt_scale(s):
        if len(tgt_ref.shape) == 4:                 # (S, NB, C, P)
            return tgt_ref[s].astype(f32)
        return tgt_ref[...].astype(f32)             # fast path: (NB, C, P)

    l1_part = jnp.abs(gen - tgt_scale(0))
    for s in range(1, num_scales):                  # static, tiny unrolled loop
        l1_part = l1_part + jnp.abs(gen - tgt_scale(s))

    if needs_mask:
        # ragged last HW tile: exclude the out-of-bounds columns from every
        # reduction (the partial gen store is clipped by Pallas itself).
        col = (jax.lax.broadcasted_iota(jnp.int32, (1, 1, tile_hw), 2)
               + t * tile_hw)
        valid = col < hw_total
        h1 = jnp.where(valid, h1, 0.0)
        g1 = jnp.where(valid, g1, 0.0)
        l1_part = jnp.where(valid, l1_part, 0.0)

    # lane-wide accumulation: full-vreg VALU adds every tile, cross-lane
    # reductions only once in the finalize step (also avoids f32 drift from
    # collapsing millions of pixels into a single scalar each tile).
    ph1_acc[...] += h1
    pg1_acc[...] += g1
    l1_acc[...] += l1_part

    @pl.when(t == pl.num_programs(2) - 1)
    def _finalize():
        inv_hw = jnp.float32(1.0 / hw_total)
        pooled = jnp.sum(ph1_acc[...], axis=2, keepdims=True) * inv_hw    # (NB, H2, 1)
        pooled_g = jnp.sum(pg1_acc[...], axis=2, keepdims=True) * inv_hw

        # tiny FC heads once per block, full f32 on the VPU (no MXU anywhere)
        logits = jnp.sum(pooled * wfc_ref[...][None], axis=1) + bfc_ref[...]        # (NB, NC)
        aux_logits = jnp.sum(pooled_g * wafc_ref[...][None], axis=1) + bafc_ref[...]

        l1_c = jnp.sum(l1_acc[...], axis=2, keepdims=True)                # (NB, C, 1)
        l1_ref[...] = jnp.sum(l1_c, axis=1, keepdims=True)                # (NB, 1, 1)

        for nb in range(nb_blk):                    # static, small unrolled loop
            lbl = label_ref[b * nb_blk + nb]        # SMEM scalar
            for lg, c_ref, n_ref in ((logits, cls_ref, nll_ref),
                                     (aux_logits, acls_ref, anll_ref)):
                row = lg[nb:nb + 1, :]              # (1, NC)
                c_ref[nb, :, :] = row
                m = jnp.max(row, axis=1, keepdims=True)
                lse = m + jnp.log(jnp.sum(jnp.exp(row - m), axis=1, keepdims=True))
                cols = jax.lax.broadcasted_iota(jnp.int32, row.shape, 1)
                picked = jnp.sum(jnp.where(cols == lbl, row, 0.0),
                                 axis=1, keepdims=True)
                n_ref[nb, :, :] = lse - picked      # CE (== nn.CrossEntropyLoss) per row


# --------------------------------------------------------------------------
# Tiling heuristics
# --------------------------------------------------------------------------

def _choose_tile_hw(hw, max_tile=8192):
    """Full extent for small images; otherwise the largest 128-multiple divisor
    <= 8192 px, or 8192 with a masked ragged last tile (never the full image,
    which could blow v7x's 64 MiB VMEM / v5e's 16 MiB scoped default)."""
    if hw <= max_tile:
        return hw
    for cand in range(max_tile - max_tile % 128, 0, -128):
        if hw % cand == 0:
            return cand
    return max_tile          # non-divisor: kernel masks the ragged last tile


def _choose_batch_block(n, hw, target_px=8192):
    """Batch elements per grid step so that NB*HW ~ target_px (amortizes the
    ~0.35us/step grid overhead + weight reloads for small images)."""
    nb = max(1, min(n, target_px // max(hw, 1)))
    while n % nb:
        nb -= 1
    return nb


# --------------------------------------------------------------------------
# Parameter packing (model axis stacked, kernel-ready orientation)
# --------------------------------------------------------------------------

def _pack_fusion_params(params):
    rgb, dep = params["rgb_model"], params["depth_model"]
    afr, afd = params["aux_fc_rgb"], params["aux_fc_depth"]

    def stk(a, b):
        return jnp.stack([a, b], axis=0)

    return dict(
        w0=stk(rgb["w0"].T, dep["w0"].T),                   # (2, H1, C)
        b0=stk(rgb["b0"], dep["b0"])[:, :, None],           # (2, H1, 1)
        w1=stk(rgb["w1"].T, dep["w1"].T),                   # (2, H2, H1)
        b1=stk(rgb["b1"], dep["b1"])[:, :, None],           # (2, H2, 1)
        wg=stk(rgb["w_gen"].T, dep["w_gen"].T),             # (2, C, H2)
        bg=stk(rgb["b_gen"], dep["b_gen"])[:, :, None],     # (2, C, 1)
        wfc=stk(rgb["w_fc"], dep["w_fc"]),                  # (2, H2, NC)
        bfc=stk(rgb["b_fc"], dep["b_fc"])[:, None, :],      # (2, 1, NC)
        wafc=stk(afr[0], afd[0]),                           # (2, H2, NC)
        bafc=stk(afr[1], afd[1])[:, None, :],               # (2, 1, NC)
    )


# --------------------------------------------------------------------------
# Fused forward (single pallas_call)
# --------------------------------------------------------------------------

@functools.partial(jax.jit, static_argnames=("flip_tgt",))
def _fused_forward(params, input_rgb, input_depth, rgb_ms, depth_ms, label,
                   *, flip_tgt):
    N, C, H, W = input_rgb.shape
    HW = H * W
    bf16 = jnp.bfloat16
    f32 = jnp.float32

    packed = _pack_fusion_params(params)
    H1 = packed["w0"].shape[1]
    H2 = packed["w1"].shape[1]
    NC = packed["wfc"].shape[2]

    # bf16 HBM storage for all image-sized tensors; the stack+cast fuses into a
    # single HBM pass inside this jit.
    x = jnp.stack([input_rgb, input_depth], axis=0).reshape(2, N, C, HW).astype(bf16)

    tile_hw = _choose_tile_hw(HW)
    nb = _choose_batch_block(N, HW)
    n_t = pl.cdiv(HW, tile_hw)
    grid = (2, N // nb, n_t)

    if flip_tgt:
        # S==1 and each model's target is the other modality's input: reuse x
        # through a model-flipped BlockSpec, no target materialization at all.
        S = 1
        tgt = x
        tgt_spec = pl.BlockSpec((None, nb, C, tile_hw),
                                lambda m, b, t, lbl: (1 - m, b, 0, t))
    else:
        # TODO(synk): for true multi-scale targets, pre-pack this tensor once
        # at data-load time instead of per forward (it is a full HBM copy) and
        # note all scales must share the input spatial size here.
        S = len(depth_ms)
        tgt = jnp.stack([jnp.stack(tuple(depth_ms), axis=0),
                         jnp.stack(tuple(rgb_ms), axis=0)],
                        axis=0).reshape(2, S, N, C, HW).astype(bf16)
        tgt_spec = pl.BlockSpec((None, S, nb, C, tile_hw),
                                lambda m, b, t, lbl: (m, 0, b, 0, t))

    kernel = functools.partial(_fused_cdg_kernel, hw_total=HW, tile_hw=tile_hw,
                               num_scales=S, nb_blk=nb)

    in_specs = [
        pl.BlockSpec((None, nb, C, tile_hw), lambda m, b, t, lbl: (m, b, 0, t)),   # x
        tgt_spec,                                                                   # targets
        pl.BlockSpec((None, H1, C),  lambda m, b, t, lbl: (m, 0, 0)),   # w0^T
        pl.BlockSpec((None, H1, 1),  lambda m, b, t, lbl: (m, 0, 0)),   # b0
        pl.BlockSpec((None, H2, H1), lambda m, b, t, lbl: (m, 0, 0)),   # w1^T
        pl.BlockSpec((None, H2, 1),  lambda m, b, t, lbl: (m, 0, 0)),   # b1
        pl.BlockSpec((None, C, H2),  lambda m, b, t, lbl: (m, 0, 0)),   # w_gen^T
        pl.BlockSpec((None, C, 1),   lambda m, b, t, lbl: (m, 0, 0)),   # b_gen
        pl.BlockSpec((None, H2, NC), lambda m, b, t, lbl: (m, 0, 0)),   # w_fc
        pl.BlockSpec((None, 1, NC),  lambda m, b, t, lbl: (m, 0, 0)),   # b_fc
        pl.BlockSpec((None, H2, NC), lambda m, b, t, lbl: (m, 0, 0)),   # w_aux_fc
        pl.BlockSpec((None, 1, NC),  lambda m, b, t, lbl: (m, 0, 0)),   # b_aux_fc
    ]
    out_specs = [
        pl.BlockSpec((None, nb, C, tile_hw), lambda m, b, t, lbl: (m, b, 0, t)),  # gen (NCHW)
        pl.BlockSpec((None, nb, 1, NC), lambda m, b, t, lbl: (m, b, 0, 0)),       # cls logits
        pl.BlockSpec((None, nb, 1, NC), lambda m, b, t, lbl: (m, b, 0, 0)),       # aux cls logits
        pl.BlockSpec((None, nb, 1, 1),  lambda m, b, t, lbl: (m, b, 0, 0)),       # CE nll
        pl.BlockSpec((None, nb, 1, 1),  lambda m, b, t, lbl: (m, b, 0, 0)),       # aux CE nll
        pl.BlockSpec((None, nb, 1, 1),  lambda m, b, t, lbl: (m, b, 0, 0)),       # L1 sum
    ]
    out_shape = (
        jax.ShapeDtypeStruct((2, N, C, HW), bf16),
        jax.ShapeDtypeStruct((2, N, 1, NC), f32),
        jax.ShapeDtypeStruct((2, N, 1, NC), f32),
        jax.ShapeDtypeStruct((2, N, 1, 1), f32),
        jax.ShapeDtypeStruct((2, N, 1, 1), f32),
        jax.ShapeDtypeStruct((2, N, 1, 1), f32),
    )

    gen, cls, acls, nll, anll, l1s = pl.pallas_call(
        kernel,
        out_shape=out_shape,
        grid_spec=pltpu.PrefetchScalarGridSpec(
            num_scalar_prefetch=1,
            grid=grid,
            in_specs=in_specs,
            out_specs=out_specs,
            scratch_shapes=[
                pltpu.VMEM((nb, H2, tile_hw), f32),   # lane-wide pooled h1 acc
                pltpu.VMEM((nb, H2, tile_hw), f32),   # lane-wide pooled g1 (aux) acc
                pltpu.VMEM((nb, C, tile_hw), f32),    # lane-wide L1 acc
            ]),
        compiler_params=pltpu.CompilerParams(
            # model & batch shard across TensorCores (v7x: 2 TCs);
            # the HW axis carries the pooling / L1 reduction -> arbitrary.
            dimension_semantics=("parallel", "parallel", "arbitrary"),
            vmem_limit_bytes=32 * 1024 * 1024),
    )(label, x, tgt,
      packed["w0"], packed["b0"], packed["w1"], packed["b1"],
      packed["wg"], packed["bg"], packed["wfc"], packed["bfc"],
      packed["wafc"], packed["bafc"])

    return dict(gen=gen,                       # (2, N, C, HW) NCHW layout, bf16
                cls=cls[:, :, 0, :],           # (2, N, NC)
                aux_cls=acls[:, :, 0, :],
                nll=nll[:, :, 0, 0],           # (2, N)
                aux_nll=anll[:, :, 0, 0],
                l1=l1s[:, :, 0, 0])


# --------------------------------------------------------------------------
# Fusion_CDG forward
# --------------------------------------------------------------------------

def fusion_cdg_forward(params, input_rgb, input_depth, rgb_ms, depth_ms, label,
                       phase=None, cal_loss=True, no_trans=False,
                       loss_types=("CLS", "PERCEPTUAL", "AUX_CLS")):
    del phase
    N, C, H, W = input_rgb.shape
    HW = H * W
    S = len(depth_ms)
    assert len(rgb_ms) == S

    # rgb model translates towards the depth modality (targets = depth_ms) and
    # vice versa.  If the single-scale targets are exactly the other modality's
    # inputs, no target tensor is built at all (flipped BlockSpec on x).
    fast_path = (S == 1 and rgb_ms[0] is input_rgb and depth_ms[0] is input_depth)

    # TODO(synk): when cal_loss=False the fused kernel still computes the loss
    # terms (cheap relative to the gen path); they are simply dropped below.
    out = _fused_forward(params, input_rgb, input_depth,
                         tuple(rgb_ms), tuple(depth_ms),
                         label.astype(jnp.int32), flip_tgt=fast_path)

    result = {}
    if not no_trans:
        # bf16 generated images (halves HBM writeback; see perf notes above).
        result["gen_depth"] = out["gen"][0].reshape(N, C, H, W)
        result["gen_rgb"] = out["gen"][1].reshape(N, C, H, W)
    if "PERCEPTUAL" in loss_types and cal_loss:
        denom = jnp.float32(N * C * HW)
        result["loss_content"] = (jnp.sum(out["l1"][0]) + jnp.sum(out["l1"][1])) / denom
    if "CLS" in loss_types:
        result["cls_rgb"] = out["cls"][0]
        result["cls_depth"] = out["cls"][1]
        if cal_loss:
            result["loss_cls"] = jnp.mean(out["nll"][0]) + jnp.mean(out["nll"][1])
    if "AUX_CLS" in loss_types and cal_loss:
        result["loss_aux_cls"] = (jnp.mean(out["aux_nll"][0])
                                  + jnp.mean(out["aux_nll"][1]))
    return result


# --------------------------------------------------------------------------
# Deterministic parameter construction
# --------------------------------------------------------------------------

def _init_linear(key, cin, cout, scale=0.1):
    kw, kb = jax.random.split(key)
    w = scale * jax.random.normal(kw, (cin, cout), jnp.float32)
    b = scale * jax.random.normal(kb, (cout,), jnp.float32)
    return w, b


def _init_submodel(key, cin, h1, h2, num_classes):
    k0, k1, k2, k3 = jax.random.split(key, 4)
    w0, b0 = _init_linear(k0, cin, h1)
    w1, b1 = _init_linear(k1, h1, h2)
    wg, bg = _init_linear(k2, h2, cin)
    wf, bf = _init_linear(k3, h2, num_classes)
    return dict(w0=w0, b0=b0, w1=w1, b1=b1, w_gen=wg, b_gen=bg, w_fc=wf, b_fc=bf)


def init_fusion_cdg_params(key, cin, h1, h2, num_classes):
    ka, kb = jax.random.split(key)
    rgb = _init_submodel(ka, cin, h1, h2, num_classes)
    depth = _init_submodel(kb, cin, h1, h2, num_classes)
    # __init__: aux_fc_rgb and aux_fc_depth are both deep copies of rgb_model.fc
    aux_fc_rgb = (rgb["w_fc"], rgb["b_fc"])
    aux_fc_depth = (rgb["w_fc"], rgb["b_fc"])
    return dict(rgb_model=rgb, depth_model=depth,
                aux_fc_rgb=aux_fc_rgb, aux_fc_depth=aux_fc_depth)


# --------------------------------------------------------------------------
# main
# --------------------------------------------------------------------------

if __name__ == "__main__":
    N, C, H, W = 2, 4, 16, 16
    H1, H2 = 16, 32
    NUM_CLASSES = 8

    key = jax.random.PRNGKey(0)
    k_rgb, k_depth, k_label, k_params = jax.random.split(key, 4)

    input_rgb = jax.random.normal(k_rgb, (N, C, H, W), jnp.float32)
    input_depth = jax.random.normal(k_depth, (N, C, H, W), jnp.float32)
    # single-scale "multi-scale" targets for the perceptual loss
    rgb_ms = [input_rgb]
    depth_ms = [input_depth]
    label = jax.random.randint(k_label, (N,), 0, NUM_CLASSES)

    params = init_fusion_cdg_params(k_params, C, H1, H2, NUM_CLASSES)

    result = fusion_cdg_forward(params, input_rgb, input_depth,
                                rgb_ms, depth_ms, label, cal_loss=True)
    jax.block_until_ready(result)

    assert result["gen_depth"].shape == (N, C, H, W)
    assert result["gen_rgb"].shape == (N, C, H, W)
    assert result["cls_rgb"].shape == (N, NUM_CLASSES)
    assert result["cls_depth"].shape == (N, NUM_CLASSES)
    for k in ("loss_content", "loss_cls", "loss_aux_cls"):
        assert result[k].shape == ()
    print("KERNEL_OK")
</pallas_src>

<mosaic_0001>
module attributes {stable_mosaic.version = 11 : i64} {
  func.func @_fused_cdg_kernel(%arg0: i32, %arg1: i32, %arg2: i32, %arg3: memref<2xi32, #tpu.memory_space<smem>>, %arg4: memref<1x2x4x256xbf16, #tpu.memory_space<vmem>>, %arg5: memref<1x2x4x256xbf16, #tpu.memory_space<vmem>>, %arg6: memref<1x16x4xf32, #tpu.memory_space<vmem>>, %arg7: memref<1x16x1xf32, #tpu.memory_space<vmem>>, %arg8: memref<1x32x16xf32, #tpu.memory_space<vmem>>, %arg9: memref<1x32x1xf32, #tpu.memory_space<vmem>>, %arg10: memref<1x4x32xf32, #tpu.memory_space<vmem>>, %arg11: memref<1x4x1xf32, #tpu.memory_space<vmem>>, %arg12: memref<1x32x8xf32, #tpu.memory_space<vmem>>, %arg13: memref<1x1x8xf32, #tpu.memory_space<vmem>>, %arg14: memref<1x32x8xf32, #tpu.memory_space<vmem>>, %arg15: memref<1x1x8xf32, #tpu.memory_space<vmem>>, %arg16: memref<1x2x4x256xbf16, #tpu.memory_space<vmem>>, %arg17: memref<1x2x1x8xf32, #tpu.memory_space<vmem>>, %arg18: memref<1x2x1x8xf32, #tpu.memory_space<vmem>>, %arg19: memref<1x2x1x1xf32, #tpu.memory_space<vmem>>, %arg20: memref<1x2x1x1xf32, #tpu.memory_space<vmem>>, %arg21: memref<1x2x1x1xf32, #tpu.memory_space<vmem>>, %arg22: memref<2x32x256xf32, #tpu.memory_space<vmem>>, %arg23: memref<2x32x256xf32, #tpu.memory_space<vmem>>, %arg24: memref<2x4x256xf32, #tpu.memory_space<vmem>>) attributes {dimension_semantics = [#tpu.dimension_semantics<parallel>, #tpu.dimension_semantics<parallel>, #tpu.dimension_semantics<arbitrary>], iteration_bounds = array<i64: 2, 1, 1>, scalar_prefetch = 1 : i64, scratch_operands = 3 : i64, tpu.core_type = #tpu.core_type<tc>, window_params = [{transform_indices = @transform_0, window_bounds = array<i64: 1, 2, 4, 256>}, {transform_indices = @transform_1, window_bounds = array<i64: 1, 2, 4, 256>}, {transform_indices = @transform_2, window_bounds = array<i64: 1, 16, 4>}, {transform_indices = @transform_3, window_bounds = array<i64: 1, 16, 1>}, {transform_indices = @transform_4, window_bounds = array<i64: 1, 32, 16>}, {transform_indices = @transform_5, window_bounds = array<i64: 1, 32, 1>}, {transform_indices = @transform_6, window_bounds = array<i64: 1, 4, 32>}, {transform_indices = @transform_7, window_bounds = array<i64: 1, 4, 1>}, {transform_indices = @transform_8, window_bounds = array<i64: 1, 32, 8>}, {transform_indices = @transform_9, window_bounds = array<i64: 1, 1, 8>}, {transform_indices = @transform_10, window_bounds = array<i64: 1, 32, 8>}, {transform_indices = @transform_11, window_bounds = array<i64: 1, 1, 8>}, {transform_indices = @transform_12, window_bounds = array<i64: 1, 2, 4, 256>}, {transform_indices = @transform_13, window_bounds = array<i64: 1, 2, 1, 8>}, {transform_indices = @transform_14, window_bounds = array<i64: 1, 2, 1, 8>}, {transform_indices = @transform_15, window_bounds = array<i64: 1, 2, 1, 1>}, {transform_indices = @transform_16, window_bounds = array<i64: 1, 2, 1, 1>}, {transform_indices = @transform_17, window_bounds = array<i64: 1, 2, 1, 1>}]} {
    %c0_i32 = arith.constant 0 : i32
    %0 = arith.cmpi eq, %arg2, %c0_i32 : i32
    %1 = arith.extui %0 : i1 to i32
    %c0_i32_0 = arith.constant 0 : i32
    %2 = arith.cmpi ne, %1, %c0_i32_0 : i32
    scf.if %2 {
      %cst_53 = arith.constant 0.000000e+00 : f32
      %562 = vector.broadcast %cst_53 : f32 to vector<2x32x256xf32>
      %c0_54 = arith.constant 0 : index
      %c0_55 = arith.constant 0 : index
      %c0_56 = arith.constant 0 : index
      %563 = vector.load %arg22[%c0_54, %c0_55, %c0_56] : memref<2x32x256xf32, #tpu.memory_space<vmem>>, vector<2x32x256xf32>
      tpu.vector_store %arg22[%c0_54, %c0_55, %c0_56], %562 {strides = array<i32>} : memref<2x32x256xf32, #tpu.memory_space<vmem>>, vector<2x32x256xf32>,
      %cst_57 = arith.constant 0.000000e+00 : f32
      %564 = vector.broadcast %cst_57 : f32 to vector<2x32x256xf32>
      %c0_58 = arith.constant 0 : index
      %c0_59 = arith.constant 0 : index
      %c0_60 = arith.constant 0 : index
      %565 = vector.load %arg23[%c0_58, %c0_59, %c0_60] : memref<2x32x256xf32, #tpu.memory_space<vmem>>, vector<2x32x256xf32>
      tpu.vector_store %arg23[%c0_58, %c0_59, %c0_60], %564 {strides = array<i32>} : memref<2x32x256xf32, #tpu.memory_space<vmem>>, vector<2x32x256xf32>,
      %cst_61 = arith.constant 0.000000e+00 : f32
      %566 = vector.broadcast %cst_61 : f32 to vector<2x4x256xf32>
      %c0_62 = arith.constant 0 : index
      %c0_63 = arith.constant 0 : index
      %c0_64 = arith.constant 0 : index
      %567 = vector.load %arg24[%c0_62, %c0_63, %c0_64] : memref<2x4x256xf32, #tpu.memory_space<vmem>>, vector<2x4x256xf32>
      tpu.vector_store %arg24[%c0_62, %c0_63, %c0_64], %566 {strides = array<i32>} : memref<2x4x256xf32, #tpu.memory_space<vmem>>, vector<2x4x256xf32>,
    } else {
    }
    %c0 = arith.constant 0 : index
    %c0_1 = arith.constant 0 : index
    %c0_2 = arith.constant 0 : index
    %c0_3 = arith.constant 0 : index
    %3 = vector.load %arg4[%c0, %c0_1, %c0_2, %c0_3] : memref<1x2x4x256xbf16, #tpu.memory_space<vmem>>, vector<1x2x4x256xbf16>
    %4 = vector.shape_cast %3 : vector<1x2x4x256xbf16> to vector<2x4x256xbf16>
    %5 = arith.extf %4 : vector<2x4x256xbf16> to vector<2x4x256xf32>
    %c0_4 = arith.constant 0 : index
    %c0_5 = arith.constant 0 : index
    %c0_6 = arith.constant 0 : index
    %6 = vector.load %arg6[%c0_4, %c0_5, %c0_6] : memref<1x16x4xf32, #tpu.memory_space<vmem>>, vector<1x16x4xf32>
    %7 = vector.shape_cast %6 : vector<1x16x4xf32> to vector<16x4xf32>
    %c0_7 = arith.constant 0 : index
    %c0_8 = arith.constant 0 : index
    %c0_9 = arith.constant 0 : index
    %8 = vector.load %arg7[%c0_7, %c0_8, %c0_9] : memref<1x16x1xf32, #tpu.memory_space<vmem>>, vector<1x16x1xf32>
    %9 = vector.shape_cast %8 : vector<1x16x1xf32> to vector<16x1xf32>
    %c0_10 = arith.constant 0 : index
    %c0_11 = arith.constant 0 : index
    %c0_12 = arith.constant 0 : index
    %10 = vector.load %arg8[%c0_10, %c0_11, %c0_12] : memref<1x32x16xf32, #tpu.memory_space<vmem>>, vector<1x32x16xf32>
    %11 = vector.shape_cast %10 : vector<1x32x16xf32> to vector<32x16xf32>
    %c0_13 = arith.constant 0 : index
    %c0_14 = arith.constant 0 : index
    %c0_15 = arith.constant 0 : index
    %12 = vector.load %arg9[%c0_13, %c0_14, %c0_15] : memref<1x32x1xf32, #tpu.memory_space<vmem>>, vector<1x32x1xf32>
    %13 = vector.shape_cast %12 : vector<1x32x1xf32> to vector<32x1xf32>
    %14 = vector.extract_strided_slice %7 {offsets = [0, 0], sizes = [16, 1], strides = [1, 1]} : vector<16x4xf32> to vector<16x1xf32>
    %15 = vector.shape_cast %14 : vector<16x1xf32> to vector<1x16x1xf32>
    %16 = vector.extract_strided_slice %5 {offsets = [0, 0, 0], sizes = [2, 1, 256], strides = [1, 1, 1]} : vector<2x4x256xf32> to vector<2x1x256xf32>
    %17 = vector.broadcast %15 : vector<1x16x1xf32> to vector<2x16x256xf32>
    %18 = vector.broadcast %16 : vector<2x1x256xf32> to vector<2x16x256xf32>
    %19 = arith.mulf %17, %18 : vector<2x16x256xf32>
    %20 = vector.extract_strided_slice %7 {offsets = [0, 1], sizes = [16, 1], strides = [1, 1]} : vector<16x4xf32> to vector<16x1xf32>
    %21 = vector.shape_cast %20 : vector<16x1xf32> to vector<1x16x1xf32>
    %22 = vector.extract_strided_slice %5 {offsets = [0, 1, 0], sizes = [2, 1, 256], strides = [1, 1, 1]} : vector<2x4x256xf32> to vector<2x1x256xf32>
    %23 = vector.broadcast %21 : vector<1x16x1xf32> to vector<2x16x256xf32>
    %24 = vector.broadcast %22 : vector<2x1x256xf32> to vector<2x16x256xf32>
    %25 = arith.mulf %23, %24 : vector<2x16x256xf32>
    %26 = arith.addf %19, %25 : vector<2x16x256xf32>
    %27 = vector.extract_strided_slice %7 {offsets = [0, 2], sizes = [16, 1], strides = [1, 1]} : vector<16x4xf32> to vector<16x1xf32>
    %28 = vector.shape_cast %27 : vector<16x1xf32> to vector<1x16x1xf32>
    %29 = vector.extract_strided_slice %5 {offsets = [0, 2, 0], sizes = [2, 1, 256], strides = [1, 1, 1]} : vector<2x4x256xf32> to vector<2x1x256xf32>
    %30 = vector.broadcast %28 : vector<1x16x1xf32> to vector<2x16x256xf32>
    %31 = vector.broadcast %29 : vector<2x1x256xf32> to vector<2x16x256xf32>
    %32 = arith.mulf %30, %31 : vector<2x16x256xf32>
    %33 = arith.addf %26, %32 : vector<2x16x256xf32>
    %34 = vector.extract_strided_slice %7 {offsets = [0, 3], sizes = [16, 1], strides = [1, 1]} : vector<16x4xf32> to vector<16x1xf32>
    %35 = vector.shape_cast %34 : vector<16x1xf32> to vector<1x16x1xf32>
    %36 = vector.extract_strided_slice %5 {offsets = [0, 3, 0], sizes = [2, 1, 256], strides = [1, 1, 1]} : vector<2x4x256xf32> to vector<2x1x256xf32>
    %37 = vector.broadcast %35 : vector<1x16x1xf32> to vector<2x16x256xf32>
    %38 = vector.broadcast %36 : vector<2x1x256xf32> to vector<2x16x256xf32>
    %39 = arith.mulf %37, %38 : vector<2x16x256xf32>
    %40 = arith.addf %33, %39 : vector<2x16x256xf32>
    %41 = vector.shape_cast %9 : vector<16x1xf32> to vector<1x16x1xf32>
    %42 = vector.broadcast %41 : vector<1x16x1xf32> to vector<2x16x256xf32>
    %43 = arith.addf %40, %42 : vector<2x16x256xf32>
    %cst = arith.constant 0.000000e+00 : f32
    %44 = vector.broadcast %cst : f32 to vector<2x16x256xf32>
    %45 = arith.maximumf %43, %44 : vector<2x16x256xf32>
    %46 = vector.extract_strided_slice %11 {offsets = [0, 0], sizes = [32, 1], strides = [1, 1]} : vector<32x16xf32> to vector<32x1xf32>
    %47 = vector.shape_cast %46 : vector<32x1xf32> to vector<1x32x1xf32>
    %48 = vector.extract_strided_slice %45 {offsets = [0, 0, 0], sizes = [2, 1, 256], strides = [1, 1, 1]} : vector<2x16x256xf32> to vector<2x1x256xf32>
    %49 = vector.broadcast %47 : vector<1x32x1xf32> to vector<2x32x256xf32>
    %50 = vector.broadcast %48 : vector<2x1x256xf32> to vector<2x32x256xf32>
    %51 = arith.mulf %49, %50 : vector<2x32x256xf32>
    %52 = vector.extract_strided_slice %11 {offsets = [0, 1], sizes = [32, 1], strides = [1, 1]} : vector<32x16xf32> to vector<32x1xf32>
    %53 = vector.shape_cast %52 : vector<32x1xf32> to vector<1x32x1xf32>
    %54 = vector.extract_strided_slice %45 {offsets = [0, 1, 0], sizes = [2, 1, 256], strides = [1, 1, 1]} : vector<2x16x256xf32> to vector<2x1x256xf32>
    %55 = vector.broadcast %53 : vector<1x32x1xf32> to vector<2x32x256xf32>
    %56 = vector.broadcast %54 : vector<2x1x256xf32> to vector<2x32x256xf32>
    %57 = arith.mulf %55, %56 : vector<2x32x256xf32>
    %58 = arith.addf %51, %57 : vector<2x32x256xf32>
    %59 = vector.extract_strided_slice %11 {offsets = [0, 2], sizes = [32, 1], strides = [1, 1]} : vector<32x16xf32> to vector<32x1xf32>
    %60 = vector.shape_cast %59 : vector<32x1xf32> to vector<1x32x1xf32>
    %61 = vector.extract_strided_slice %45 {offsets = [0, 2, 0], sizes = [2, 1, 256], strides = [1, 1, 1]} : vector<2x16x256xf32> to vector<2x1x256xf32>
    %62 = vector.broadcast %60 : vector<1x32x1xf32> to vector<2x32x256xf32>
    %63 = vector.broadcast %61 : vector<2x1x256xf32> to vector<2x32x256xf32>
    %64 = arith.mulf %62, %63 : vector<2x32x256xf32>
    %65 = arith.addf %58, %64 : vector<2x32x256xf32>
    %66 = vector.extract_strided_slice %11 {offsets = [0, 3], sizes = [32, 1], strides = [1, 1]} : vector<32x16xf32> to vector<32x1xf32>
    %67 = vector.shape_cast %66 : vector<32x1xf32> to vector<1x32x1xf32>
    %68 = vector.extract_strided_slice %45 {offsets = [0, 3, 0], sizes = [2, 1, 256], strides = [1, 1, 1]} : vector<2x16x256xf32> to vector<2x1x256xf32>
    %69 = vector.broadcast %67 : vector<1x32x1xf32> to vector<2x32x256xf32>
    %70 = vector.broadcast %68 : vector<2x1x256xf32> to vector<2x32x256xf32>
    %71 = arith.mulf %69, %70 : vector<2x32x256xf32>
    %72 = arith.addf %65, %71 : vector<2x32x256xf32>
    %73 = vector.extract_strided_slice %11 {offsets = [0, 4], sizes = [32, 1], strides = [1, 1]} : vector<32x16xf32> to vector<32x1xf32>
    %74 = vector.shape_cast %73 : vector<32x1xf32> to vector<1x32x1xf32>
    %75 = vector.extract_strided_slice %45 {offsets = [0, 4, 0], sizes = [2, 1, 256], strides = [1, 1, 1]} : vector<2x16x256xf32> to vector<2x1x256xf32>
    %76 = vector.broadcast %74 : vector<1x32x1xf32> to vector<2x32x256xf32>
    %77 = vector.broadcast %75 : vector<2x1x256xf32> to vector<2x32x256xf32>
    %78 = arith.mulf %76, %77 : vector<2x32x256xf32>
    %79 = arith.addf %72, %78 : vector<2x32x256xf32>
    %80 = vector.extract_strided_slice %11 {offsets = [0, 5], sizes = [32, 1], strides = [1, 1]} : vector<32x16xf32> to vector<32x1xf32>
    %81 = vector.shape_cast %80 : vector<32x1xf32> to vector<1x32x1xf32>
    %82 = vector.extract_strided_slice %45 {offsets = [0, 5, 0], sizes = [2, 1, 256], strides = [1, 1, 1]} : vector<2x16x256xf32> to vector<2x1x256xf32>
    %83 = vector.broadcast %81 : vector<1x32x1xf32> to vector<2x32x256xf32>
    %84 = vector.broadcast %82 : vector<2x1x256xf32> to vector<2x32x256xf32>
    %85 = arith.mulf %83, %84 : vector<2x32x256xf32>
    %86 = arith.addf %79, %85 : vector<2x32x256xf32>
    %87 = vector.extract_strided_slice %11 {offsets = [0, 6], sizes = [32, 1], strides = [1, 1]} : vector<32x16xf32> to vector<32x1xf32>
    %88 = vector.shape_cast %87 : vector<32x1xf32> to vector<1x32x1xf32>
    %89 = vector.extract_strided_slice %45 {offsets = [0, 6, 0], sizes = [2, 1, 256], strides = [1, 1, 1]} : vector<2x16x256xf32> to vector<2x1x256xf32>
    %90 = vector.broadcast %88 : vector<1x32x1xf32> to vector<2x32x256xf32>
    %91 = vector.broadcast %89 : vector<2x1x256xf32> to vector<2x32x256xf32>
    %92 = arith.mulf %90, %91 : vector<2x32x256xf32>
    %93 = arith.addf %86, %92 : vector<2x32x256xf32>
    %94 = vector.extract_strided_slice %11 {offsets = [0, 7], sizes = [32, 1], strides = [1, 1]} : vector<32x16xf32> to vector<32x1xf32>
    %95 = vector.shape_cast %94 : vector<32x1xf32> to vector<1x32x1xf32>
    %96 = vector.extract_strided_slice %45 {offsets = [0, 7, 0], sizes = [2, 1, 256], strides = [1, 1, 1]} : vector<2x16x256xf32> to vector<2x1x256xf32>
    %97 = vector.broadcast %95 : vector<1x32x1xf32> to vector<2x32x256xf32>
    %98 = vector.broadcast %96 : vector<2x1x256xf32> to vector<2x32x256xf32>
    %99 = arith.mulf %97, %98 : vector<2x32x256xf32>
    %100 = arith.addf %93, %99 : vector<2x32x256xf32>
    %101 = vector.extract_strided_slice %11 {offsets = [0, 8], sizes = [32, 1], strides = [1, 1]} : vector<32x16xf32> to vector<32x1xf32>
    %102 = vector.shape_cast %101 : vector<32x1xf32> to vector<1x32x1xf32>
    %103 = vector.extract_strided_slice %45 {offsets = [0, 8, 0], sizes = [2, 1, 256], strides = [1, 1, 1]} : vector<2x16x256xf32> to vector<2x1x256xf32>
    %104 = vector.broadcast %102 : vector<1x32x1xf32> to vector<2x32x256xf32>
    %105 = vector.broadcast %103 : vector<2x1x256xf32> to vector<2x32x256xf32>
    %106 = arith.mulf %104, %105 : vector<2x32x256xf32>
    %107 = arith.addf %100, %106 : vector<2x32x256xf32>
    %108 = vector.extract_strided_slice %11 {offsets = [0, 9], sizes = [32, 1], strides = [1, 1]} : vector<32x16xf32> to vector<32x1xf32>
    %109 = vector.shape_cast %108 : vector<32x1xf32> to vector<1x32x1xf32>
    %110 = vector.extract_strided_slice %45 {offsets = [0, 9, 0], sizes = [2, 1, 256], strides = [1, 1, 1]} : vector<2x16x256xf32> to vector<2x1x256xf32>
    %111 = vector.broadcast %109 : vector<1x32x1xf32> to vector<2x32x256xf32>
    %112 = vector.broadcast %110 : vector<2x1x256xf32> to vector<2x32x256xf32>
    %113 = arith.mulf %111, %112 : vector<2x32x256xf32>
    %114 = arith.addf %107, %113 : vector<2x32x256xf32>
    %115 = vector.extract_strided_slice %11 {offsets = [0, 10], sizes = [32, 1], strides = [1, 1]} : vector<32x16xf32> to vector<32x1xf32>
    %116 = vector.shape_cast %115 : vector<32x1xf32> to vector<1x32x1xf32>
    %117 = vector.extract_strided_slice %45 {offsets = [0, 10, 0], sizes = [2, 1, 256], strides = [1, 1, 1]} : vector<2x16x256xf32> to vector<2x1x256xf32>
    %118 = vector.broadcast %116 : vector<1x32x1xf32> to vector<2x32x256xf32>
    %119 = vector.broadcast %117 : vector<2x1x256xf32> to vector<2x32x256xf32>
    %120 = arith.mulf %118, %119 : vector<2x32x256xf32>
    %121 = arith.addf %114, %120 : vector<2x32x256xf32>
    %122 = vector.extract_strided_slice %11 {offsets = [0, 11], sizes = [32, 1], strides = [1, 1]} : vector<32x16xf32> to vector<32x1xf32>
    %123 = vector.shape_cast %122 : vector<32x1xf32> to vector<1x32x1xf32>
    %124 = vector.extract_strided_slice %45 {offsets = [0, 11, 0], sizes = [2, 1, 256], strides = [1, 1, 1]} : vector<2x16x256xf32> to vector<2x1x256xf32>
    %125 = vector.broadcast %123 : vector<1x32x1xf32> to vector<2x32x256xf32>
    %126 = vector.broadcast %124 : vector<2x1x256xf32> to vector<2x32x256xf32>
    %127 = arith.mulf %125, %126 : vector<2x32x256xf32>
    %128 = arith.addf %121, %127 : vector<2x32x256xf32>
    %129 = vector.extract_strided_slice %11 {offsets = [0, 12], sizes = [32, 1], strides = [1, 1]} : vector<32x16xf32> to vector<32x1xf32>
    %130 = vector.shape_cast %129 : vector<32x1xf32> to vector<1x32x1xf32>
    %131 = vector.extract_strided_slice %45 {offsets = [0, 12, 0], sizes = [2, 1, 256], strides = [1, 1, 1]} : vector<2x16x256xf32> to vector<2x1x256xf32>
    %132 = vector.broadcast %130 : vector<1x32x1xf32> to vector<2x32x256xf32>
    %133 = vector.broadcast %131 : vector<2x1x256xf32> to vector<2x32x256xf32>
    %134 = arith.mulf %132, %133 : vector<2x32x256xf32>
    %135 = arith.addf %128, %134 : vector<2x32x256xf32>
    %136 = vector.extract_strided_slice %11 {offsets = [0, 13], sizes = [32, 1], strides = [1, 1]} : vector<32x16xf32> to vector<32x1xf32>
    %137 = vector.shape_cast %136 : vector<32x1xf32> to vector<1x32x1xf32>
    %138 = vector.extract_strided_slice %45 {offsets = [0, 13, 0], sizes = [2, 1, 256], strides = [1, 1, 1]} : vector<2x16x256xf32> to vector<2x1x256xf32>
    %139 = vector.broadcast %137 : vector<1x32x1xf32> to vector<2x32x256xf32>
    %140 = vector.broadcast %138 : vector<2x1x256xf32> to vector<2x32x256xf32>
    %141 = arith.mulf %139, %140 : vector<2x32x256xf32>
    %142 = arith.addf %135, %141 : vector<2x32x256xf32>
    %143 = vector.extract_strided_slice %11 {offsets = [0, 14], sizes = [32, 1], strides = [1, 1]} : vector<32x16xf32> to vector<32x1xf32>
    %144 = vector.shape_cast %143 : vector<32x1xf32> to vector<1x32x1xf32>
    %145 = vector.extract_strided_slice %45 {offsets = [0, 14, 0], sizes = [2, 1, 256], strides = [1, 1, 1]} : vector<2x16x256xf32> to vector<2x1x256xf32>
    %146 = vector.broadcast %144 : vector<1x32x1xf32> to vector<2x32x256xf32>
    %147 = vector.broadcast %145 : vector<2x1x256xf32> to vector<2x32x256xf32>
    %148 = arith.mulf %146, %147 : vector<2x32x256xf32>
    %149 = arith.addf %142, %148 : vector<2x32x256xf32>
    %150 = vector.extract_strided_slice %11 {offsets = [0, 15], sizes = [32, 1], strides = [1, 1]} : vector<32x16xf32> to vector<32x1xf32>
    %151 = vector.shape_cast %150 : vector<32x1xf32> to vector<1x32x1xf32>
    %152 = vector.extract_strided_slice %45 {offsets = [0, 15, 0], sizes = [2, 1, 256], strides = [1, 1, 1]} : vector<2x16x256xf32> to vector<2x1x256xf32>
    %153 = vector.broadcast %151 : vector<1x32x1xf32> to vector<2x32x256xf32>
    %154 = vector.broadcast %152 : vector<2x1x256xf32> to vector<2x32x256xf32>
    %155 = arith.mulf %153, %154 : vector<2x32x256xf32>
    %156 = arith.addf %149, %155 : vector<2x32x256xf32>
    %157 = vector.shape_cast %13 : vector<32x1xf32> to vector<1x32x1xf32>
    %158 = vector.broadcast %157 : vector<1x32x1xf32> to vector<2x32x256xf32>
    %159 = arith.addf %156, %158 : vector<2x32x256xf32>
    %cst_16 = arith.constant 0.000000e+00 : f32
    %160 = vector.broadcast %cst_16 : f32 to vector<2x32x256xf32>
    %161 = arith.maximumf %159, %160 : vector<2x32x256xf32>
    %c0_17 = arith.constant 0 : index
    %c0_18 = arith.constant 0 : index
    %c0_19 = arith.constant 0 : index
    %162 = vector.load %arg10[%c0_17, %c0_18, %c0_19] : memref<1x4x32xf32, #tpu.memory_space<vmem>>, vector<1x4x32xf32>
    %163 = vector.shape_cast %162 : vector<1x4x32xf32> to vector<4x32xf32>
    %164 = vector.extract_strided_slice %163 {offsets = [0, 0], sizes = [4, 1], strides = [1, 1]} : vector<4x32xf32> to vector<4x1xf32>
    %165 = vector.shape_cast %164 : vector<4x1xf32> to vector<1x4x1xf32>
    %166 = vector.extract_strided_slice %161 {offsets = [0, 0, 0], sizes = [2, 1, 256], strides = [1, 1, 1]} : vector<2x32x256xf32> to vector<2x1x256xf32>
    %167 = vector.broadcast %165 : vector<1x4x1xf32> to vector<2x4x256xf32>
    %168 = vector.broadcast %166 : vector<2x1x256xf32> to vector<2x4x256xf32>
    %169 = arith.mulf %167, %168 : vector<2x4x256xf32>
    %170 = vector.extract_strided_slice %163 {offsets = [0, 1], sizes = [4, 1], strides = [1, 1]} : vector<4x32xf32> to vector<4x1xf32>
    %171 = vector.shape_cast %170 : vector<4x1xf32> to vector<1x4x1xf32>
    %172 = vector.extract_strided_slice %161 {offsets = [0, 1, 0], sizes = [2, 1, 256], strides = [1, 1, 1]} : vector<2x32x256xf32> to vector<2x1x256xf32>
    %173 = vector.broadcast %171 : vector<1x4x1xf32> to vector<2x4x256xf32>
    %174 = vector.broadcast %172 : vector<2x1x256xf32> to vector<2x4x256xf32>
    %175 = arith.mulf %173, %174 : vector<2x4x256xf32>
    %176 = arith.addf %169, %175 : vector<2x4x256xf32>
    %177 = vector.extract_strided_slice %163 {offsets = [0, 2], sizes = [4, 1], strides = [1, 1]} : vector<4x32xf32> to vector<4x1xf32>
    %178 = vector.shape_cast %177 : vector<4x1xf32> to vector<1x4x1xf32>
    %179 = vector.extract_strided_slice %161 {offsets = [0, 2, 0], sizes = [2, 1, 256], strides = [1, 1, 1]} : vector<2x32x256xf32> to vector<2x1x256xf32>
    %180 = vector.broadcast %178 : vector<1x4x1xf32> to vector<2x4x256xf32>
    %181 = vector.broadcast %179 : vector<2x1x256xf32> to vector<2x4x256xf32>
    %182 = arith.mulf %180, %181 : vector<2x4x256xf32>
    %183 = arith.addf %176, %182 : vector<2x4x256xf32>
    %184 = vector.extract_strided_slice %163 {offsets = [0, 3], sizes = [4, 1], strides = [1, 1]} : vector<4x32xf32> to vector<4x1xf32>
    %185 = vector.shape_cast %184 : vector<4x1xf32> to vector<1x4x1xf32>
    %186 = vector.extract_strided_slice %161 {offsets = [0, 3, 0], sizes = [2, 1, 256], strides = [1, 1, 1]} : vector<2x32x256xf32> to vector<2x1x256xf32>
    %187 = vector.broadcast %185 : vector<1x4x1xf32> to vector<2x4x256xf32>
    %188 = vector.broadcast %186 : vector<2x1x256xf32> to vector<2x4x256xf32>
    %189 = arith.mulf %187, %188 : vector<2x4x256xf32>
    %190 = arith.addf %183, %189 : vector<2x4x256xf32>
    %191 = vector.extract_strided_slice %163 {offsets = [0, 4], sizes = [4, 1], strides = [1, 1]} : vector<4x32xf32> to vector<4x1xf32>
    %192 = vector.shape_cast %191 : vector<4x1xf32> to vector<1x4x1xf32>
    %193 = vector.extract_strided_slice %161 {offsets = [0, 4, 0], sizes = [2, 1, 256], strides = [1, 1, 1]} : vector<2x32x256xf32> to vector<2x1x256xf32>
    %194 = vector.broadcast %192 : vector<1x4x1xf32> to vector<2x4x256xf32>
    %195 = vector.broadcast %193 : vector<2x1x256xf32> to vector<2x4x256xf32>
    %196 = arith.mulf %194, %195 : vector<2x4x256xf32>
    %197 = arith.addf %190, %196 : vector<2x4x256xf32>
    %198 = vector.extract_strided_slice %163 {offsets = [0, 5], sizes = [4, 1], strides = [1, 1]} : vector<4x32xf32> to vector<4x1xf32>
    %199 = vector.shape_cast %198 : vector<4x1xf32> to vector<1x4x1xf32>
    %200 = vector.extract_strided_slice %161 {offsets = [0, 5, 0], sizes = [2, 1, 256], strides = [1, 1, 1]} : vector<2x32x256xf32> to vector<2x1x256xf32>
    %201 = vector.broadcast %199 : vector<1x4x1xf32> to vector<2x4x256xf32>
    %202 = vector.broadcast %200 : vector<2x1x256xf32> to vector<2x4x256xf32>
    %203 = arith.mulf %201, %202 : vector<2x4x256xf32>
    %204 = arith.addf %197, %203 : vector<2x4x256xf32>
    %205 = vector.extract_strided_slice %163 {offsets = [0, 6], sizes = [4, 1], strides = [1, 1]} : vector<4x32xf32> to vector<4x1xf32>
    %206 = vector.shape_cast %205 : vector<4x1xf32> to vector<1x4x1xf32>
    %207 = vector.extract_strided_slice %161 {offsets = [0, 6, 0], sizes = [2, 1, 256], strides = [1, 1, 1]} : vector<2x32x256xf32> to vector<2x1x256xf32>
    %208 = vector.broadcast %206 : vector<1x4x1xf32> to vector<2x4x256xf32>
    %209 = vector.broadcast %207 : vector<2x1x256xf32> to vector<2x4x256xf32>
    %210 = arith.mulf %208, %209 : vector<2x4x256xf32>
    %211 = arith.addf %204, %210 : vector<2x4x256xf32>
    %212 = vector.extract_strided_slice %163 {offsets = [0, 7], sizes = [4, 1], strides = [1, 1]} : vector<4x32xf32> to vector<4x1xf32>
    %213 = vector.shape_cast %212 : vector<4x1xf32> to vector<1x4x1xf32>
    %214 = vector.extract_strided_slice %161 {offsets = [0, 7, 0], sizes = [2, 1, 256], strides = [1, 1, 1]} : vector<2x32x256xf32> to vector<2x1x256xf32>
    %215 = vector.broadcast %213 : vector<1x4x1xf32> to vector<2x4x256xf32>
    %216 = vector.broadcast %214 : vector<2x1x256xf32> to vector<2x4x256xf32>
    %217 = arith.mulf %215, %216 : vector<2x4x256xf32>
    %218 = arith.addf %211, %217 : vector<2x4x256xf32>
    %219 = vector.extract_strided_slice %163 {offsets = [0, 8], sizes = [4, 1], strides = [1, 1]} : vector<4x32xf32> to vector<4x1xf32>
    %220 = vector.shape_cast %219 : vector<4x1xf32> to vector<1x4x1xf32>
    %221 = vector.extract_strided_slice %161 {offsets = [0, 8, 0], sizes = [2, 1, 256], strides = [1, 1, 1]} : vector<2x32x256xf32> to vector<2x1x256xf32>
    %222 = vector.broadcast %220 : vector<1x4x1xf32> to vector<2x4x256xf32>
    %223 = vector.broadcast %221 : vector<2x1x256xf32> to vector<2x4x256xf32>
    %224 = arith.mulf %222, %223 : vector<2x4x256xf32>
    %225 = arith.addf %218, %224 : vector<2x4x256xf32>
    %226 = vector.extract_strided_slice %163 {offsets = [0, 9], sizes = [4, 1], strides = [1, 1]} : vector<4x32xf32> to vector<4x1xf32>
    %227 = vector.shape_cast %226 : vector<4x1xf32> to vector<1x4x1xf32>
    %228 = vector.extract_strided_slice %161 {offsets = [0, 9, 0], sizes = [2, 1, 256], strides = [1, 1, 1]} : vector<2x32x256xf32> to vector<2x1x256xf32>
    %229 = vector.broadcast %227 : vector<1x4x1xf32> to vector<2x4x256xf32>
    %230 = vector.broadcast %228 : vector<2x1x256xf32> to vector<2x4x256xf32>
    %231 = arith.mulf %229, %230 : vector<2x4x256xf32>
    %232 = arith.addf %225, %231 : vector<2x4x256xf32>
    %233 = vector.extract_strided_slice %163 {offsets = [0, 10], sizes = [4, 1], strides = [1, 1]} : vector<4x32xf32> to vector<4x1xf32>
    %234 = vector.shape_cast %233 : vector<4x1xf32> to vector<1x4x1xf32>
    %235 = vector.extract_strided_slice %161 {offsets = [0, 10, 0], sizes = [2, 1, 256], strides = [1, 1, 1]} : vector<2x32x256xf32> to vector<2x1x256xf32>
    %236 = vector.broadcast %234 : vector<1x4x1xf32> to vector<2x4x256xf32>
    %237 = vector.broadcast %235 : vector<2x1x256xf32> to vector<2x4x256xf32>
    %238 = arith.mulf %236, %237 : vector<2x4x256xf32>
    %239 = arith.addf %232, %238 : vector<2x4x256xf32>
    %240 = vector.extract_strided_slice %163 {offsets = [0, 11], sizes = [4, 1], strides = [1, 1]} : vector<4x32xf32> to vector<4x1xf32>
    %241 = vector.shape_cast %240 : vector<4x1xf32> to vector<1x4x1xf32>
    %242 = vector.extract_strided_slice %161 {offsets = [0, 11, 0], sizes = [2, 1, 256], strides = [1, 1, 1]} : vector<2x32x256xf32> to vector<2x1x256xf32>
    %243 = vector.broadcast %241 : vector<1x4x1xf32> to vector<2x4x256xf32>
    %244 = vector.broadcast %242 : vector<2x1x256xf32> to vector<2x4x256xf32>
    %245 = arith.mulf %243, %244 : vector<2x4x256xf32>
    %246 = arith.addf %239, %245 : vector<2x4x256xf32>
    %247 = vector.extract_strided_slice %163 {offsets = [0, 12], sizes = [4, 1], strides = [1, 1]} : vector<4x32xf32> to vector<4x1xf32>
    %248 = vector.shape_cast %247 : vector<4x1xf32> to vector<1x4x1xf32>
    %249 = vector.extract_strided_slice %161 {offsets = [0, 12, 0], sizes = [2, 1, 256], strides = [1, 1, 1]} : vector<2x32x256xf32> to vector<2x1x256xf32>
    %250 = vector.broadcast %248 : vector<1x4x1xf32> to vector<2x4x256xf32>
    %251 = vector.broadcast %249 : vector<2x1x256xf32> to vector<2x4x256xf32>
    %252 = arith.mulf %250, %251 : vector<2x4x256xf32>
    %253 = arith.addf %246, %252 : vector<2x4x256xf32>
    %254 = vector.extract_strided_slice %163 {offsets = [0, 13], sizes = [4, 1], strides = [1, 1]} : vector<4x32xf32> to vector<4x1xf32>
    %255 = vector.shape_cast %254 : vector<4x1xf32> to vector<1x4x1xf32>
    %256 = vector.extract_strided_slice %161 {offsets = [0, 13, 0], sizes = [2, 1, 256], strides = [1, 1, 1]} : vector<2x32x256xf32> to vector<2x1x256xf32>
    %257 = vector.broadcast %255 : vector<1x4x1xf32> to vector<2x4x256xf32>
    %258 = vector.broadcast %256 : vector<2x1x256xf32> to vector<2x4x256xf32>
    %259 = arith.mulf %257, %258 : vector<2x4x256xf32>
    %260 = arith.addf %253, %259 : vector<2x4x256xf32>
    %261 = vector.extract_strided_slice %163 {offsets = [0, 14], sizes = [4, 1], strides = [1, 1]} : vector<4x32xf32> to vector<4x1xf32>
    %262 = vector.shape_cast %261 : vector<4x1xf32> to vector<1x4x1xf32>
    %263 = vector.extract_strided_slice %161 {offsets = [0, 14, 0], sizes = [2, 1, 256], strides = [1, 1, 1]} : vector<2x32x256xf32> to vector<2x1x256xf32>
    %264 = vector.broadcast %262 : vector<1x4x1xf32> to vector<2x4x256xf32>
    %265 = vector.broadcast %263 : vector<2x1x256xf32> to vector<2x4x256xf32>
    %266 = arith.mulf %264, %265 : vector<2x4x256xf32>
    %267 = arith.addf %260, %266 : vector<2x4x256xf32>
    %268 = vector.extract_strided_slice %163 {offsets = [0, 15], sizes = [4, 1], strides = [1, 1]} : vector<4x32xf32> to vector<4x1xf32>
    %269 = vector.shape_cast %268 : vector<4x1xf32> to vector<1x4x1xf32>
    %270 = vector.extract_strided_slice %161 {offsets = [0, 15, 0], sizes = [2, 1, 256], strides = [1, 1, 1]} : vector<2x32x256xf32> to vector<2x1x256xf32>
    %271 = vector.broadcast %269 : vector<1x4x1xf32> to vector<2x4x256xf32>
    %272 = vector.broadcast %270 : vector<2x1x256xf32> to vector<2x4x256xf32>
    %273 = arith.mulf %271, %272 : vector<2x4x256xf32>
    %274 = arith.addf %267, %273 : vector<2x4x256xf32>
    %275 = vector.extract_strided_slice %163 {offsets = [0, 16], sizes = [4, 1], strides = [1, 1]} : vector<4x32xf32> to vector<4x1xf32>
    %276 = vector.shape_cast %275 : vector<4x1xf32> to vector<1x4x1xf32>
    %277 = vector.extract_strided_slice %161 {offsets = [0, 16, 0], sizes = [2, 1, 256], strides = [1, 1, 1]} : vector<2x32x256xf32> to vector<2x1x256xf32>
    %278 = vector.broadcast %276 : vector<1x4x1xf32> to vector<2x4x256xf32>
    %279 = vector.broadcast %277 : vector<2x1x256xf32> to vector<2x4x256xf32>
    %280 = arith.mulf %278, %279 : vector<2x4x256xf32>
    %281 = arith.addf %274, %280 : vector<2x4x256xf32>
    %282 = vector.extract_strided_slice %163 {offsets = [0, 17], sizes = [4, 1], strides = [1, 1]} : vector<4x32xf32> to vector<4x1xf32>
    %283 = vector.shape_cast %282 : vector<4x1xf32> to vector<1x4x1xf32>
    %284 = vector.extract_strided_slice %161 {offsets = [0, 17, 0], sizes = [2, 1, 256], strides = [1, 1, 1]} : vector<2x32x256xf32> to vector<2x1x256xf32>
    %285 = vector.broadcast %283 : vector<1x4x1xf32> to vector<2x4x256xf32>
    %286 = vector.broadcast %284 : vector<2x1x256xf32> to vector<2x4x256xf32>
    %287 = arith.mulf %285, %286 : vector<2x4x256xf32>
    %288 = arith.addf %281, %287 : vector<2x4x256xf32>
    %289 = vector.extract_strided_slice %163 {offsets = [0, 18], sizes = [4, 1], strides = [1, 1]} : vector<4x32xf32> to vector<4x1xf32>
    %290 = vector.shape_cast %289 : vector<4x1xf32> to vector<1x4x1xf32>
    %291 = vector.extract_strided_slice %161 {offsets = [0, 18, 0], sizes = [2, 1, 256], strides = [1, 1, 1]} : vector<2x32x256xf32> to vector<2x1x256xf32>
    %292 = vector.broadcast %290 : vector<1x4x1xf32> to vector<2x4x256xf32>
    %293 = vector.broadcast %291 : vector<2x1x256xf32> to vector<2x4x256xf32>
    %294 = arith.mulf %292, %293 : vector<2x4x256xf32>
    %295 = arith.addf %288, %294 : vector<2x4x256xf32>
    %296 = vector.extract_strided_slice %163 {offsets = [0, 19], sizes = [4, 1], strides = [1, 1]} : vector<4x32xf32> to vector<4x1xf32>
    %297 = vector.shape_cast %296 : vector<4x1xf32> to vector<1x4x1xf32>
    %298 = vector.extract_strided_slice %161 {offsets = [0, 19, 0], sizes = [2, 1, 256], strides = [1, 1, 1]} : vector<2x32x256xf32> to vector<2x1x256xf32>
    %299 = vector.broadcast %297 : vector<1x4x1xf32> to vector<2x4x256xf32>
    %300 = vector.broadcast %298 : vector<2x1x256xf32> to vector<2x4x256xf32>
    %301 = arith.mulf %299, %300 : vector<2x4x256xf32>
    %302 = arith.addf %295, %301 : vector<2x4x256xf32>
    %303 = vector.extract_strided_slice %163 {offsets = [0, 20], sizes = [4, 1], strides = [1, 1]} : vector<4x32xf32> to vector<4x1xf32>
    %304 = vector.shape_cast %303 : vector<4x1xf32> to vector<1x4x1xf32>
    %305 = vector.extract_strided_slice %161 {offsets = [0, 20, 0], sizes = [2, 1, 256], strides = [1, 1, 1]} : vector<2x32x256xf32> to vector<2x1x256xf32>
    %306 = vector.broadcast %304 : vector<1x4x1xf32> to vector<2x4x256xf32>
    %307 = vector.broadcast %305 : vector<2x1x256xf32> to vector<2x4x256xf32>
    %308 = arith.mulf %306, %307 : vector<2x4x256xf32>
    %309 = arith.addf %302, %308 : vector<2x4x256xf32>
    %310 = vector.extract_strided_slice %163 {offsets = [0, 21], sizes = [4, 1], strides = [1, 1]} : vector<4x32xf32> to vector<4x1xf32>
    %311 = vector.shape_cast %310 : vector<4x1xf32> to vector<1x4x1xf32>
    %312 = vector.extract_strided_slice %161 {offsets = [0, 21, 0], sizes = [2, 1, 256], strides = [1, 1, 1]} : vector<2x32x256xf32> to vector<2x1x256xf32>
    %313 = vector.broadcast %311 : vector<1x4x1xf32> to vector<2x4x256xf32>
    %314 = vector.broadcast %312 : vector<2x1x256xf32> to vector<2x4x256xf32>
    %315 = arith.mulf %313, %314 : vector<2x4x256xf32>
    %316 = arith.addf %309, %315 : vector<2x4x256xf32>
    %317 = vector.extract_strided_slice %163 {offsets = [0, 22], sizes = [4, 1], strides = [1, 1]} : vector<4x32xf32> to vector<4x1xf32>
    %318 = vector.shape_cast %317 : vector<4x1xf32> to vector<1x4x1xf32>
    %319 = vector.extract_strided_slice %161 {offsets = [0, 22, 0], sizes = [2, 1, 256], strides = [1, 1, 1]} : vector<2x32x256xf32> to vector<2x1x256xf32>
    %320 = vector.broadcast %318 : vector<1x4x1xf32> to vector<2x4x256xf32>
    %321 = vector.broadcast %319 : vector<2x1x256xf32> to vector<2x4x256xf32>
    %322 = arith.mulf %320, %321 : vector<2x4x256xf32>
    %323 = arith.addf %316, %322 : vector<2x4x256xf32>
    %324 = vector.extract_strided_slice %163 {offsets = [0, 23], sizes = [4, 1], strides = [1, 1]} : vector<4x32xf32> to vector<4x1xf32>
    %325 = vector.shape_cast %324 : vector<4x1xf32> to vector<1x4x1xf32>
    %326 = vector.extract_strided_slice %161 {offsets = [0, 23, 0], sizes = [2, 1, 256], strides = [1, 1, 1]} : vector<2x32x256xf32> to vector<2x1x256xf32>
    %327 = vector.broadcast %325 : vector<1x4x1xf32> to vector<2x4x256xf32>
    %328 = vector.broadcast %326 : vector<2x1x256xf32> to vector<2x4x256xf32>
    %329 = arith.mulf %327, %328 : vector<2x4x256xf32>
    %330 = arith.addf %323, %329 : vector<2x4x256xf32>
    %331 = vector.extract_strided_slice %163 {offsets = [0, 24], sizes = [4, 1], strides = [1, 1]} : vector<4x32xf32> to vector<4x1xf32>
    %332 = vector.shape_cast %331 : vector<4x1xf32> to vector<1x4x1xf32>
    %333 = vector.extract_strided_slice %161 {offsets = [0, 24, 0], sizes = [2, 1, 256], strides = [1, 1, 1]} : vector<2x32x256xf32> to vector<2x1x256xf32>
    %334 = vector.broadcast %332 : vector<1x4x1xf32> to vector<2x4x256xf32>
    %335 = vector.broadcast %333 : vector<2x1x256xf32> to vector<2x4x256xf32>
    %336 = arith.mulf %334, %335 : vector<2x4x256xf32>
    %337 = arith.addf %330, %336 : vector<2x4x256xf32>
    %338 = vector.extract_strided_slice %163 {offsets = [0, 25], sizes = [4, 1], strides = [1, 1]} : vector<4x32xf32> to vector<4x1xf32>
    %339 = vector.shape_cast %338 : vector<4x1xf32> to vector<1x4x1xf32>
    %340 = vector.extract_strided_slice %161 {offsets = [0, 25, 0], sizes = [2, 1, 256], strides = [1, 1, 1]} : vector<2x32x256xf32> to vector<2x1x256xf32>
    %341 = vector.broadcast %339 : vector<1x4x1xf32> to vector<2x4x256xf32>
    %342 = vector.broadcast %340 : vector<2x1x256xf32> to vector<2x4x256xf32>
    %343 = arith.mulf %341, %342 : vector<2x4x256xf32>
    %344 = arith.addf %337, %343 : vector<2x4x256xf32>
    %345 = vector.extract_strided_slice %163 {offsets = [0, 26], sizes = [4, 1], strides = [1, 1]} : vector<4x32xf32> to vector<4x1xf32>
    %346 = vector.shape_cast %345 : vector<4x1xf32> to vector<1x4x1xf32>
    %347 = vector.extract_strided_slice %161 {offsets = [0, 26, 0], sizes = [2, 1, 256], strides = [1, 1, 1]} : vector<2x32x256xf32> to vector<2x1x256xf32>
    %348 = vector.broadcast %346 : vector<1x4x1xf32> to vector<2x4x256xf32>
    %349 = vector.broadcast %347 : vector<2x1x256xf32> to vector<2x4x256xf32>
    %350 = arith.mulf %348, %349 : vector<2x4x256xf32>
    %351 = arith.addf %344, %350 : vector<2x4x256xf32>
    %352 = vector.extract_strided_slice %163 {offsets = [0, 27], sizes = [4, 1], strides = [1, 1]} : vector<4x32xf32> to vector<4x1xf32>
    %353 = vector.shape_cast %352 : vector<4x1xf32> to vector<1x4x1xf32>
    %354 = vector.extract_strided_slice %161 {offsets = [0, 27, 0], sizes = [2, 1, 256], strides = [1, 1, 1]} : vector<2x32x256xf32> to vector<2x1x256xf32>
    %355 = vector.broadcast %353 : vector<1x4x1xf32> to vector<2x4x256xf32>
    %356 = vector.broadcast %354 : vector<2x1x256xf32> to vector<2x4x256xf32>
    %357 = arith.mulf %355, %356 : vector<2x4x256xf32>
    %358 = arith.addf %351, %357 : vector<2x4x256xf32>
    %359 = vector.extract_strided_slice %163 {offsets = [0, 28], sizes = [4, 1], strides = [1, 1]} : vector<4x32xf32> to vector<4x1xf32>
    %360 = vector.shape_cast %359 : vector<4x1xf32> to vector<1x4x1xf32>
    %361 = vector.extract_strided_slice %161 {offsets = [0, 28, 0], sizes = [2, 1, 256], strides = [1, 1, 1]} : vector<2x32x256xf32> to vector<2x1x256xf32>
    %362 = vector.broadcast %360 : vector<1x4x1xf32> to vector<2x4x256xf32>
    %363 = vector.broadcast %361 : vector<2x1x256xf32> to vector<2x4x256xf32>
    %364 = arith.mulf %362, %363 : vector<2x4x256xf32>
    %365 = arith.addf %358, %364 : vector<2x4x256xf32>
    %366 = vector.extract_strided_slice %163 {offsets = [0, 29], sizes = [4, 1], strides = [1, 1]} : vector<4x32xf32> to vector<4x1xf32>
    %367 = vector.shape_cast %366 : vector<4x1xf32> to vector<1x4x1xf32>
    %368 = vector.extract_strided_slice %161 {offsets = [0, 29, 0], sizes = [2, 1, 256], strides = [1, 1, 1]} : vector<2x32x256xf32> to vector<2x1x256xf32>
    %369 = vector.broadcast %367 : vector<1x4x1xf32> to vector<2x4x256xf32>
    %370 = vector.broadcast %368 : vector<2x1x256xf32> to vector<2x4x256xf32>
    %371 = arith.mulf %369, %370 : vector<2x4x256xf32>
    %372 = arith.addf %365, %371 : vector<2x4x256xf32>
    %373 = vector.extract_strided_slice %163 {offsets = [0, 30], sizes = [4, 1], strides = [1, 1]} : vector<4x32xf32> to vector<4x1xf32>
    %374 = vector.shape_cast %373 : vector<4x1xf32> to vector<1x4x1xf32>
    %375 = vector.extract_strided_slice %161 {offsets = [0, 30, 0], sizes = [2, 1, 256], strides = [1, 1, 1]} : vector<2x32x256xf32> to vector<2x1x256xf32>
    %376 = vector.broadcast %374 : vector<1x4x1xf32> to vector<2x4x256xf32>
    %377 = vector.broadcast %375 : vector<2x1x256xf32> to vector<2x4x256xf32>
    %378 = arith.mulf %376, %377 : vector<2x4x256xf32>
    %379 = arith.addf %372, %378 : vector<2x4x256xf32>
    %380 = vector.extract_strided_slice %163 {offsets = [0, 31], sizes = [4, 1], strides = [1, 1]} : vector<4x32xf32> to vector<4x1xf32>
    %381 = vector.shape_cast %380 : vector<4x1xf32> to vector<1x4x1xf32>
    %382 = vector.extract_strided_slice %161 {offsets = [0, 31, 0], sizes = [2, 1, 256], strides = [1, 1, 1]} : vector<2x32x256xf32> to vector<2x1x256xf32>
    %383 = vector.broadcast %381 : vector<1x4x1xf32> to vector<2x4x256xf32>
    %384 = vector.broadcast %382 : vector<2x1x256xf32> to vector<2x4x256xf32>
    %385 = arith.mulf %383, %384 : vector<2x4x256xf32>
    %386 = arith.addf %379, %385 : vector<2x4x256xf32>
    %c0_20 = arith.constant 0 : index
    %c0_21 = arith.constant 0 : index
    %c0_22 = arith.constant 0 : index
    %387 = vector.load %arg11[%c0_20, %c0_21, %c0_22] : memref<1x4x1xf32, #tpu.memory_space<vmem>>, vector<1x4x1xf32>
    %388 = vector.shape_cast %387 : vector<1x4x1xf32> to vector<4x1xf32>
    %389 = vector.shape_cast %388 : vector<4x1xf32> to vector<1x4x1xf32>
    %390 = vector.broadcast %389 : vector<1x4x1xf32> to vector<2x4x256xf32>
    %391 = arith.addf %386, %390 : vector<2x4x256xf32>
    %392 = math.tanh %391 : vector<2x4x256xf32>
    %393 = arith.truncf %392 : vector<2x4x256xf32> to vector<2x4x256xbf16>
    %c0_23 = arith.constant 0 : index
    %c0_24 = arith.constant 0 : index
    %c0_25 = arith.constant 0 : index
    %c0_26 = arith.constant 0 : index
    %394 = vector.load %arg16[%c0_23, %c0_24, %c0_25, %c0_26] : memref<1x2x4x256xbf16, #tpu.memory_space<vmem>>, vector<1x2x4x256xbf16>
    %395 = vector.shape_cast %394 : vector<1x2x4x256xbf16> to vector<2x4x256xbf16>
    %396 = vector.shape_cast %393 : vector<2x4x256xbf16> to vector<1x2x4x256xbf16>
    tpu.vector_store %arg16[%c0_23, %c0_24, %c0_25, %c0_26], %396 {strides = array<i32>} : memref<1x2x4x256xbf16, #tpu.memory_space<vmem>>, vector<1x2x4x256xbf16>,
    %397 = vector.extract_strided_slice %7 {offsets = [0, 0], sizes = [16, 1], strides = [1, 1]} : vector<16x4xf32> to vector<16x1xf32>
    %398 = vector.shape_cast %397 : vector<16x1xf32> to vector<1x16x1xf32>
    %399 = vector.extract_strided_slice %392 {offsets = [0, 0, 0], sizes = [2, 1, 256], strides = [1, 1, 1]} : vector<2x4x256xf32> to vector<2x1x256xf32>
    %400 = vector.broadcast %398 : vector<1x16x1xf32> to vector<2x16x256xf32>
    %401 = vector.broadcast %399 : vector<2x1x256xf32> to vector<2x16x256xf32>
    %402 = arith.mulf %400, %401 : vector<2x16x256xf32>
    %403 = vector.extract_strided_slice %7 {offsets = [0, 1], sizes = [16, 1], strides = [1, 1]} : vector<16x4xf32> to vector<16x1xf32>
    %404 = vector.shape_cast %403 : vector<16x1xf32> to vector<1x16x1xf32>
    %405 = vector.extract_strided_slice %392 {offsets = [0, 1, 0], sizes = [2, 1, 256], strides = [1, 1, 1]} : vector<2x4x256xf32> to vector<2x1x256xf32>
    %406 = vector.broadcast %404 : vector<1x16x1xf32> to vector<2x16x256xf32>
    %407 = vector.broadcast %405 : vector<2x1x256xf32> to vector<2x16x256xf32>
    %408 = arith.mulf %406, %407 : vector<2x16x256xf32>
    %409 = arith.addf %402, %408 : vector<2x16x256xf32>
    %410 = vector.extract_strided_slice %7 {offsets = [0, 2], sizes = [16, 1], strides = [1, 1]} : vector<16x4xf32> to vector<16x1xf32>
    %411 = vector.shape_cast %410 : vector<16x1xf32> to vector<1x16x1xf32>
    %412 = vector.extract_strided_slice %392 {offsets = [0, 2, 0], sizes = [2, 1, 256], strides = [1, 1, 1]} : vector<2x4x256xf32> to vector<2x1x256xf32>
    %413 = vector.broadcast %411 : vector<1x16x1xf32> to vector<2x16x256xf32>
    %414 = vector.broadcast %412 : vector<2x1x256xf32> to vector<2x16x256xf32>
    %415 = arith.mulf %413, %414 : vector<2x16x256xf32>
    %416 = arith.addf %409, %415 : vector<2x16x256xf32>
    %417 = vector.extract_strided_slice %7 {offsets = [0, 3], sizes = [16, 1], strides = [1, 1]} : vector<16x4xf32> to vector<16x1xf32>
    %418 = vector.shape_cast %417 : vector<16x1xf32> to vector<1x16x1xf32>
    %419 = vector.extract_strided_slice %392 {offsets = [0, 3, 0], sizes = [2, 1, 256], strides = [1, 1, 1]} : vector<2x4x256xf32> to vector<2x1x256xf32>
    %420 = vector.broadcast %418 : vector<1x16x1xf32> to vector<2x16x256xf32>
    %421 = vector.broadcast %419 : vector<2x1x256xf32> to vector<2x16x256xf32>
    %422 = arith.mulf %420, %421 : vector<2x16x256xf32>
    %423 = arith.addf %416, %422 : vector<2x16x256xf32>
    %424 = vector.shape_cast %9 : vector<16x1xf32> to vector<1x16x1xf32>
    %425 = vector.broadcast %424 : vector<1x16x1xf32> to vector<2x16x256xf32>
    %426 = arith.addf %423, %425 : vector<2x16x256xf32>
    %cst_27 = arith.constant 0.000000e+00 : f32
    %427 = vector.broadcast %cst_27 : f32 to vector<2x16x256xf32>
    %428 = arith.maximumf %426, %427 : vector<2x16x256xf32>
    %429 = vector.extract_strided_slice %11 {offsets = [0, 0], sizes = [32, 1], strides = [1, 1]} : vector<32x16xf32> to vector<32x1xf32>
    %430 = vector.shape_cast %429 : vector<32x1xf32> to vector<1x32x1xf32>
    %431 = vector.extract_strided_slice %428 {offsets = [0, 0, 0], sizes = [2, 1, 256], strides = [1, 1, 1]} : vector<2x16x256xf32> to vector<2x1x256xf32>
    %432 = vector.broadcast %430 : vector<1x32x1xf32> to vector<2x32x256xf32>
    %433 = vector.broadcast %431 : vector<2x1x256xf32> to vector<2x32x256xf32>
    %434 = arith.mulf %432, %433 : vector<2x32x256xf32>
    %435 = vector.extract_strided_slice %11 {offsets = [0, 1], sizes = [32, 1], strides = [1, 1]} : vector<32x16xf32> to vector<32x1xf32>
    %436 = vector.shape_cast %435 : vector<32x1xf32> to vector<1x32x1xf32>
    %437 = vector.extract_strided_slice %428 {offsets = [0, 1, 0], sizes = [2, 1, 256], strides = [1, 1, 1]} : vector<2x16x256xf32> to vector<2x1x256xf32>
    %438 = vector.broadcast %436 : vector<1x32x1xf32> to vector<2x32x256xf32>
    %439 = vector.broadcast %437 : vector<2x1x256xf32> to vector<2x32x256xf32>
    %440 = arith.mulf %438, %439 : vector<2x32x256xf32>
    %441 = arith.addf %434, %440 : vector<2x32x256xf32>
    %442 = vector.extract_strided_slice %11 {offsets = [0, 2], sizes = [32, 1], strides = [1, 1]} : vector<32x16xf32> to vector<32x1xf32>
    %443 = vector.shape_cast %442 : vector<32x1xf32> to vector<1x32x1xf32>
    %444 = vector.extract_strided_slice %428 {offsets = [0, 2, 0], sizes = [2, 1, 256], strides = [1, 1, 1]} : vector<2x16x256xf32> to vector<2x1x256xf32>
    %445 = vector.broadcast %443 : vector<1x32x1xf32> to vector<2x32x256xf32>
    %446 = vector.broadcast %444 : vector<2x1x256xf32> to vector<2x32x256xf32>
    %447 = arith.mulf %445, %446 : vector<2x32x256xf32>
    %448 = arith.addf %441, %447 : vector<2x32x256xf32>
    %449 = vector.extract_strided_slice %11 {offsets = [0, 3], sizes = [32, 1], strides = [1, 1]} : vector<32x16xf32> to vector<32x1xf32>
    %450 = vector.shape_cast %449 : vector<32x1xf32> to vector<1x32x1xf32>
    %451 = vector.extract_strided_slice %428 {offsets = [0, 3, 0], sizes = [2, 1, 256], strides = [1, 1, 1]} : vector<2x16x256xf32> to vector<2x1x256xf32>
    %452 = vector.broadcast %450 : vector<1x32x1xf32> to vector<2x32x256xf32>
    %453 = vector.broadcast %451 : vector<2x1x256xf32> to vector<2x32x256xf32>
    %454 = arith.mulf %452, %453 : vector<2x32x256xf32>
    %455 = arith.addf %448, %454 : vector<2x32x256xf32>
    %456 = vector.extract_strided_slice %11 {offsets = [0, 4], sizes = [32, 1], strides = [1, 1]} : vector<32x16xf32> to vector<32x1xf32>
    %457 = vector.shape_cast %456 : vector<32x1xf32> to vector<1x32x1xf32>
    %458 = vector.extract_strided_slice %428 {offsets = [0, 4, 0], sizes = [2, 1, 256], strides = [1, 1, 1]} : vector<2x16x256xf32> to vector<2x1x256xf32>
    %459 = vector.broadcast %457 : vector<1x32x1xf32> to vector<2x32x256xf32>
    %460 = vector.broadcast %458 : vector<2x1x256xf32> to vector<2x32x256xf32>
    %461 = arith.mulf %459, %460 : vector<2x32x256xf32>
    %462 = arith.addf %455, %461 : vector<2x32x256xf32>
    %463 = vector.extract_strided_slice %11 {offsets = [0, 5], sizes = [32, 1], strides = [1, 1]} : vector<32x16xf32> to vector<32x1xf32>
    %464 = vector.shape_cast %463 : vector<32x1xf32> to vector<1x32x1xf32>
    %465 = vector.extract_strided_slice %428 {offsets = [0, 5, 0], sizes = [2, 1, 256], strides = [1, 1, 1]} : vector<2x16x256xf32> to vector<2x1x256xf32>
    %466 = vector.broadcast %464 : vector<1x32x1xf32> to vector<2x32x256xf32>
    %467 = vector.broadcast %465 : vector<2x1x256xf32> to vector<2x32x256xf32>
    %468 = arith.mulf %466, %467 : vector<2x32x256xf32>
    %469 = arith.addf %462, %468 : vector<2x32x256xf32>
    %470 = vector.extract_strided_slice %11 {offsets = [0, 6], sizes = [32, 1], strides = [1, 1]} : vector<32x16xf32> to vector<32x1xf32>
    %471 = vector.shape_cast %470 : vector<32x1xf32> to vector<1x32x1xf32>
    %472 = vector.extract_strided_slice %428 {offsets = [0, 6, 0], sizes = [2, 1, 256], strides = [1, 1, 1]} : vector<2x16x256xf32> to vector<2x1x256xf32>
    %473 = vector.broadcast %471 : vector<1x32x1xf32> to vector<2x32x256xf32>
    %474 = vector.broadcast %472 : vector<2x1x256xf32> to vector<2x32x256xf32>
    %475 = arith.mulf %473, %474 : vector<2x32x256xf32>
    %476 = arith.addf %469, %475 : vector<2x32x256xf32>
    %477 = vector.extract_strided_slice %11 {offsets = [0, 7], sizes = [32, 1], strides = [1, 1]} : vector<32x16xf32> to vector<32x1xf32>
    %478 = vector.shape_cast %477 : vector<32x1xf32> to vector<1x32x1xf32>
    %479 = vector.extract_strided_slice %428 {offsets = [0, 7, 0], sizes = [2, 1, 256], strides = [1, 1, 1]} : vector<2x16x256xf32> to vector<2x1x256xf32>
    %480 = vector.broadcast %478 : vector<1x32x1xf32> to vector<2x32x256xf32>
    %481 = vector.broadcast %479 : vector<2x1x256xf32> to vector<2x32x256xf32>
    %482 = arith.mulf %480, %481 : vector<2x32x256xf32>
    %483 = arith.addf %476, %482 : vector<2x32x256xf32>
    %484 = vector.extract_strided_slice %11 {offsets = [0, 8], sizes = [32, 1], strides = [1, 1]} : vector<32x16xf32> to vector<32x1xf32>
    %485 = vector.shape_cast %484 : vector<32x1xf32> to vector<1x32x1xf32>
    %486 = vector.extract_strided_slice %428 {offsets = [0, 8, 0], sizes = [2, 1, 256], strides = [1, 1, 1]} : vector<2x16x256xf32> to vector<2x1x256xf32>
    %487 = vector.broadcast %485 : vector<1x32x1xf32> to vector<2x32x256xf32>
    %488 = vector.broadcast %486 : vector<2x1x256xf32> to vector<2x32x256xf32>
    %489 = arith.mulf %487, %488 : vector<2x32x256xf32>
    %490 = arith.addf %483, %489 : vector<2x32x256xf32>
    %491 = vector.extract_strided_slice %11 {offsets = [0, 9], sizes = [32, 1], strides = [1, 1]} : vector<32x16xf32> to vector<32x1xf32>
    %492 = vector.shape_cast %491 : vector<32x1xf32> to vector<1x32x1xf32>
    %493 = vector.extract_strided_slice %428 {offsets = [0, 9, 0], sizes = [2, 1, 256], strides = [1, 1, 1]} : vector<2x16x256xf32> to vector<2x1x256xf32>
    %494 = vector.broadcast %492 : vector<1x32x1xf32> to vector<2x32x256xf32>
    %495 = vector.broadcast %493 : vector<2x1x256xf32> to vector<2x32x256xf32>
    %496 = arith.mulf %494, %495 : vector<2x32x256xf32>
    %497 = arith.addf %490, %496 : vector<2x32x256xf32>
    %498 = vector.extract_strided_slice %11 {offsets = [0, 10], sizes = [32, 1], strides = [1, 1]} : vector<32x16xf32> to vector<32x1xf32>
    %499 = vector.shape_cast %498 : vector<32x1xf32> to vector<1x32x1xf32>
    %500 = vector.extract_strided_slice %428 {offsets = [0, 10, 0], sizes = [2, 1, 256], strides = [1, 1, 1]} : vector<2x16x256xf32> to vector<2x1x256xf32>
    %501 = vector.broadcast %499 : vector<1x32x1xf32> to vector<2x32x256xf32>
    %502 = vector.broadcast %500 : vector<2x1x256xf32> to vector<2x32x256xf32>
    %503 = arith.mulf %501, %502 : vector<2x32x256xf32>
    %504 = arith.addf %497, %503 : vector<2x32x256xf32>
    %505 = vector.extract_strided_slice %11 {offsets = [0, 11], sizes = [32, 1], strides = [1, 1]} : vector<32x16xf32> to vector<32x1xf32>
    %506 = vector.shape_cast %505 : vector<32x1xf32> to vector<1x32x1xf32>
    %507 = vector.extract_strided_slice %428 {offsets = [0, 11, 0], sizes = [2, 1, 256], strides = [1, 1, 1]} : vector<2x16x256xf32> to vector<2x1x256xf32>
    %508 = vector.broadcast %506 : vector<1x32x1xf32> to vector<2x32x256xf32>
    %509 = vector.broadcast %507 : vector<2x1x256xf32> to vector<2x32x256xf32>
    %510 = arith.mulf %508, %509 : vector<2x32x256xf32>
    %511 = arith.addf %504, %510 : vector<2x32x256xf32>
    %512 = vector.extract_strided_slice %11 {offsets = [0, 12], sizes = [32, 1], strides = [1, 1]} : vector<32x16xf32> to vector<32x1xf32>
    %513 = vector.shape_cast %512 : vector<32x1xf32> to vector<1x32x1xf32>
    %514 = vector.extract_strided_slice %428 {offsets = [0, 12, 0], sizes = [2, 1, 256], strides = [1, 1, 1]} : vector<2x16x256xf32> to vector<2x1x256xf32>
    %515 = vector.broadcast %513 : vector<1x32x1xf32> to vector<2x32x256xf32>
    %516 = vector.broadcast %514 : vector<2x1x256xf32> to vector<2x32x256xf32>
    %517 = arith.mulf %515, %516 : vector<2x32x256xf32>
    %518 = arith.addf %511, %517 : vector<2x32x256xf32>
    %519 = vector.extract_strided_slice %11 {offsets = [0, 13], sizes = [32, 1], strides = [1, 1]} : vector<32x16xf32> to vector<32x1xf32>
    %520 = vector.shape_cast %519 : vector<32x1xf32> to vector<1x32x1xf32>
    %521 = vector.extract_strided_slice %428 {offsets = [0, 13, 0], sizes = [2, 1, 256], strides = [1, 1, 1]} : vector<2x16x256xf32> to vector<2x1x256xf32>
    %522 = vector.broadcast %520 : vector<1x32x1xf32> to vector<2x32x256xf32>
    %523 = vector.broadcast %521 : vector<2x1x256xf32> to vector<2x32x256xf32>
    %524 = arith.mulf %522, %523 : vector<2x32x256xf32>
    %525 = arith.addf %518, %524 : vector<2x32x256xf32>
    %526 = vector.extract_strided_slice %11 {offsets = [0, 14], sizes = [32, 1], strides = [1, 1]} : vector<32x16xf32> to vector<32x1xf32>
    %527 = vector.shape_cast %526 : vector<32x1xf32> to vector<1x32x1xf32>
    %528 = vector.extract_strided_slice %428 {offsets = [0, 14, 0], sizes = [2, 1, 256], strides = [1, 1, 1]} : vector<2x16x256xf32> to vector<2x1x256xf32>
    %529 = vector.broadcast %527 : vector<1x32x1xf32> to vector<2x32x256xf32>
    %530 = vector.broadcast %528 : vector<2x1x256xf32> to vector<2x32x256xf32>
    %531 = arith.mulf %529, %530 : vector<2x32x256xf32>
    %532 = arith.addf %525, %531 : vector<2x32x256xf32>
    %533 = vector.extract_strided_slice %11 {offsets = [0, 15], sizes = [32, 1], strides = [1, 1]} : vector<32x16xf32> to vector<32x1xf32>
    %534 = vector.shape_cast %533 : vector<32x1xf32> to vector<1x32x1xf32>
    %535 = vector.extract_strided_slice %428 {offsets = [0, 15, 0], sizes = [2, 1, 256], strides = [1, 1, 1]} : vector<2x16x256xf32> to vector<2x1x256xf32>
    %536 = vector.broadcast %534 : vector<1x32x1xf32> to vector<2x32x256xf32>
    %537 = vector.broadcast %535 : vector<2x1x256xf32> to vector<2x32x256xf32>
    %538 = arith.mulf %536, %537 : vector<2x32x256xf32>
    %539 = arith.addf %532, %538 : vector<2x32x256xf32>
    %540 = vector.shape_cast %13 : vector<32x1xf32> to vector<1x32x1xf32>
    %541 = vector.broadcast %540 : vector<1x32x1xf32> to vector<2x32x256xf32>
    %542 = arith.addf %539, %541 : vector<2x32x256xf32>
    %cst_28 = arith.constant 0.000000e+00 : f32
    %543 = vector.broadcast %cst_28 : f32 to vector<2x32x256xf32>
    %544 = arith.maximumf %542, %543 : vector<2x32x256xf32>
    %c0_29 = arith.constant 0 : index
    %c0_30 = arith.constant 0 : index
    %c0_31 = arith.constant 0 : index
    %c0_32 = arith.constant 0 : index
    %545 = vector.load %arg5[%c0_29, %c0_30, %c0_31, %c0_32] : memref<1x2x4x256xbf16, #tpu.memory_space<vmem>>, vector<1x2x4x256xbf16>
    %546 = vector.shape_cast %545 : vector<1x2x4x256xbf16> to vector<2x4x256xbf16>
    %547 = arith.extf %546 : vector<2x4x256xbf16> to vector<2x4x256xf32>
    %548 = arith.subf %392, %547 : vector<2x4x256xf32>
    %549 = math.absf %548 : vector<2x4x256xf32>
    %c0_33 = arith.constant 0 : index
    %c0_34 = arith.constant 0 : index
    %c0_35 = arith.constant 0 : index
    %550 = vector.load %arg22[%c0_33, %c0_34, %c0_35] : memref<2x32x256xf32, #tpu.memory_space<vmem>>, vector<2x32x256xf32>
    %551 = arith.addf %550, %161 : vector<2x32x256xf32>
    %c0_36 = arith.constant 0 : index
    %c0_37 = arith.constant 0 : index
    %c0_38 = arith.constant 0 : index
    %552 = vector.load %arg22[%c0_36, %c0_37, %c0_38] : memref<2x32x256xf32, #tpu.memory_space<vmem>>, vector<2x32x256xf32>
    tpu.vector_store %arg22[%c0_36, %c0_37, %c0_38], %551 {strides = array<i32>} : memref<2x32x256xf32, #tpu.memory_space<vmem>>, vector<2x32x256xf32>,
    %c0_39 = arith.constant 0 : index
    %c0_40 = arith.constant 0 : index
    %c0_41 = arith.constant 0 : index
    %553 = vector.load %arg23[%c0_39, %c0_40, %c0_41] : memref<2x32x256xf32, #tpu.memory_space<vmem>>, vector<2x32x256xf32>
    %554 = arith.addf %553, %544 : vector<2x32x256xf32>
    %c0_42 = arith.constant 0 : index
    %c0_43 = arith.constant 0 : index
    %c0_44 = arith.constant 0 : index
    %555 = vector.load %arg23[%c0_42, %c0_43, %c0_44] : memref<2x32x256xf32, #tpu.memory_space<vmem>>, vector<2x32x256xf32>
    tpu.vector_store %arg23[%c0_42, %c0_43, %c0_44], %554 {strides = array<i32>} : memref<2x32x256xf32, #tpu.memory_space<vmem>>, vector<2x32x256xf32>,
    %c0_45 = arith.constant 0 : index
    %c0_46 = arith.constant 0 : index
    %c0_47 = arith.constant 0 : index
    %556 = vector.load %arg24[%c0_45, %c0_46, %c0_47] : memref<2x4x256xf32, #tpu.memory_space<vmem>>, vector<2x4x256xf32>
    %557 = arith.addf %556, %549 : vector<2x4x256xf32>
    %c0_48 = arith.constant 0 : index
    %c0_49 = arith.constant 0 : index
    %c0_50 = arith.constant 0 : index
    %558 = vector.load %arg24[%c0_48, %c0_49, %c0_50] : memref<2x4x256xf32, #tpu.memory_space<vmem>>, vector<2x4x256xf32>
    tpu.vector_store %arg24[%c0_48, %c0_49, %c0_50], %557 {strides = array<i32>} : memref<2x4x256xf32, #tpu.memory_space<vmem>>, vector<2x4x256xf32>,
    %c0_i32_51 = arith.constant 0 : i32
    %559 = arith.cmpi eq, %arg2, %c0_i32_51 : i32
    %560 = arith.extui %559 : i1 to i32
    %c0_i32_52 = arith.constant 0 : i32
    %561 = arith.cmpi ne, %560, %c0_i32_52 : i32
    scf.if %561 {
      %c0_53 = arith.constant 0 : index
      %c0_54 = arith.constant 0 : index
      %c0_55 = arith.constant 0 : index
      %562 = vector.load %arg22[%c0_53, %c0_54, %c0_55] : memref<2x32x256xf32, #tpu.memory_space<vmem>>, vector<2x32x256xf32>
      %cst_56 = arith.constant dense<0.000000e+00> : vector<2x32xf32>
      %563 = vector.multi_reduction <add>, %562, %cst_56 [2] : vector<2x32x256xf32> to vector<2x32xf32>
      %564 = vector.shape_cast %563 : vector<2x32xf32> to vector<2x32x1xf32>
      %cst_57 = arith.constant 3.906250e-03 : f32
      %565 = vector.broadcast %cst_57 : f32 to vector<2x32x1xf32>
      %566 = arith.mulf %564, %565 : vector<2x32x1xf32>
      %c0_58 = arith.constant 0 : index
      %c0_59 = arith.constant 0 : index
      %c0_60 = arith.constant 0 : index
      %567 = vector.load %arg23[%c0_58, %c0_59, %c0_60] : memref<2x32x256xf32, #tpu.memory_space<vmem>>, vector<2x32x256xf32>
      %cst_61 = arith.constant dense<0.000000e+00> : vector<2x32xf32>
      %568 = vector.multi_reduction <add>, %567, %cst_61 [2] : vector<2x32x256xf32> to vector<2x32xf32>
      %569 = vector.shape_cast %568 : vector<2x32xf32> to vector<2x32x1xf32>
      %cst_62 = arith.constant 3.906250e-03 : f32
      %570 = vector.broadcast %cst_62 : f32 to vector<2x32x1xf32>
      %571 = arith.mulf %569, %570 : vector<2x32x1xf32>
      %c0_63 = arith.constant 0 : index
      %c0_64 = arith.constant 0 : index
      %c0_65 = arith.constant 0 : index
      %572 = vector.load %arg12[%c0_63, %c0_64, %c0_65] : memref<1x32x8xf32, #tpu.memory_space<vmem>>, vector<1x32x8xf32>
      %573 = vector.shape_cast %572 : vector<1x32x8xf32> to vector<32x8xf32>
      %574 = vector.shape_cast %573 : vector<32x8xf32> to vector<1x32x8xf32>
      %575 = vector.broadcast %566 : vector<2x32x1xf32> to vector<2x32x8xf32>
      %576 = vector.broadcast %574 : vector<1x32x8xf32> to vector<2x32x8xf32>
      %577 = arith.mulf %575, %576 : vector<2x32x8xf32>
      %cst_66 = arith.constant dense<0.000000e+00> : vector<2x8xf32>
      %578 = vector.multi_reduction <add>, %577, %cst_66 [1] : vector<2x32x8xf32> to vector<2x8xf32>
      %c0_67 = arith.constant 0 : index
      %c0_68 = arith.constant 0 : index
      %c0_69 = arith.constant 0 : index
      %579 = vector.load %arg13[%c0_67, %c0_68, %c0_69] : memref<1x1x8xf32, #tpu.memory_space<vmem>>, vector<1x1x8xf32>
      %580 = vector.shape_cast %579 : vector<1x1x8xf32> to vector<1x8xf32>
      %581 = vector.broadcast %580 : vector<1x8xf32> to vector<2x8xf32>
      %582 = arith.addf %578, %581 : vector<2x8xf32>
      %c0_70 = arith.constant 0 : index
      %c0_71 = arith.constant 0 : index
      %c0_72 = arith.constant 0 : index
      %583 = vector.load %arg14[%c0_70, %c0_71, %c0_72] : memref<1x32x8xf32, #tpu.memory_space<vmem>>, vector<1x32x8xf32>
      %584 = vector.shape_cast %583 : vector<1x32x8xf32> to vector<32x8xf32>
      %585 = vector.shape_cast %584 : vector<32x8xf32> to vector<1x32x8xf32>
      %586 = vector.broadcast %571 : vector<2x32x1xf32> to vector<2x32x8xf32>
      %587 = vector.broadcast %585 : vector<1x32x8xf32> to vector<2x32x8xf32>
      %588 = arith.mulf %586, %587 : vector<2x32x8xf32>
      %cst_73 = arith.constant dense<0.000000e+00> : vector<2x8xf32>
      %589 = vector.multi_reduction <add>, %588, %cst_73 [1] : vector<2x32x8xf32> to vector<2x8xf32>
      %c0_74 = arith.constant 0 : index
      %c0_75 = arith.constant 0 : index
      %c0_76 = arith.constant 0 : index
      %590 = vector.load %arg15[%c0_74, %c0_75, %c0_76] : memref<1x1x8xf32, #tpu.memory_space<vmem>>, vector<1x1x8xf32>
      %591 = vector.shape_cast %590 : vector<1x1x8xf32> to vector<1x8xf32>
      %592 = vector.broadcast %591 : vector<1x8xf32> to vector<2x8xf32>
      %593 = arith.addf %589, %592 : vector<2x8xf32>
      %c0_77 = arith.constant 0 : index
      %c0_78 = arith.constant 0 : index
      %c0_79 = arith.constant 0 : index
      %594 = vector.load %arg24[%c0_77, %c0_78, %c0_79] : memref<2x4x256xf32, #tpu.memory_space<vmem>>, vector<2x4x256xf32>
      %cst_80 = arith.constant dense<0.000000e+00> : vector<2x4xf32>
      %595 = vector.multi_reduction <add>, %594, %cst_80 [2] : vector<2x4x256xf32> to vector<2x4xf32>
      %596 = vector.shape_cast %595 : vector<2x4xf32> to vector<2x4x1xf32>
      %cst_81 = arith.constant dense<0.000000e+00> : vector<2x1xf32>
      %597 = vector.multi_reduction <add>, %596, %cst_81 [1] : vector<2x4x1xf32> to vector<2x1xf32>
      %598 = vector.shape_cast %597 : vector<2x1xf32> to vector<2x1x1xf32>
      %c0_82 = arith.constant 0 : index
      %c0_83 = arith.constant 0 : index
      %c0_84 = arith.constant 0 : index
      %c0_85 = arith.constant 0 : index
      %599 = vector.load %arg21[%c0_82, %c0_83, %c0_84, %c0_85] : memref<1x2x1x1xf32, #tpu.memory_space<vmem>>, vector<1x2x1x1xf32>
      %600 = vector.shape_cast %599 : vector<1x2x1x1xf32> to vector<2x1x1xf32>
      %601 = vector.shape_cast %598 : vector<2x1x1xf32> to vector<1x2x1x1xf32>
      tpu.vector_store %arg21[%c0_82, %c0_83, %c0_84, %c0_85], %601 {strides = array<i32>} : memref<1x2x1x1xf32, #tpu.memory_space<vmem>>, vector<1x2x1x1xf32>,
      %c2_i32 = arith.constant 2 : i32
      %602 = arith.muli %arg1, %c2_i32 : i32
      %c0_i32_86 = arith.constant 0 : i32
      %603 = arith.addi %602, %c0_i32_86 : i32
      %604 = arith.index_cast %603 : i32 to index
      %605 = memref.load %arg3[%604] : memref<2xi32, #tpu.memory_space<smem>>
      %606 = vector.extract_strided_slice %582 {offsets = [0, 0], sizes = [1, 8], strides = [1, 1]} : vector<2x8xf32> to vector<1x8xf32>
      %c0_87 = arith.constant 0 : index
      %c0_88 = arith.constant 0 : index
      %c0_89 = arith.constant 0 : index
      %c0_90 = arith.constant 0 : index
      %607 = vector.load %arg17[%c0_87, %c0_88, %c0_89, %c0_90] : memref<1x2x1x8xf32, #tpu.memory_space<vmem>>, vector<1x1x1x8xf32>
      %608 = vector.shape_cast %607 : vector<1x1x1x8xf32> to vector<1x8xf32>
      %609 = vector.shape_cast %606 : vector<1x8xf32> to vector<1x1x1x8xf32>
      tpu.vector_store %arg17[%c0_87, %c0_88, %c0_89, %c0_90], %609 {strides = array<i32>} : memref<1x2x1x8xf32, #tpu.memory_space<vmem>>, vector<1x1x1x8xf32>,
      %cst_91 = arith.constant dense<0xFF800000> : vector<1xf32>
      %610 = vector.multi_reduction <maximumf>, %606, %cst_91 [1] : vector<1x8xf32> to vector<1xf32>
      %611 = vector.shape_cast %610 : vector<1xf32> to vector<1x1xf32>
      %612 = vector.broadcast %611 : vector<1x1xf32> to vector<1x8xf32>
      %613 = arith.subf %606, %612 : vector<1x8xf32>
      %614 = math.exp %613 : vector<1x8xf32>
      %cst_92 = arith.constant dense<0.000000e+00> : vector<1xf32>
      %615 = vector.multi_reduction <add>, %614, %cst_92 [1] : vector<1x8xf32> to vector<1xf32>
      %616 = vector.shape_cast %615 : vector<1xf32> to vector<1x1xf32>
      %617 = math.log %616 : vector<1x1xf32>
      %618 = arith.addf %611, %617 : vector<1x1xf32>
      %619 = tpu.iota {dimensions = array<i32: 1>} : vector<1x8xi32>
      %620 = vector.broadcast %605 : i32 to vector<1x8xi32>
      %621 = arith.cmpi eq, %619, %620 : vector<1x8xi32>
      %cst_93 = arith.constant 0.000000e+00 : f32
      %622 = vector.broadcast %cst_93 : f32 to vector<1x8xf32>
      %623 = arith.select %621, %606, %622 : vector<1x8xi1>, vector<1x8xf32>
      %cst_94 = arith.constant dense<0.000000e+00> : vector<1xf32>
      %624 = vector.multi_reduction <add>, %623, %cst_94 [1] : vector<1x8xf32> to vector<1xf32>
      %625 = vector.shape_cast %624 : vector<1xf32> to vector<1x1xf32>
      %626 = arith.subf %618, %625 : vector<1x1xf32>
      %c0_95 = arith.constant 0 : index
      %c0_96 = arith.constant 0 : index
      %c0_97 = arith.constant 0 : index
      %c0_98 = arith.constant 0 : index
      %627 = vector.load %arg19[%c0_95, %c0_96, %c0_97, %c0_98] : memref<1x2x1x1xf32, #tpu.memory_space<vmem>>, vector<1x1x1x1xf32>
      %628 = vector.shape_cast %627 : vector<1x1x1x1xf32> to vector<1x1xf32>
      %629 = vector.shape_cast %626 : vector<1x1xf32> to vector<1x1x1x1xf32>
      tpu.vector_store %arg19[%c0_95, %c0_96, %c0_97, %c0_98], %629 {strides = array<i32>} : memref<1x2x1x1xf32, #tpu.memory_space<vmem>>, vector<1x1x1x1xf32>,
      %630 = vector.extract_strided_slice %593 {offsets = [0, 0], sizes = [1, 8], strides = [1, 1]} : vector<2x8xf32> to vector<1x8xf32>
      %c0_99 = arith.constant 0 : index
      %c0_100 = arith.constant 0 : index
      %c0_101 = arith.constant 0 : index
      %c0_102 = arith.constant 0 : index
      %631 = vector.load %arg18[%c0_99, %c0_100, %c0_101, %c0_102] : memref<1x2x1x8xf32, #tpu.memory_space<vmem>>, vector<1x1x1x8xf32>
      %632 = vector.shape_cast %631 : vector<1x1x1x8xf32> to vector<1x8xf32>
      %633 = vector.shape_cast %630 : vector<1x8xf32> to vector<1x1x1x8xf32>
      tpu.vector_store %arg18[%c0_99, %c0_100, %c0_101, %c0_102], %633 {strides = array<i32>} : memref<1x2x1x8xf32, #tpu.memory_space<vmem>>, vector<1x1x1x8xf32>,
      %cst_103 = arith.constant dense<0xFF800000> : vector<1xf32>
      %634 = vector.multi_reduction <maximumf>, %630, %cst_103 [1] : vector<1x8xf32> to vector<1xf32>
      %635 = vector.shape_cast %634 : vector<1xf32> to vector<1x1xf32>
      %636 = vector.broadcast %635 : vector<1x1xf32> to vector<1x8xf32>
      %637 = arith.subf %630, %636 : vector<1x8xf32>
      %638 = math.exp %637 : vector<1x8xf32>
      %cst_104 = arith.constant dense<0.000000e+00> : vector<1xf32>
      %639 = vector.multi_reduction <add>, %638, %cst_104 [1] : vector<1x8xf32> to vector<1xf32>
      %640 = vector.shape_cast %639 : vector<1xf32> to vector<1x1xf32>
      %641 = math.log %640 : vector<1x1xf32>
      %642 = arith.addf %635, %641 : vector<1x1xf32>
      %643 = tpu.iota {dimensions = array<i32: 1>} : vector<1x8xi32>
      %644 = vector.broadcast %605 : i32 to vector<1x8xi32>
      %645 = arith.cmpi eq, %643, %644 : vector<1x8xi32>
      %cst_105 = arith.constant 0.000000e+00 : f32
      %646 = vector.broadcast %cst_105 : f32 to vector<1x8xf32>
      %647 = arith.select %645, %630, %646 : vector<1x8xi1>, vector<1x8xf32>
      %cst_106 = arith.constant dense<0.000000e+00> : vector<1xf32>
      %648 = vector.multi_reduction <add>, %647, %cst_106 [1] : vector<1x8xf32> to vector<1xf32>
      %649 = vector.shape_cast %648 : vector<1xf32> to vector<1x1xf32>
      %650 = arith.subf %642, %649 : vector<1x1xf32>
      %c0_107 = arith.constant 0 : index
      %c0_108 = arith.constant 0 : index
      %c0_109 = arith.constant 0 : index
      %c0_110 = arith.constant 0 : index
      %651 = vector.load %arg20[%c0_107, %c0_108, %c0_109, %c0_110] : memref<1x2x1x1xf32, #tpu.memory_space<vmem>>, vector<1x1x1x1xf32>
      %652 = vector.shape_cast %651 : vector<1x1x1x1xf32> to vector<1x1xf32>
      %653 = vector.shape_cast %650 : vector<1x1xf32> to vector<1x1x1x1xf32>
      tpu.vector_store %arg20[%c0_107, %c0_108, %c0_109, %c0_110], %653 {strides = array<i32>} : memref<1x2x1x1xf32, #tpu.memory_space<vmem>>, vector<1x1x1x1xf32>,
      %c2_i32_111 = arith.constant 2 : i32
      %654 = arith.muli %arg1, %c2_i32_111 : i32
      %c1_i32 = arith.constant 1 : i32
      %655 = arith.addi %654, %c1_i32 : i32
      %656 = arith.index_cast %655 : i32 to index
      %657 = memref.load %arg3[%656] : memref<2xi32, #tpu.memory_space<smem>>
      %658 = vector.extract_strided_slice %582 {offsets = [1, 0], sizes = [1, 8], strides = [1, 1]} : vector<2x8xf32> to vector<1x8xf32>
      %c0_112 = arith.constant 0 : index
      %c1 = arith.constant 1 : index
      %c0_113 = arith.constant 0 : index
      %c0_114 = arith.constant 0 : index
      %659 = vector.load %arg17[%c0_112, %c1, %c0_113, %c0_114] : memref<1x2x1x8xf32, #tpu.memory_space<vmem>>, vector<1x1x1x8xf32>
      %660 = vector.shape_cast %659 : vector<1x1x1x8xf32> to vector<1x8xf32>
      %661 = vector.shape_cast %658 : vector<1x8xf32> to vector<1x1x1x8xf32>
      tpu.vector_store %arg17[%c0_112, %c1, %c0_113, %c0_114], %661 {strides = array<i32>} : memref<1x2x1x8xf32, #tpu.memory_space<vmem>>, vector<1x1x1x8xf32>,
      %cst_115 = arith.constant dense<0xFF800000> : vector<1xf32>
      %662 = vector.multi_reduction <maximumf>, %658, %cst_115 [1] : vector<1x8xf32> to vector<1xf32>
      %663 = vector.shape_cast %662 : vector<1xf32> to vector<1x1xf32>
      %664 = vector.broadcast %663 : vector<1x1xf32> to vector<1x8xf32>
      %665 = arith.subf %658, %664 : vector<1x8xf32>
      %666 = math.exp %665 : vector<1x8xf32>
      %cst_116 = arith.constant dense<0.000000e+00> : vector<1xf32>
      %667 = vector.multi_reduction <add>, %666, %cst_116 [1] : vector<1x8xf32> to vector<1xf32>
      %668 = vector.shape_cast %667 : vector<1xf32> to vector<1x1xf32>
      %669 = math.log %668 : vector<1x1xf32>
      %670 = arith.addf %663, %669 : vector<1x1xf32>
      %671 = tpu.iota {dimensions = array<i32: 1>} : vector<1x8xi32>
      %672 = vector.broadcast %657 : i32 to vector<1x8xi32>
      %673 = arith.cmpi eq, %671, %672 : vector<1x8xi32>
      %cst_117 = arith.constant 0.000000e+00 : f32
      %674 = vector.broadcast %cst_117 : f32 to vector<1x8xf32>
      %675 = arith.select %673, %658, %674 : vector<1x8xi1>, vector<1x8xf32>
      %cst_118 = arith.constant dense<0.000000e+00> : vector<1xf32>
      %676 = vector.multi_reduction <add>, %675, %cst_118 [1] : vector<1x8xf32> to vector<1xf32>
      %677 = vector.shape_cast %676 : vector<1xf32> to vector<1x1xf32>
      %678 = arith.subf %670, %677 : vector<1x1xf32>
      %c0_119 = arith.constant 0 : index
      %c1_120 = arith.constant 1 : index
      %c0_121 = arith.constant 0 : index
      %c0_122 = arith.constant 0 : index
      %679 = vector.load %arg19[%c0_119, %c1_120, %c0_121, %c0_122] : memref<1x2x1x1xf32, #tpu.memory_space<vmem>>, vector<1x1x1x1xf32>
      %680 = vector.shape_cast %679 : vector<1x1x1x1xf32> to vector<1x1xf32>
      %681 = vector.shape_cast %678 : vector<1x1xf32> to vector<1x1x1x1xf32>
      tpu.vector_store %arg19[%c0_119, %c1_120, %c0_121, %c0_122], %681 {strides = array<i32>} : memref<1x2x1x1xf32, #tpu.memory_space<vmem>>, vector<1x1x1x1xf32>,
      %682 = vector.extract_strided_slice %593 {offsets = [1, 0], sizes = [1, 8], strides = [1, 1]} : vector<2x8xf32> to vector<1x8xf32>
      %c0_123 = arith.constant 0 : index
      %c1_124 = arith.constant 1 : index
      %c0_125 = arith.constant 0 : index
      %c0_126 = arith.constant 0 : index
      %683 = vector.load %arg18[%c0_123, %c1_124, %c0_125, %c0_126] : memref<1x2x1x8xf32, #tpu.memory_space<vmem>>, vector<1x1x1x8xf32>
      %684 = vector.shape_cast %683 : vector<1x1x1x8xf32> to vector<1x8xf32>
      %685 = vector.shape_cast %682 : vector<1x8xf32> to vector<1x1x1x8xf32>
      tpu.vector_store %arg18[%c0_123, %c1_124, %c0_125, %c0_126], %685 {strides = array<i32>} : memref<1x2x1x8xf32, #tpu.memory_space<vmem>>, vector<1x1x1x8xf32>,
      %cst_127 = arith.constant dense<0xFF800000> : vector<1xf32>
      %686 = vector.multi_reduction <maximumf>, %682, %cst_127 [1] : vector<1x8xf32> to vector<1xf32>
      %687 = vector.shape_cast %686 : vector<1xf32> to vector<1x1xf32>
      %688 = vector.broadcast %687 : vector<1x1xf32> to vector<1x8xf32>
      %689 = arith.subf %682, %688 : vector<1x8xf32>
      %690 = math.exp %689 : vector<1x8xf32>
      %cst_128 = arith.constant dense<0.000000e+00> : vector<1xf32>
      %691 = vector.multi_reduction <add>, %690, %cst_128 [1] : vector<1x8xf32> to vector<1xf32>
      %692 = vector.shape_cast %691 : vector<1xf32> to vector<1x1xf32>
      %693 = math.log %692 : vector<1x1xf32>
      %694 = arith.addf %687, %693 : vector<1x1xf32>
      %695 = tpu.iota {dimensions = array<i32: 1>} : vector<1x8xi32>
      %696 = vector.broadcast %657 : i32 to vector<1x8xi32>
      %697 = arith.cmpi eq, %695, %696 : vector<1x8xi32>
      %cst_129 = arith.constant 0.000000e+00 : f32
      %698 = vector.broadcast %cst_129 : f32 to vector<1x8xf32>
      %699 = arith.select %697, %682, %698 : vector<1x8xi1>, vector<1x8xf32>
      %cst_130 = arith.constant dense<0.000000e+00> : vector<1xf32>
      %700 = vector.multi_reduction <add>, %699, %cst_130 [1] : vector<1x8xf32> to vector<1xf32>
      %701 = vector.shape_cast %700 : vector<1xf32> to vector<1x1xf32>
      %702 = arith.subf %694, %701 : vector<1x1xf32>
      %c0_131 = arith.constant 0 : index
      %c1_132 = arith.constant 1 : index
      %c0_133 = arith.constant 0 : index
      %c0_134 = arith.constant 0 : index
      %703 = vector.load %arg20[%c0_131, %c1_132, %c0_133, %c0_134] : memref<1x2x1x1xf32, #tpu.memory_space<vmem>>, vector<1x1x1x1xf32>
      %704 = vector.shape_cast %703 : vector<1x1x1x1xf32> to vector<1x1xf32>
      %705 = vector.shape_cast %702 : vector<1x1xf32> to vector<1x1x1x1xf32>
      tpu.vector_store %arg20[%c0_131, %c1_132, %c0_133, %c0_134], %705 {strides = array<i32>} : memref<1x2x1x1xf32, #tpu.memory_space<vmem>>, vector<1x1x1x1xf32>,
    } else {
    }
    return
  }
  func.func @transform_0(%arg0: i32, %arg1: i32, %arg2: i32, %arg3: memref<2xi32, #tpu.memory_space<smem>>) -> (i32, i32, i32, i32) {
    %c0_i32 = arith.constant 0 : i32
    %c0_i32_0 = arith.constant 0 : i32
    return %arg0, %arg1, %c0_i32, %arg2 : i32, i32, i32, i32
  }
  func.func @transform_1(%arg0: i32, %arg1: i32, %arg2: i32, %arg3: memref<2xi32, #tpu.memory_space<smem>>) -> (i32, i32, i32, i32) {
    %c1_i32 = arith.constant 1 : i32
    %0 = arith.subi %c1_i32, %arg0 : i32
    %c0_i32 = arith.constant 0 : i32
    %c0_i32_0 = arith.constant 0 : i32
    return %0, %arg1, %c0_i32, %arg2 : i32, i32, i32, i32
  }
  func.func @transform_2(%arg0: i32, %arg1: i32, %arg2: i32, %arg3: memref<2xi32, #tpu.memory_space<smem>>) -> (i32, i32, i32) {
    %c0_i32 = arith.constant 0 : i32
    %c0_i32_0 = arith.constant 0 : i32
    %c0_i32_1 = arith.constant 0 : i32
    return %arg0, %c0_i32, %c0_i32_0 : i32, i32, i32
  }
  func.func @transform_3(%arg0: i32, %arg1: i32, %arg2: i32, %arg3: memref<2xi32, #tpu.memory_space<smem>>) -> (i32, i32, i32) {
    %c0_i32 = arith.constant 0 : i32
    %c0_i32_0 = arith.constant 0 : i32
    %c0_i32_1 = arith.constant 0 : i32
    return %arg0, %c0_i32, %c0_i32_0 : i32, i32, i32
  }
  func.func @transform_4(%arg0: i32, %arg1: i32, %arg2: i32, %arg3: memref<2xi32, #tpu.memory_space<smem>>) -> (i32, i32, i32) {
    %c0_i32 = arith.constant 0 : i32
    %c0_i32_0 = arith.constant 0 : i32
    %c0_i32_1 = arith.constant 0 : i32
    return %arg0, %c0_i32, %c0_i32_0 : i32, i32, i32
  }
  func.func @transform_5(%arg0: i32, %arg1: i32, %arg2: i32, %arg3: memref<2xi32, #tpu.memory_space<smem>>) -> (i32, i32, i32) {
    %c0_i32 = arith.constant 0 : i32
    %c0_i32_0 = arith.constant 0 : i32
    %c0_i32_1 = arith.constant 0 : i32
    return %arg0, %c0_i32, %c0_i32_0 : i32, i32, i32
  }
  func.func @transform_6(%arg0: i32, %arg1: i32, %arg2: i32, %arg3: memref<2xi32, #tpu.memory_space<smem>>) -> (i32, i32, i32) {
    %c0_i32 = arith.constant 0 : i32
    %c0_i32_0 = arith.constant 0 : i32
    %c0_i32_1 = arith.constant 0 : i32
    return %arg0, %c0_i32, %c0_i32_0 : i32, i32, i32
  }
  func.func @transform_7(%arg0: i32, %arg1: i32, %arg2: i32, %arg3: memref<2xi32, #tpu.memory_space<smem>>) -> (i32, i32, i32) {
    %c0_i32 = arith.constant 0 : i32
    %c0_i32_0 = arith.constant 0 : i32
    %c0_i32_1 = arith.constant 0 : i32
    return %arg0, %c0_i32, %c0_i32_0 : i32, i32, i32
  }
  func.func @transform_8(%arg0: i32, %arg1: i32, %arg2: i32, %arg3: memref<2xi32, #tpu.memory_space<smem>>) -> (i32, i32, i32) {
    %c0_i32 = arith.constant 0 : i32
    %c0_i32_0 = arith.constant 0 : i32
    %c0_i32_1 = arith.constant 0 : i32
    return %arg0, %c0_i32, %c0_i32_0 : i32, i32, i32
  }
  func.func @transform_9(%arg0: i32, %arg1: i32, %arg2: i32, %arg3: memref<2xi32, #tpu.memory_space<smem>>) -> (i32, i32, i32) {
    %c0_i32 = arith.constant 0 : i32
    %c0_i32_0 = arith.constant 0 : i32
    %c0_i32_1 = arith.constant 0 : i32
    return %arg0, %c0_i32, %c0_i32_0 : i32, i32, i32
  }
  func.func @transform_10(%arg0: i32, %arg1: i32, %arg2: i32, %arg3: memref<2xi32, #tpu.memory_space<smem>>) -> (i32, i32, i32) {
    %c0_i32 = arith.constant 0 : i32
    %c0_i32_0 = arith.constant 0 : i32
    %c0_i32_1 = arith.constant 0 : i32
    return %arg0, %c0_i32, %c0_i32_0 : i32, i32, i32
  }
  func.func @transform_11(%arg0: i32, %arg1: i32, %arg2: i32, %arg3: memref<2xi32, #tpu.memory_space<smem>>) -> (i32, i32, i32) {
    %c0_i32 = arith.constant 0 : i32
    %c0_i32_0 = arith.constant 0 : i32
    %c0_i32_1 = arith.constant 0 : i32
    return %arg0, %c0_i32, %c0_i32_0 : i32, i32, i32
  }
  func.func @transform_12(%arg0: i32, %arg1: i32, %arg2: i32, %arg3: memref<2xi32, #tpu.memory_space<smem>>) -> (i32, i32, i32, i32) {
    %c0_i32 = arith.constant 0 : i32
    %c0_i32_0 = arith.constant 0 : i32
    return %arg0, %arg1, %c0_i32, %arg2 : i32, i32, i32, i32
  }
  func.func @transform_13(%arg0: i32, %arg1: i32, %arg2: i32, %arg3: memref<2xi32, #tpu.memory_space<smem>>) -> (i32, i32, i32, i32) {
    %c0_i32 = arith.constant 0 : i32
    %c0_i32_0 = arith.constant 0 : i32
    %c0_i32_1 = arith.constant 0 : i32
    return %arg0, %arg1, %c0_i32, %c0_i32_0 : i32, i32, i32, i32
  }
  func.func @transform_14(%arg0: i32, %arg1: i32, %arg2: i32, %arg3: memref<2xi32, #tpu.memory_space<smem>>) -> (i32, i32, i32, i32) {
    %c0_i32 = arith.constant 0 : i32
    %c0_i32_0 = arith.constant 0 : i32
    %c0_i32_1 = arith.constant 0 : i32
    return %arg0, %arg1, %c0_i32, %c0_i32_0 : i32, i32, i32, i32
  }
  func.func @transform_15(%arg0: i32, %arg1: i32, %arg2: i32, %arg3: memref<2xi32, #tpu.memory_space<smem>>) -> (i32, i32, i32, i32) {
    %c0_i32 = arith.constant 0 : i32
    %c0_i32_0 = arith.constant 0 : i32
    %c0_i32_1 = arith.constant 0 : i32
    return %arg0, %arg1, %c0_i32, %c0_i32_0 : i32, i32, i32, i32
  }
  func.func @transform_16(%arg0: i32, %arg1: i32, %arg2: i32, %arg3: memref<2xi32, #tpu.memory_space<smem>>) -> (i32, i32, i32, i32) {
    %c0_i32 = arith.constant 0 : i32
    %c0_i32_0 = arith.constant 0 : i32
    %c0_i32_1 = arith.constant 0 : i32
    return %arg0, %arg1, %c0_i32, %c0_i32_0 : i32, i32, i32, i32
  }
  func.func @transform_17(%arg0: i32, %arg1: i32, %arg2: i32, %arg3: memref<2xi32, #tpu.memory_space<smem>>) -> (i32, i32, i32, i32) {
    %c0_i32 = arith.constant 0 : i32
    %c0_i32_0 = arith.constant 0 : i32
    %c0_i32_1 = arith.constant 0 : i32
    return %arg0, %arg1, %c0_i32, %c0_i32_0 : i32, i32, i32, i32
  }
}

</mosaic_0001>

<llo_original>
// kernel: _fused_forward.1
$region0: #{_fused_forward.1}
  #allocation0 [shape = 'u32[]', space=smem, size = 0x4, offset = 0x4, fixed_abs, tag = 'smem constant byte address 0x4 - core index']
  #allocation1 [shape = 'u32[144,128]{1,0:T(1,128)}', space=vmem, size = 0x12000, scoped, tag = 'internal scratch']
  #allocation2 [shape = 'f32[2,32,256]{2,1,0:T(8,128)}', space=vmem, size = 0x10000, scoped, tag = 'scratch operand']
  #allocation3 [shape = 'f32[2,32,256]{2,1,0:T(8,128)}', space=vmem, size = 0x10000, scoped, tag = 'scratch operand']
  #allocation4 [shape = 'f32[2,4,256]{2,1,0:T(4,128)}', space=vmem, size = 0x2000, scoped, tag = 'scratch operand']
  #allocation5 [shape = 's32[1]{0}', space=sflag, size = 0x4, scoped, tag = 'scoped memory for _fused_forward.1']
  #allocation6 [shape = 'u8[512]{0}', space=smem, size = 0x200, scoped, tag = 'prefetched SMEM operand 0']
  %s0 = inlined_call_operand.vmem [shape: s32[2], index: 0, kind: input, shape index: {}]
  %s1 = inlined_call_operand.vmem [shape: bf16[2,2,4,256], index: 1, kind: input, shape index: {}, may-alias: {1,2}]
  %s2 = inlined_call_operand.vmem [shape: bf16[2,2,4,256], index: 2, kind: input, shape index: {}, may-alias: {1,2}]
  %s3 = inlined_call_operand.vmem [shape: f32[2,16,4], index: 3, kind: input, shape index: {}]
  %s4 = inlined_call_operand.vmem [shape: f32[2,16,1], index: 4, kind: input, shape index: {}]
  %s5 = inlined_call_operand.vmem [shape: f32[2,32,16], index: 5, kind: input, shape index: {}]
  %s6 = inlined_call_operand.vmem [shape: f32[2,32,1], index: 6, kind: input, shape index: {}]
  %s7 = inlined_call_operand.vmem [shape: f32[2,4,32], index: 7, kind: input, shape index: {}]
  %s8 = inlined_call_operand.vmem [shape: f32[2,4,1], index: 8, kind: input, shape index: {}]
  %s9 = inlined_call_operand.vmem [shape: f32[2,32,8], index: 9, kind: input, shape index: {}]
  %s10 = inlined_call_operand.vmem [shape: f32[2,1,8], index: 10, kind: input, shape index: {}]
  %s11 = inlined_call_operand.vmem [shape: f32[2,32,8], index: 11, kind: input, shape index: {}]
  %s12 = inlined_call_operand.vmem [shape: f32[2,1,8], index: 12, kind: input, shape index: {}]
  %s13 = inlined_call_operand.hbm [shape: bf16[2,2,4,256], index: 13, kind: output, shape index: {0}]
  %s14 = inlined_call_operand.hbm [shape: f32[2,2,1,8], index: 14, kind: output, shape index: {1}]
  %s15 = inlined_call_operand.hbm [shape: f32[2,2,1,8], index: 15, kind: output, shape index: {2}]
  %s16 = inlined_call_operand.vmem [shape: f32[2,2,1,1], index: 16, kind: output, shape index: {3}]
  %s17 = inlined_call_operand.vmem [shape: f32[2,2,1,1], index: 17, kind: output, shape index: {4}]
  %s18 = inlined_call_operand.vmem [shape: f32[2,2,1,1], index: 18, kind: output, shape index: {5}]
  %19 = xla_tuple %s13, %s14, %s15, %s16, %s17, %s18
  %s20 = sld [smem:[#allocation0]]
  $region129: #{_fused_forward.1} parent=0
    _
  %s22 = ssub.s32 1, %s20
  %s23 = scalar_select 0, %s22, %s20
  %s24 = sshll.u32 %s0, 4
  %s25 = int_to_ptr.vmem [resolvable:$true] %s24
  %27 = dma.vmem_to_smem %s25, 16, [#allocation6], [#allocation5]
  %28 = dma.done [#allocation5], 16
  %29 = sfence
  $region1: #{_fused_forward.1} parent=0
    #allocation7 [shape = 'u8[8192]{0}', space=vmem, size = 0x2000, scoped, tag = 'output window, operand 0']
    #allocation8 [shape = 's32[2]{0}', space=sflag, size = 0x8, scoped, tag = 'scoped memory for _fused_forward.1']
    #allocation9 [shape = 'u8[2048]{0}', space=vmem, size = 0x800, scoped, tag = 'output window, operand 1']
    #allocation10 [shape = 's32[2]{0}', space=sflag, size = 0x8, scoped, tag = 'scoped memory for _fused_forward.1']
    #allocation11 [shape = 'u8[2048]{0}', space=vmem, size = 0x800, scoped, tag = 'output window, operand 2']
    %30 = vsyncpa [#allocation8], 0
    %s31 = scalar_lea.sflag [#allocation8], 1
    %32 = vsyncpa %s31, 0
    %33 = vsyncpa [#allocation10], 0
    %s34 = scalar_lea.sflag [#allocation10], 1
    %35 = vsyncpa %s34, 0
    loop: start=0, step=1, limit=4
    $region2: #{_fused_forward.1} parent=1 // loop_pre_header
      _
    $region3: #{_fused_forward.1} parent=1 // loop_header
      %s37 = sphi 0, %s41
      %p38 = scmp.ge.s32.totalorder %s37, 4
      %s44 = sphi 0, %s63
      %s45 = sphi 0, %s59
      %s46 = sphi 0, %s55
      %s47 = sphi 0, %s44
      %s48 = sphi 0, %s45
      %s49 = sphi 0, %s46
      %s50 = sphi 0, %s47
      %s51 = sphi 0, %s48
      %s52 = sphi 0, %s49
      %s70 = sphi 0, %s72
      %s73 = sphi 0, %s70
      %s74 = sphi 0, %s73
      %s90 = sphi 0, %s74
      %s102 = sphi 0, %s104
      %s105 = sphi 0, %s102
      %s106 = sphi 0, %s105
      %s122 = sphi 0, %s106
      %s128 = sphi 0, %s130
      %s131 = sphi 0, %s128
      %s132 = sphi 0, %s131
      %s148 = sphi 0, %s132
      %s154 = sphi 0, %s156
      %s157 = sphi 0, %s154
      %s158 = sphi 0, %s157
      %s174 = sphi 0, %s158
      %s180 = sphi 0, %s182
      %s183 = sphi 0, %s180
      %s184 = sphi 0, %s183
      %s200 = sphi 0, %s184
      %s206 = sphi 0, %s208
      %s209 = sphi 0, %s206
      %s210 = sphi 0, %s209
      %s226 = sphi 0, %s210
      %s232 = sphi 0, %s234
      %s235 = sphi 0, %s232
      %s236 = sphi 0, %s235
      %s252 = sphi 0, %s236
      %s258 = sphi 0, %s260
      %s261 = sphi 0, %s258
      %s262 = sphi 0, %s261
      %s278 = sphi 0, %s262
      %s284 = sphi 0, %s286
      %s287 = sphi 0, %s284
      %s288 = sphi 0, %s287
      %s304 = sphi 0, %s288
      %s310 = sphi 0, %s312
      %s313 = sphi 0, %s310
      %s314 = sphi 0, %s313
      %s330 = sphi 0, %s314
      %s336 = sphi 0, %s338
      %s339 = sphi 0, %s336
      %s340 = sphi 0, %s339
      %s356 = sphi 0, %s340
      %s362 = sphi 0, %s364
      %s365 = sphi 0, %s362
      %s366 = sphi 0, %s365
      %s382 = sphi 0, %s366
      %s392 = sphi 0, %s394
      %s395 = sphi 0, %s392
      %s396 = sphi 0, %s395
      %s412 = sphi 0, %s396
      %s420 = sphi 0, %s422
      %s423 = sphi 0, %s420
      %s424 = sphi 0, %s423
      %s440 = sphi 0, %s424
      %s448 = sphi 0, %s450
      %s451 = sphi 0, %s448
      %s452 = sphi 0, %s451
      %s468 = sphi 0, %s452
      %s476 = sphi 0, %s478
      %s479 = sphi 0, %s476
      %s480 = sphi 0, %s479
      %s496 = sphi 0, %s480
      %s504 = sphi 0, %s506
      %s507 = sphi 0, %s504
      %s508 = sphi 0, %s507
      %s524 = sphi 0, %s508
      %s532 = sphi 0, %s534
      %s535 = sphi 0, %s532
      %s536 = sphi 0, %s535
      %s552 = sphi 0, %s536
    $region4: #{_fused_forward.1} parent=1 // loop_header_branch
      %40 = sbr.rel (%p38) target = $region8
    $region5: #{_fused_forward.1} parent=1 // loop_body
      %s42 = ssub.s32 %s37, 1
      %s43 = ssub.s32 %s37, 2
      %s53 = sadd.s32 1, %s46
      %p54 = scmp.ge.s32.totalorder %s53, 1
      %s55 = scalar_select %p54, 0, %s53
      %s56 = sadd.s32 1, %s45
      %s57 = scalar_select %p54, %s56, %s45
      %p58 = scmp.ge.s32.totalorder %s57, 1
      %s59 = scalar_select %p58, 0, %s57
      %s60 = sadd.s32 1, %s44
      %s61 = scalar_select %p58, %s60, %s44
      %p62 = scmp.ge.s32.totalorder %s61, 2
      %s63 = scalar_select %p62, 0, %s61
      %s64 = ssub.s32 %s44, %s63
      %s65 = ssub.s32 %s45, %s59
      %s66 = sor.u32 %s64, %s65
      %s67 = ssub.s32 %s46, %s55
      %s68 = sor.u32 %s66, %s67
      %p69 = scmp.eq.s32.totalorder %s68, 0
      %s71 = sadd.s32 %s70, 1
      %s72 = scalar_select %p69, %s70, %s71
      %p75 = pneg %p69
      %p76 = scmp.eq.s32.totalorder %s37, 1
      %p77 = por %p75, %p76
      %p78 = scmp.ne.s32.totalorder %s70, %s73
      %p79 = scmp.eq.s32.totalorder %s37, 0
      %p80 = por %p78, %p79
      %p81 = scmp.ne.s32.totalorder %s70, %s73
      %p82 = scmp.eq.s32.totalorder %s42, 1
      %p83 = por %p81, %p82
      %p84 = scmp.ne.s32.totalorder %s73, %s74
      %p85 = scmp.eq.s32.totalorder %s42, 0
      %p86 = por %p84, %p85
      %p87 = scmp.ne.s32.totalorder %s73, %s74
      %p88 = scmp.eq.s32.totalorder %s43, 1
      %p89 = por %p87, %p88
      %p91 = scmp.ne.s32.totalorder %s74, %s90
      %p92 = scmp.eq.s32.totalorder %s43, 0
      %p93 = por %p91, %p92
      %s94 = ssub.s32 1, %s44
      %s95 = ssub.s32 1, %s63
      %s96 = ssub.s32 %s94, %s95
      %s97 = ssub.s32 %s45, %s59
      %s98 = sor.u32 %s96, %s97
      %s99 = ssub.s32 %s46, %s55
      %s100 = sor.u32 %s98, %s99
      %p101 = scmp.eq.s32.totalorder %s100, 0
      %s103 = sadd.s32 %s102, 1
      %s104 = scalar_select %p101, %s102, %s103
      %p107 = pneg %p101
      %p108 = scmp.eq.s32.totalorder %s37, 1
      %p109 = por %p107, %p108
      %p110 = scmp.ne.s32.totalorder %s102, %s105
      %p111 = scmp.eq.s32.totalorder %s37, 0
      %p112 = por %p110, %p111
      %p113 = scmp.ne.s32.totalorder %s102, %s105
      %p114 = scmp.eq.s32.totalorder %s42, 1
      %p115 = por %p113, %p114
      %p116 = scmp.ne.s32.totalorder %s105, %s106
      %p117 = scmp.eq.s32.totalorder %s42, 0
      %p118 = por %p116, %p117
      %p119 = scmp.ne.s32.totalorder %s105, %s106
      %p120 = scmp.eq.s32.totalorder %s43, 1
      %p121 = por %p119, %p120
      %p123 = scmp.ne.s32.totalorder %s106, %s122
      %p124 = scmp.eq.s32.totalorder %s43, 0
      %p125 = por %p123, %p124
      %s126 = ssub.s32 %s44, %s63
      %p127 = scmp.eq.s32.totalorder %s126, 0
      %s129 = sadd.s32 %s128, 1
      %s130 = scalar_select %p127, %s128, %s129
      %p133 = pneg %p127
      %p134 = scmp.eq.s32.totalorder %s37, 1
      %p135 = por %p133, %p134
      %p136 = scmp.ne.s32.totalorder %s128, %s131
      %p137 = scmp.eq.s32.totalorder %s37, 0
      %p138 = por %p136, %p137
      %p139 = scmp.ne.s32.totalorder %s128, %s131
      %p140 = scmp.eq.s32.totalorder %s42, 1
      %p141 = por %p139, %p140
      %p142 = scmp.ne.s32.totalorder %s131, %s132
      %p143 = scmp.eq.s32.totalorder %s42, 0
      %p144 = por %p142, %p143
      %p145 = scmp.ne.s32.totalorder %s131, %s132
      %p146 = scmp.eq.s32.totalorder %s43, 1
      %p147 = por %p145, %p146
      %p149 = scmp.ne.s32.totalorder %s132, %s148
      %p150 = scmp.eq.s32.totalorder %s43, 0
      %p151 = por %p149, %p150
      %s152 = ssub.s32 %s44, %s63
      %p153 = scmp.eq.s32.totalorder %s152, 0
      %s155 = sadd.s32 %s154, 1
      %s156 = scalar_select %p153, %s154, %s155
      %p159 = pneg %p153
      %p160 = scmp.eq.s32.totalorder %s37, 1
      %p161 = por %p159, %p160
      %p162 = scmp.ne.s32.totalorder %s154, %s157
      %p163 = scmp.eq.s32.totalorder %s37, 0
      %p164 = por %p162, %p163
      %p165 = scmp.ne.s32.totalorder %s154, %s157
      %p166 = scmp.eq.s32.totalorder %s42, 1
      %p167 = por %p165, %p166
      %p168 = scmp.ne.s32.totalorder %s157, %s158
      %p169 = scmp.eq.s32.totalorder %s42, 0
      %p170 = por %p168, %p169
      %p171 = scmp.ne.s32.totalorder %s157, %s158
      %p172 = scmp.eq.s32.totalorder %s43, 1
      %p173 = por %p171, %p172
      %p175 = scmp.ne.s32.totalorder %s158, %s174
      %p176 = scmp.eq.s32.totalorder %s43, 0
      %p177 = por %p175, %p176
      %s178 = ssub.s32 %s44, %s63
      %p179 = scmp.eq.s32.totalorder %s178, 0
      %s181 = sadd.s32 %s180, 1
      %s182 = scalar_select %p179, %s180, %s181
      %p185 = pneg %p179
      %p186 = scmp.eq.s32.totalorder %s37, 1
      %p187 = por %p185, %p186
      %p188 = scmp.ne.s32.totalorder %s180, %s183
      %p189 = scmp.eq.s32.totalorder %s37, 0
      %p190 = por %p188, %p189
      %p191 = scmp.ne.s32.totalorder %s180, %s183
      %p192 = scmp.eq.s32.totalorder %s42, 1
      %p193 = por %p191, %p192
      %p194 = scmp.ne.s32.totalorder %s183, %s184
      %p195 = scmp.eq.s32.totalorder %s42, 0
      %p196 = por %p194, %p195
      %p197 = scmp.ne.s32.totalorder %s183, %s184
      %p198 = scmp.eq.s32.totalorder %s43, 1
      %p199 = por %p197, %p198
      %p201 = scmp.ne.s32.totalorder %s184, %s200
      %p202 = scmp.eq.s32.totalorder %s43, 0
      %p203 = por %p201, %p202
      %s204 = ssub.s32 %s44, %s63
      %p205 = scmp.eq.s32.totalorder %s204, 0
      %s207 = sadd.s32 %s206, 1
      %s208 = scalar_select %p205, %s206, %s207
      %p211 = pneg %p205
      %p212 = scmp.eq.s32.totalorder %s37, 1
      %p213 = por %p211, %p212
      %p214 = scmp.ne.s32.totalorder %s206, %s209
      %p215 = scmp.eq.s32.totalorder %s37, 0
      %p216 = por %p214, %p215
      %p217 = scmp.ne.s32.totalorder %s206, %s209
      %p218 = scmp.eq.s32.totalorder %s42, 1
      %p219 = por %p217, %p218
      %p220 = scmp.ne.s32.totalorder %s209, %s210
      %p221 = scmp.eq.s32.totalorder %s42, 0
      %p222 = por %p220, %p221
      %p223 = scmp.ne.s32.totalorder %s209, %s210
      %p224 = scmp.eq.s32.totalorder %s43, 1
      %p225 = por %p223, %p224
      %p227 = scmp.ne.s32.totalorder %s210, %s226
      %p228 = scmp.eq.s32.totalorder %s43, 0
      %p229 = por %p227, %p228
      %s230 = ssub.s32 %s44, %s63
      %p231 = scmp.eq.s32.totalorder %s230, 0
      %s233 = sadd.s32 %s232, 1
      %s234 = scalar_select %p231, %s232, %s233
      %p237 = pneg %p231
      %p238 = scmp.eq.s32.totalorder %s37, 1
      %p239 = por %p237, %p238
      %p240 = scmp.ne.s32.totalorder %s232, %s235
      %p241 = scmp.eq.s32.totalorder %s37, 0
      %p242 = por %p240, %p241
      %p243 = scmp.ne.s32.totalorder %s232, %s235
      %p244 = scmp.eq.s32.totalorder %s42, 1
      %p245 = por %p243, %p244
      %p246 = scmp.ne.s32.totalorder %s235, %s236
      %p247 = scmp.eq.s32.totalorder %s42, 0
      %p248 = por %p246, %p247
      %p249 = scmp.ne.s32.totalorder %s235, %s236
      %p250 = scmp.eq.s32.totalorder %s43, 1
      %p251 = por %p249, %p250
      %p253 = scmp.ne.s32.totalorder %s236, %s252
      %p254 = scmp.eq.s32.totalorder %s43, 0
      %p255 = por %p253, %p254
      %s256 = ssub.s32 %s44, %s63
      %p257 = scmp.eq.s32.totalorder %s256, 0
      %s259 = sadd.s32 %s258, 1
      %s260 = scalar_select %p257, %s258, %s259
      %p263 = pneg %p257
      %p264 = scmp.eq.s32.totalorder %s37, 1
      %p265 = por %p263, %p264
      %p266 = scmp.ne.s32.totalorder %s258, %s261
      %p267 = scmp.eq.s32.totalorder %s37, 0
      %p268 = por %p266, %p267
      %p269 = scmp.ne.s32.totalorder %s258, %s261
      %p270 = scmp.eq.s32.totalorder %s42, 1
      %p271 = por %p269, %p270
      %p272 = scmp.ne.s32.totalorder %s261, %s262
      %p273 = scmp.eq.s32.totalorder %s42, 0
      %p274 = por %p272, %p273
      %p275 = scmp.ne.s32.totalorder %s261, %s262
      %p276 = scmp.eq.s32.totalorder %s43, 1
      %p277 = por %p275, %p276
      %p279 = scmp.ne.s32.totalorder %s262, %s278
      %p280 = scmp.eq.s32.totalorder %s43, 0
      %p281 = por %p279, %p280
      %s282 = ssub.s32 %s44, %s63
      %p283 = scmp.eq.s32.totalorder %s282, 0
      %s285 = sadd.s32 %s284, 1
      %s286 = scalar_select %p283, %s284, %s285
      %p289 = pneg %p283
      %p290 = scmp.eq.s32.totalorder %s37, 1
      %p291 = por %p289, %p290
      %p292 = scmp.ne.s32.totalorder %s284, %s287
      %p293 = scmp.eq.s32.totalorder %s37, 0
      %p294 = por %p292, %p293
      %p295 = scmp.ne.s32.totalorder %s284, %s287
      %p296 = scmp.eq.s32.totalorder %s42, 1
      %p297 = por %p295, %p296
      %p298 = scmp.ne.s32.totalorder %s287, %s288
      %p299 = scmp.eq.s32.totalorder %s42, 0
      %p300 = por %p298, %p299
      %p301 = scmp.ne.s32.totalorder %s287, %s288
      %p302 = scmp.eq.s32.totalorder %s43, 1
      %p303 = por %p301, %p302
      %p305 = scmp.ne.s32.totalorder %s288, %s304
      %p306 = scmp.eq.s32.totalorder %s43, 0
      %p307 = por %p305, %p306
      %s308 = ssub.s32 %s44, %s63
      %p309 = scmp.eq.s32.totalorder %s308, 0
      %s311 = sadd.s32 %s310, 1
      %s312 = scalar_select %p309, %s310, %s311
      %p315 = pneg %p309
      %p316 = scmp.eq.s32.totalorder %s37, 1
      %p317 = por %p315, %p316
      %p318 = scmp.ne.s32.totalorder %s310, %s313
      %p319 = scmp.eq.s32.totalorder %s37, 0
      %p320 = por %p318, %p319
      %p321 = scmp.ne.s32.totalorder %s310, %s313
      %p322 = scmp.eq.s32.totalorder %s42, 1
      %p323 = por %p321, %p322
      %p324 = scmp.ne.s32.totalorder %s313, %s314
      %p325 = scmp.eq.s32.totalorder %s42, 0
      %p326 = por %p324, %p325
      %p327 = scmp.ne.s32.totalorder %s313, %s314
      %p328 = scmp.eq.s32.totalorder %s43, 1
      %p329 = por %p327, %p328
      %p331 = scmp.ne.s32.totalorder %s314, %s330
      %p332 = scmp.eq.s32.totalorder %s43, 0
      %p333 = por %p331, %p332
      %s334 = ssub.s32 %s44, %s63
      %p335 = scmp.eq.s32.totalorder %s334, 0
      %s337 = sadd.s32 %s336, 1
      %s338 = scalar_select %p335, %s336, %s337
      %p341 = pneg %p335
      %p342 = scmp.eq.s32.totalorder %s37, 1
      %p343 = por %p341, %p342
      %p344 = scmp.ne.s32.totalorder %s336, %s339
      %p345 = scmp.eq.s32.totalorder %s37, 0
      %p346 = por %p344, %p345
      %p347 = scmp.ne.s32.totalorder %s336, %s339
      %p348 = scmp.eq.s32.totalorder %s42, 1
      %p349 = por %p347, %p348
      %p350 = scmp.ne.s32.totalorder %s339, %s340
      %p351 = scmp.eq.s32.totalorder %s42, 0
      %p352 = por %p350, %p351
      %p353 = scmp.ne.s32.totalorder %s339, %s340
      %p354 = scmp.eq.s32.totalorder %s43, 1
      %p355 = por %p353, %p354
      %p357 = scmp.ne.s32.totalorder %s340, %s356
      %p358 = scmp.eq.s32.totalorder %s43, 0
      %p359 = por %p357, %p358
      %s360 = ssub.s32 %s44, %s63
      %p361 = scmp.eq.s32.totalorder %s360, 0
      %s363 = sadd.s32 %s362, 1
      %s364 = scalar_select %p361, %s362, %s363
      %p367 = pneg %p361
      %p368 = scmp.eq.s32.totalorder %s37, 1
      %p369 = por %p367, %p368
      %p370 = scmp.ne.s32.totalorder %s362, %s365
      %p371 = scmp.eq.s32.totalorder %s37, 0
      %p372 = por %p370, %p371
      %p373 = scmp.ne.s32.totalorder %s362, %s365
      %p374 = scmp.eq.s32.totalorder %s42, 1
      %p375 = por %p373, %p374
      %p376 = scmp.ne.s32.totalorder %s365, %s366
      %p377 = scmp.eq.s32.totalorder %s42, 0
      %p378 = por %p376, %p377
      %p379 = scmp.ne.s32.totalorder %s365, %s366
      %p380 = scmp.eq.s32.totalorder %s43, 1
      %p381 = por %p379, %p380
      %p383 = scmp.ne.s32.totalorder %s366, %s382
      %p384 = scmp.eq.s32.totalorder %s43, 0
      %p385 = por %p383, %p384
      %s386 = ssub.s32 %s44, %s63
      %s387 = ssub.s32 %s45, %s59
      %s388 = sor.u32 %s386, %s387
      %s389 = ssub.s32 %s46, %s55
      %s390 = sor.u32 %s388, %s389
      %p391 = scmp.eq.s32.totalorder %s390, 0
      %s393 = sadd.s32 %s392, 1
      %s394 = scalar_select %p391, %s392, %s393
      %p397 = pneg %p391
      %p398 = scmp.eq.s32.totalorder %s37, 1
      %p399 = por %p397, %p398
      %p400 = scmp.ne.s32.totalorder %s392, %s395
      %p401 = scmp.eq.s32.totalorder %s37, 0
      %p402 = por %p400, %p401
      %p403 = scmp.ne.s32.totalorder %s392, %s395
      %p404 = scmp.eq.s32.totalorder %s42, 1
      %p405 = por %p403, %p404
      %p406 = scmp.ne.s32.totalorder %s395, %s396
      %p407 = scmp.eq.s32.totalorder %s42, 0
      %p408 = por %p406, %p407
      %p409 = scmp.ne.s32.totalorder %s395, %s396
      %p410 = scmp.eq.s32.totalorder %s43, 1
      %p411 = por %p409, %p410
      %p413 = scmp.ne.s32.totalorder %s396, %s412
      %p414 = scmp.eq.s32.totalorder %s43, 0
      %p415 = por %p413, %p414
      %s416 = ssub.s32 %s44, %s63
      %s417 = ssub.s32 %s45, %s59
      %s418 = sor.u32 %s416, %s417
      %p419 = scmp.eq.s32.totalorder %s418, 0
      %s421 = sadd.s32 %s420, 1
      %s422 = scalar_select %p419, %s420, %s421
      %p425 = pneg %p419
      %p426 = scmp.eq.s32.totalorder %s37, 1
      %p427 = por %p425, %p426
      %p428 = scmp.ne.s32.totalorder %s420, %s423
      %p429 = scmp.eq.s32.totalorder %s37, 0
      %p430 = por %p428, %p429
      %p431 = scmp.ne.s32.totalorder %s420, %s423
      %p432 = scmp.eq.s32.totalorder %s42, 1
      %p433 = por %p431, %p432
      %p434 = scmp.ne.s32.totalorder %s423, %s424
      %p435 = scmp.eq.s32.totalorder %s42, 0
      %p436 = por %p434, %p435
      %p437 = scmp.ne.s32.totalorder %s423, %s424
      %p438 = scmp.eq.s32.totalorder %s43, 1
      %p439 = por %p437, %p438
      %p441 = scmp.ne.s32.totalorder %s424, %s440
      %p442 = scmp.eq.s32.totalorder %s43, 0
      %p443 = por %p441, %p442
      %s444 = ssub.s32 %s44, %s63
      %s445 = ssub.s32 %s45, %s59
      %s446 = sor.u32 %s444, %s445
      %p447 = scmp.eq.s32.totalorder %s446, 0
      %s449 = sadd.s32 %s448, 1
      %s450 = scalar_select %p447, %s448, %s449
      %p453 = pneg %p447
      %p454 = scmp.eq.s32.totalorder %s37, 1
      %p455 = por %p453, %p454
      %p456 = scmp.ne.s32.totalorder %s448, %s451
      %p457 = scmp.eq.s32.totalorder %s37, 0
      %p458 = por %p456, %p457
      %p459 = scmp.ne.s32.totalorder %s448, %s451
      %p460 = scmp.eq.s32.totalorder %s42, 1
      %p461 = por %p459, %p460
      %p462 = scmp.ne.s32.totalorder %s451, %s452
      %p463 = scmp.eq.s32.totalorder %s42, 0
      %p464 = por %p462, %p463
      %p465 = scmp.ne.s32.totalorder %s451, %s452
      %p466 = scmp.eq.s32.totalorder %s43, 1
      %p467 = por %p465, %p466
      %p469 = scmp.ne.s32.totalorder %s452, %s468
      %p470 = scmp.eq.s32.totalorder %s43, 0
      %p471 = por %p469, %p470
      %s472 = ssub.s32 %s44, %s63
      %s473 = ssub.s32 %s45, %s59
      %s474 = sor.u32 %s472, %s473
      %p475 = scmp.eq.s32.totalorder %s474, 0
      %s477 = sadd.s32 %s476, 1
      %s478 = scalar_select %p475, %s476, %s477
      %p481 = pneg %p475
      %p482 = scmp.eq.s32.totalorder %s37, 1
      %p483 = por %p481, %p482
      %p484 = scmp.ne.s32.totalorder %s476, %s479
      %p485 = scmp.eq.s32.totalorder %s37, 0
      %p486 = por %p484, %p485
      %p487 = scmp.ne.s32.totalorder %s476, %s479
      %p488 = scmp.eq.s32.totalorder %s42, 1
      %p489 = por %p487, %p488
      %p490 = scmp.ne.s32.totalorder %s479, %s480
      %p491 = scmp.eq.s32.totalorder %s42, 0
      %p492 = por %p490, %p491
      %p493 = scmp.ne.s32.totalorder %s479, %s480
      %p494 = scmp.eq.s32.totalorder %s43, 1
      %p495 = por %p493, %p494
      %p497 = scmp.ne.s32.totalorder %s480, %s496
      %p498 = scmp.eq.s32.totalorder %s43, 0
      %p499 = por %p497, %p498
      %s500 = ssub.s32 %s44, %s63
      %s501 = ssub.s32 %s45, %s59
      %s502 = sor.u32 %s500, %s501
      %p503 = scmp.eq.s32.totalorder %s502, 0
      %s505 = sadd.s32 %s504, 1
      %s506 = scalar_select %p503, %s504, %s505
      %p509 = pneg %p503
      %p510 = scmp.eq.s32.totalorder %s37, 1
      %p511 = por %p509, %p510
      %p512 = scmp.ne.s32.totalorder %s504, %s507
      %p513 = scmp.eq.s32.totalorder %s37, 0
      %p514 = por %p512, %p513
      %p515 = scmp.ne.s32.totalorder %s504, %s507
      %p516 = scmp.eq.s32.totalorder %s42, 1
      %p517 = por %p515, %p516
      %p518 = scmp.ne.s32.totalorder %s507, %s508
      %p519 = scmp.eq.s32.totalorder %s42, 0
      %p520 = por %p518, %p519
      %p521 = scmp.ne.s32.totalorder %s507, %s508
      %p522 = scmp.eq.s32.totalorder %s43, 1
      %p523 = por %p521, %p522
      %p525 = scmp.ne.s32.totalorder %s508, %s524
      %p526 = scmp.eq.s32.totalorder %s43, 0
      %p527 = por %p525, %p526
      %s528 = ssub.s32 %s44, %s63
      %s529 = ssub.s32 %s45, %s59
      %s530 = sor.u32 %s528, %s529
      %p531 = scmp.eq.s32.totalorder %s530, 0
      %s533 = sadd.s32 %s532, 1
      %s534 = scalar_select %p531, %s532, %s533
      %p537 = pneg %p531
      %p538 = scmp.eq.s32.totalorder %s37, 1
      %p539 = por %p537, %p538
      %p540 = scmp.ne.s32.totalorder %s532, %s535
      %p541 = scmp.eq.s32.totalorder %s37, 0
      %p542 = por %p540, %p541
      %p543 = scmp.ne.s32.totalorder %s532, %s535
      %p544 = scmp.eq.s32.totalorder %s42, 1
      %p545 = por %p543, %p544
      %p546 = scmp.ne.s32.totalorder %s535, %s536
      %p547 = scmp.eq.s32.totalorder %s42, 0
      %p548 = por %p546, %p547
      %p549 = scmp.ne.s32.totalorder %s535, %s536
      %p550 = scmp.eq.s32.totalorder %s43, 1
      %p551 = por %p549, %p550
      %p553 = scmp.ne.s32.totalorder %s536, %s552
      %p554 = scmp.eq.s32.totalorder %s43, 0
      %p555 = por %p553, %p554
      %p556 = scmp.le.s32.totalorder 1, %s37
      %p557 = scmp.lt.s32.totalorder %s37, 3
      %p558 = pnand %p556, %p557
      %p559 = pneg %p558
      // Predicated region
      $region9: #{_fused_forward.1} parent=5 // pred_check
        _
      $region10: #{_fused_forward.1} parent=5 // pred_check_branch
        %561 = sbr.rel (%p558) target = $region12
      $region11: #{_fused_forward.1} parent=5 // pred_region
        %s562 = ssub.s32 %s37, 1
      $region12: #{_fused_forward.1} parent=5 // pred_fallthru
        _
      %p563 = scmp.lt.s32.totalorder %s37, 2
      // Predicated region
      $region13: #{_fused_forward.1} parent=5 // pred_check
        %p564 = pneg %p563
      $region14: #{_fused_forward.1} parent=5 // pred_check_branch
        %566 = sbr.rel (%p564) target = $region16
      $region15: #{_fused_forward.1} parent=5 // pred_region
        // Predicated region
        $region17: #{_fused_forward.1} parent=15 // pred_check
          %p567 = pneg %p80
        $region18: #{_fused_forward.1} parent=15 // pred_check_branch
          %569 = sbr.rel (%p567) target = $region20
        $region19: #{_fused_forward.1} parent=15 // pred_region
          %s570 = smul.u32 2, %s45
          %s571 = smul.u32 2, %s46
          %p572 = scmp.lt.s32.totalorder %s44, 1
          %s573 = scalar_select %p572, %s44, 1
          %p574 = scmp.lt.s32.totalorder %s570, 1
          %s575 = scalar_select %p574, %s570, 1
          %p576 = scmp.lt.s32.totalorder %s571, 1
          %s577 = scalar_select %p576, %s571, 1
          %s578 = smul.addr %s575, 2
          %s579 = sadd.s32 %s577, %s578
          %s580 = smul.addr %s573, 4
          %s581 = sadd.s32 %s579, %s580
          %s582 = smul.addr %s581, 2
          %s583 = scalar_lea.vmem %s1, %s582
          %s584 = smul.u32 2, %s45
          %s585 = smul.u32 2, %s46
        $region20: #{_fused_forward.1} parent=15 // pred_fallthru
          _
        // Predicated region
        $region21: #{_fused_forward.1} parent=15 // pred_check
          %p586 = pneg %p112
        $region22: #{_fused_forward.1} parent=15 // pred_check_branch
          %588 = sbr.rel (%p586) target = $region24
        $region23: #{_fused_forward.1} parent=15 // pred_region
          %s589 = ssub.s32 1, %s44
          %s590 = smul.u32 2, %s45
          %s591 = smul.u32 2, %s46
          %p592 = scmp.lt.s32.totalorder %s589, 1
          %s593 = scalar_select %p592, %s589, 1
          %p594 = scmp.lt.s32.totalorder %s590, 1
          %s595 = scalar_select %p594, %s590, 1
          %p596 = scmp.lt.s32.totalorder %s591, 1
          %s597 = scalar_select %p596, %s591, 1
          %s598 = smul.addr %s595, 2
          %s599 = sadd.s32 %s597, %s598
          %s600 = smul.addr %s593, 4
          %s601 = sadd.s32 %s599, %s600
          %s602 = smul.addr %s601, 2
          %s603 = scalar_lea.vmem %s2, %s602
          %s604 = ssub.s32 1, %s44
          %s605 = smul.u32 2, %s45
          %s606 = smul.u32 2, %s46
        $region24: #{_fused_forward.1} parent=15 // pred_fallthru
          _
        // Predicated region
        $region25: #{_fused_forward.1} parent=15 // pred_check
          %p607 = pneg %p138
        $region26: #{_fused_forward.1} parent=15 // pred_check_branch
          %609 = sbr.rel (%p607) target = $region28
        $region27: #{_fused_forward.1} parent=15 // pred_region
          %p610 = scmp.lt.s32.totalorder %s44, 1
          %s611 = scalar_select %p610, %s44, 1
          %s612 = smul.addr %s611, 2
          %s613 = smul.addr %s612, 8
          %s614 = scalar_lea.vmem %s3, %s613
        $region28: #{_fused_forward.1} parent=15 // pred_fallthru
          _
        // Predicated region
        $region29: #{_fused_forward.1} parent=15 // pred_check
          %p615 = pneg %p164
        $region30: #{_fused_forward.1} parent=15 // pred_check_branch
          %617 = sbr.rel (%p615) target = $region32
        $region31: #{_fused_forward.1} parent=15 // pred_region
          %p618 = scmp.lt.s32.totalorder %s44, 1
          %s619 = scalar_select %p618, %s44, 1
          %s620 = smul.addr %s619, 2
          %s621 = smul.addr %s620, 8
          %s622 = scalar_lea.vmem %s4, %s621
        $region32: #{_fused_forward.1} parent=15 // pred_fallthru
          _
        // Predicated region
        $region33: #{_fused_forward.1} parent=15 // pred_check
          %p623 = pneg %p190
        $region34: #{_fused_forward.1} parent=15 // pred_check_branch
          %625 = sbr.rel (%p623) target = $region36
        $region35: #{_fused_forward.1} parent=15 // pred_region
          %p626 = scmp.lt.s32.totalorder %s44, 1
          %s627 = scalar_select %p626, %s44, 1
          %s628 = smul.addr %s627, 4
          %s629 = smul.addr %s628, 8
          %s630 = scalar_lea.vmem %s5, %s629
        $region36: #{_fused_forward.1} parent=15 // pred_fallthru
          _
        // Predicated region
        $region37: #{_fused_forward.1} parent=15 // pred_check
          %p631 = pneg %p216
        $region38: #{_fused_forward.1} parent=15 // pred_check_branch
          %633 = sbr.rel (%p631) target = $region40
        $region39: #{_fused_forward.1} parent=15 // pred_region
          %p634 = scmp.lt.s32.totalorder %s44, 1
          %s635 = scalar_select %p634, %s44, 1
          %s636 = smul.addr %s635, 4
          %s637 = smul.addr %s636, 8
          %s638 = scalar_lea.vmem %s6, %s637
        $region40: #{_fused_forward.1} parent=15 // pred_fallthru
          _
        // Predicated region
        $region41: #{_fused_forward.1} parent=15 // pred_check
          %p639 = pneg %p242
        $region42: #{_fused_forward.1} parent=15 // pred_check_branch
          %641 = sbr.rel (%p639) target = $region44
        $region43: #{_fused_forward.1} parent=15 // pred_region
          %p642 = scmp.lt.s32.totalorder %s44, 1
          %s643 = scalar_select %p642, %s44, 1
          %s644 = smul.addr %s643, 4
          %s645 = scalar_lea.vmem %s7, %s644
        $region44: #{_fused_forward.1} parent=15 // pred_fallthru
          _
        // Predicated region
        $region45: #{_fused_forward.1} parent=15 // pred_check
          %p646 = pneg %p268
        $region46: #{_fused_forward.1} parent=15 // pred_check_branch
          %648 = sbr.rel (%p646) target = $region48
        $region47: #{_fused_forward.1} parent=15 // pred_region
          %p649 = scmp.lt.s32.totalorder %s44, 1
          %s650 = scalar_select %p649, %s44, 1
          %s651 = smul.addr %s650, 4
          %s652 = scalar_lea.vmem %s8, %s651
        $region48: #{_fused_forward.1} parent=15 // pred_fallthru
          _
        // Predicated region
        $region49: #{_fused_forward.1} parent=15 // pred_check
          %p653 = pneg %p294
        $region50: #{_fused_forward.1} parent=15 // pred_check_branch
          %655 = sbr.rel (%p653) target = $region52
        $region51: #{_fused_forward.1} parent=15 // pred_region
          %p656 = scmp.lt.s32.totalorder %s44, 1
          %s657 = scalar_select %p656, %s44, 1
          %s658 = smul.addr %s657, 4
          %s659 = smul.addr %s658, 8
          %s660 = scalar_lea.vmem %s9, %s659
        $region52: #{_fused_forward.1} parent=15 // pred_fallthru
          _
        // Predicated region
        $region53: #{_fused_forward.1} parent=15 // pred_check
          %p661 = pneg %p320
        $region54: #{_fused_forward.1} parent=15 // pred_check_branch
          %663 = sbr.rel (%p661) target = $region56
        $region55: #{_fused_forward.1} parent=15 // pred_region
          %p664 = scmp.lt.s32.totalorder %s44, 1
          %s665 = scalar_select %p664, %s44, 1
          %s666 = scalar_lea.vmem %s10, %s665
        $region56: #{_fused_forward.1} parent=15 // pred_fallthru
          _
        // Predicated region
        $region57: #{_fused_forward.1} parent=15 // pred_check
          %p667 = pneg %p346
        $region58: #{_fused_forward.1} parent=15 // pred_check_branch
          %669 = sbr.rel (%p667) target = $region60
        $region59: #{_fused_forward.1} parent=15 // pred_region
          %p670 = scmp.lt.s32.totalorder %s44, 1
          %s671 = scalar_select %p670, %s44, 1
          %s672 = smul.addr %s671, 4
          %s673 = smul.addr %s672, 8
          %s674 = scalar_lea.vmem %s11, %s673
        $region60: #{_fused_forward.1} parent=15 // pred_fallthru
          _
        // Predicated region
        $region61: #{_fused_forward.1} parent=15 // pred_check
          %p675 = pneg %p372
        $region62: #{_fused_forward.1} parent=15 // pred_check_branch
          %677 = sbr.rel (%p675) target = $region64
        $region63: #{_fused_forward.1} parent=15 // pred_region
          %p678 = scmp.lt.s32.totalorder %s44, 1
          %s679 = scalar_select %p678, %s44, 1
          %s680 = scalar_lea.vmem %s12, %s679
        $region64: #{_fused_forward.1} parent=15 // pred_fallthru
          _
      $region16: #{_fused_forward.1} parent=5 // pred_fallthru
        _
      %p681 = scmp.le.s32.totalorder 1, %s37
      %p682 = scmp.lt.s32.totalorder %s37, 3
      %p683 = pnand %p681, %p682
      %p684 = pneg %p683
      // Predicated region
      $region65: #{_fused_forward.1} parent=5 // pred_check
        _
      $region66: #{_fused_forward.1} parent=5 // pred_check_branch
        %686 = sbr.rel (%p683) target = $region68
      $region67: #{_fused_forward.1} parent=5 // pred_region
        %s687 = ssub.s32 %s37, 1
        %s688 = smul.u32 2, %s48
        %s689 = smul.u32 2, %s49
        %p690 = scmp.lt.s32.totalorder %s47, 1
        %s691 = scalar_select %p690, %s47, 1
        %p692 = scmp.lt.s32.totalorder %s688, 1
        %s693 = scalar_select %p692, %s688, 1
        %p694 = scmp.lt.s32.totalorder %s689, 1
        %s695 = scalar_select %p694, %s689, 1
        %s696 = smul.addr %s693, 2
        %s697 = sadd.s32 %s695, %s696
        %s698 = smul.addr %s691, 4
        %s699 = sadd.s32 %s697, %s698
        %s700 = smul.addr %s699, 2
        %s701 = scalar_lea.vmem %s1, %s700
        %p702 = pneg %p86
        %p703 = pneg %p83
        %s704 = ssub.s32 1, %s47
        %s705 = smul.u32 2, %s48
        %s706 = smul.u32 2, %s49
        %p707 = scmp.lt.s32.totalorder %s704, 1
        %s708 = scalar_select %p707, %s704, 1
        %p709 = scmp.lt.s32.totalorder %s705, 1
        %s710 = scalar_select %p709, %s705, 1
        %p711 = scmp.lt.s32.totalorder %s706, 1
        %s712 = scalar_select %p711, %s706, 1
        %s713 = smul.addr %s710, 2
        %s714 = sadd.s32 %s712, %s713
        %s715 = smul.addr %s708, 4
        %s716 = sadd.s32 %s714, %s715
        %s717 = smul.addr %s716, 2
        %s718 = scalar_lea.vmem %s2, %s717
        %p719 = pneg %p118
        %p720 = pneg %p115
        %p721 = scmp.lt.s32.totalorder %s47, 1
        %s722 = scalar_select %p721, %s47, 1
        %s723 = smul.addr %s722, 2
        %s724 = smul.addr %s723, 8
        %s725 = scalar_lea.vmem %s3, %s724
        %p726 = pneg %p144
        %p727 = pneg %p141
        %p728 = scmp.lt.s32.totalorder %s47, 1
        %s729 = scalar_select %p728, %s47, 1
        %s730 = smul.addr %s729, 2
        %s731 = smul.addr %s730, 8
        %s732 = scalar_lea.vmem %s4, %s731
        %p733 = pneg %p170
        %p734 = pneg %p167
        %p735 = scmp.lt.s32.totalorder %s47, 1
        %s736 = scalar_select %p735, %s47, 1
        %s737 = smul.addr %s736, 4
        %s738 = smul.addr %s737, 8
        %s739 = scalar_lea.vmem %s5, %s738
        %p740 = pneg %p196
        %p741 = pneg %p193
        %p742 = scmp.lt.s32.totalorder %s47, 1
        %s743 = scalar_select %p742, %s47, 1
        %s744 = smul.addr %s743, 4
        %s745 = smul.addr %s744, 8
        %s746 = scalar_lea.vmem %s6, %s745
        %p747 = pneg %p222
        %p748 = pneg %p219
        %p749 = scmp.lt.s32.totalorder %s47, 1
        %s750 = scalar_select %p749, %s47, 1
        %s751 = smul.addr %s750, 4
        %s752 = scalar_lea.vmem %s7, %s751
        %p753 = pneg %p248
        %p754 = pneg %p245
        %p755 = scmp.lt.s32.totalorder %s47, 1
        %s756 = scalar_select %p755, %s47, 1
        %s757 = smul.addr %s756, 4
        %s758 = scalar_lea.vmem %s8, %s757
        %p759 = pneg %p274
        %p760 = pneg %p271
        %p761 = scmp.lt.s32.totalorder %s47, 1
        %s762 = scalar_select %p761, %s47, 1
        %s763 = smul.addr %s762, 4
        %s764 = smul.addr %s763, 8
        %s765 = scalar_lea.vmem %s9, %s764
        %p766 = pneg %p300
        %p767 = pneg %p297
        %p768 = scmp.lt.s32.totalorder %s47, 1
        %s769 = scalar_select %p768, %s47, 1
        %s770 = scalar_lea.vmem %s10, %s769
        %p771 = pneg %p326
        %p772 = pneg %p323
        %p773 = scmp.lt.s32.totalorder %s47, 1
        %s774 = scalar_select %p773, %s47, 1
        %s775 = smul.addr %s774, 4
        %s776 = smul.addr %s775, 8
        %s777 = scalar_lea.vmem %s11, %s776
        %p778 = pneg %p352
        %p779 = pneg %p349
        %p780 = scmp.lt.s32.totalorder %s47, 1
        %s781 = scalar_select %p780, %s47, 1
        %s782 = scalar_lea.vmem %s12, %s781
        %p783 = pneg %p378
        %p784 = pneg %p375
        %p785 = pneg %p408
        %p786 = pneg %p405
        %s787 = sand.u32 %s395, 1
        %s788 = scalar_lea.sflag [#allocation8], %s787
        %s789 = sand.u32 %s395, 1
        %s790 = smul.addr %s789, 8
        %s791 = scalar_lea.vmem [#allocation7], %s790
        %p792 = pneg %p436
        %p793 = pneg %p433
        %s794 = sand.u32 %s42, 1
        %s795 = scalar_lea.sflag [#allocation10], %s794
        %s796 = sand.u32 %s423, 1
        %s797 = smul.addr %s796, 2
        %s798 = scalar_lea.vmem [#allocation9], %s797
        %p799 = pneg %p464
        %p800 = pneg %p461
        %s801 = sand.u32 %s42, 1
        %s802 = scalar_lea.sflag [#allocation10], %s801
        %s803 = sand.u32 %s451, 1
        %s804 = smul.addr %s803, 2
        %s805 = scalar_lea.vmem [#allocation11], %s804
        %p806 = pneg %p492
        %p807 = pneg %p489
        %s808 = smul.u32 2, %s48
        %p809 = scmp.lt.s32.totalorder %s47, 1
        %s810 = scalar_select %p809, %s47, 1
        %p811 = scmp.lt.s32.totalorder %s808, 1
        %s812 = scalar_select %p811, %s808, 1
        %s813 = smul.addr %s810, 2
        %s814 = sadd.s32 %s812, %s813
        %s815 = scalar_lea.vmem %s16, %s814
        %p816 = pneg %p520
        %p817 = pneg %p517
        %s818 = smul.u32 2, %s48
        %p819 = scmp.lt.s32.totalorder %s47, 1
        %s820 = scalar_select %p819, %s47, 1
        %p821 = scmp.lt.s32.totalorder %s818, 1
        %s822 = scalar_select %p821, %s818, 1
        %s823 = smul.addr %s820, 2
        %s824 = sadd.s32 %s822, %s823
        %s825 = scalar_lea.vmem %s17, %s824
        %p826 = pneg %p548
        %p827 = pneg %p545
        %s828 = smul.u32 2, %s48
        %p829 = scmp.lt.s32.totalorder %s47, 1
        %s830 = scalar_select %p829, %s47, 1
        %p831 = scmp.lt.s32.totalorder %s828, 1
        %s832 = scalar_select %p831, %s828, 1
        %s833 = smul.addr %s830, 2
        %s834 = sadd.s32 %s832, %s833
        %s835 = scalar_lea.vmem %s18, %s834
        %s836 = smul.u32 2, %s48
        %s837 = smul.u32 2, %s49
        %p838 = scmp.lt.s32.totalorder %s47, 1
        %s839 = scalar_select %p838, %s47, 1
        %p840 = scmp.lt.s32.totalorder %s836, 1
        %s841 = scalar_select %p840, %s836, 1
        %p842 = scmp.lt.s32.totalorder %s837, 1
        %s843 = scalar_select %p842, %s837, 1
        %s844 = smul.addr %s841, 2
        %s845 = sadd.s32 %s843, %s844
        %s846 = smul.addr %s839, 4
        %s847 = sadd.s32 %s845, %s846
        %s848 = smul.addr %s847, 2
        %s849 = scalar_lea.vmem %s1, %s848
        %s850 = smul.u32 2, %s48
        %s851 = smul.u32 2, %s49
        %s852 = ssub.s32 1, %s47
        %s853 = smul.u32 2, %s48
        %s854 = smul.u32 2, %s49
        %p855 = scmp.lt.s32.totalorder %s852, 1
        %s856 = scalar_select %p855, %s852, 1
        %p857 = scmp.lt.s32.totalorder %s853, 1
        %s858 = scalar_select %p857, %s853, 1
        %p859 = scmp.lt.s32.totalorder %s854, 1
        %s860 = scalar_select %p859, %s854, 1
        %s861 = smul.addr %s858, 2
        %s862 = sadd.s32 %s860, %s861
        %s863 = smul.addr %s856, 4
        %s864 = sadd.s32 %s862, %s863
        %s865 = smul.addr %s864, 2
        %s866 = scalar_lea.vmem %s2, %s865
        %s867 = ssub.s32 1, %s47
        %s868 = smul.u32 2, %s48
        %s869 = smul.u32 2, %s49
        %p870 = scmp.lt.s32.totalorder %s47, 1
        %s871 = scalar_select %p870, %s47, 1
        %s872 = smul.addr %s871, 2
        %s873 = smul.addr %s872, 8
        %s874 = scalar_lea.vmem %s3, %s873
        %p875 = scmp.lt.s32.totalorder %s47, 1
        %s876 = scalar_select %p875, %s47, 1
        %s877 = smul.addr %s876, 2
        %s878 = smul.addr %s877, 8
        %s879 = scalar_lea.vmem %s4, %s878
        %p880 = scmp.lt.s32.totalorder %s47, 1
        %s881 = scalar_select %p880, %s47, 1
        %s882 = smul.addr %s881, 4
        %s883 = smul.addr %s882, 8
        %s884 = scalar_lea.vmem %s5, %s883
        %p885 = scmp.lt.s32.totalorder %s47, 1
        %s886 = scalar_select %p885, %s47, 1
        %s887 = smul.addr %s886, 4
        %s888 = smul.addr %s887, 8
        %s889 = scalar_lea.vmem %s6, %s888
        %p890 = scmp.lt.s32.totalorder %s47, 1
        %s891 = scalar_select %p890, %s47, 1
        %s892 = smul.addr %s891, 4
        %s893 = scalar_lea.vmem %s7, %s892
        %p894 = scmp.lt.s32.totalorder %s47, 1
        %s895 = scalar_select %p894, %s47, 1
        %s896 = smul.addr %s895, 4
        %s897 = scalar_lea.vmem %s8, %s896
        %p898 = scmp.lt.s32.totalorder %s47, 1
        %s899 = scalar_select %p898, %s47, 1
        %s900 = smul.addr %s899, 4
        %s901 = smul.addr %s900, 8
        %s902 = scalar_lea.vmem %s9, %s901
        %p903 = scmp.lt.s32.totalorder %s47, 1
        %s904 = scalar_select %p903, %s47, 1
        %s905 = scalar_lea.vmem %s10, %s904
        %p906 = scmp.lt.s32.totalorder %s47, 1
        %s907 = scalar_select %p906, %s47, 1
        %s908 = smul.addr %s907, 4
        %s909 = smul.addr %s908, 8
        %s910 = scalar_lea.vmem %s11, %s909
        %p911 = scmp.lt.s32.totalorder %s47, 1
        %s912 = scalar_select %p911, %s47, 1
        %s913 = scalar_lea.vmem %s12, %s912
        %s914 = smul.u32 2, %s48
        %s915 = smul.u32 2, %s49
        %s916 = smul.u32 2, %s48
        %s917 = smul.u32 2, %s48
        %s918 = smul.u32 2, %s48
        %p919 = scmp.lt.s32.totalorder %s47, 1
        %s920 = scalar_select %p919, %s47, 1
        %p921 = scmp.lt.s32.totalorder %s918, 1
        %s922 = scalar_select %p921, %s918, 1
        %s923 = smul.addr %s920, 2
        %s924 = sadd.s32 %s922, %s923
        %s925 = scalar_lea.vmem %s16, %s924
        %s926 = smul.u32 2, %s48
        %s927 = smul.u32 2, %s48
        %p928 = scmp.lt.s32.totalorder %s47, 1
        %s929 = scalar_select %p928, %s47, 1
        %p930 = scmp.lt.s32.totalorder %s927, 1
        %s931 = scalar_select %p930, %s927, 1
        %s932 = smul.addr %s929, 2
        %s933 = sadd.s32 %s931, %s932
        %s934 = scalar_lea.vmem %s17, %s933
        %s935 = smul.u32 2, %s48
        %s936 = smul.u32 2, %s48
        %p937 = scmp.lt.s32.totalorder %s47, 1
        %s938 = scalar_select %p937, %s47, 1
        %p939 = scmp.lt.s32.totalorder %s936, 1
        %s940 = scalar_select %p939, %s936, 1
        %s941 = smul.addr %s938, 2
        %s942 = sadd.s32 %s940, %s941
        %s943 = scalar_lea.vmem %s18, %s942
        %s944 = smul.u32 2, %s48
        %p945 = scmp.eq.s32.totalorder %s49, 0
        // Predicated region
        $region69: #{_fused_forward.1} parent=67 // pred_check
          %p946 = pneg %p945
        $region70: #{_fused_forward.1} parent=67 // pred_check_branch
          %948 = sbr.rel (%p946) target = $region72
        $region71: #{_fused_forward.1} parent=67 // pred_region
          %949 = vst [vmem:[#allocation2] sm:$0xff] 0.0
          %950 = vst [vmem:[#allocation2 + $0x8] sm:$0xff] 0.0
          %951 = vst [vmem:[#allocation2 + $0x10] sm:$0xff] 0.0
          %952 = vst [vmem:[#allocation2 + $0x18] sm:$0xff] 0.0
          %953 = vst [vmem:[#allocation2 + $0x20] sm:$0xff] 0.0
          %954 = vst [vmem:[#allocation2 + $0x28] sm:$0xff] 0.0
          %955 = vst [vmem:[#allocation2 + $0x30] sm:$0xff] 0.0
          %956 = vst [vmem:[#allocation2 + $0x38] sm:$0xff] 0.0
          %957 = vst [vmem:[#allocation2 + $0x40] sm:$0xff] 0.0
          %958 = vst [vmem:[#allocation2 + $0x48] sm:$0xff] 0.0
          %959 = vst [vmem:[#allocation2 + $0x50] sm:$0xff] 0.0
          %960 = vst [vmem:[#allocation2 + $0x58] sm:$0xff] 0.0
          %961 = vst [vmem:[#allocation2 + $0x60] sm:$0xff] 0.0
          %962 = vst [vmem:[#allocation2 + $0x68] sm:$0xff] 0.0
          %963 = vst [vmem:[#allocation2 + $0x70] sm:$0xff] 0.0
          %964 = vst [vmem:[#allocation2 + $0x78] sm:$0xff] 0.0
          %965 = vst [vmem:[#allocation3] sm:$0xff] 0.0
          %966 = vst [vmem:[#allocation3 + $0x8] sm:$0xff] 0.0
          %967 = vst [vmem:[#allocation3 + $0x10] sm:$0xff] 0.0
          %968 = vst [vmem:[#allocation3 + $0x18] sm:$0xff] 0.0
          %969 = vst [vmem:[#allocation3 + $0x20] sm:$0xff] 0.0
          %970 = vst [vmem:[#allocation3 + $0x28] sm:$0xff] 0.0
          %971 = vst [vmem:[#allocation3 + $0x30] sm:$0xff] 0.0
          %972 = vst [vmem:[#allocation3 + $0x38] sm:$0xff] 0.0
          %973 = vst [vmem:[#allocation3 + $0x40] sm:$0xff] 0.0
          %974 = vst [vmem:[#allocation3 + $0x48] sm:$0xff] 0.0
          %975 = vst [vmem:[#allocation3 + $0x50] sm:$0xff] 0.0
          %976 = vst [vmem:[#allocation3 + $0x58] sm:$0xff] 0.0
          %977 = vst [vmem:[#allocation3 + $0x60] sm:$0xff] 0.0
          %978 = vst [vmem:[#allocation3 + $0x68] sm:$0xff] 0.0
          %979 = vst [vmem:[#allocation3 + $0x70] sm:$0xff] 0.0
          %980 = vst [vmem:[#allocation3 + $0x78] sm:$0xff] 0.0
          %981 = vst [vmem:[#allocation4] sm:$0xff] 0.0
          %982 = vst [vmem:[#allocation4 + $0x8] sm:$0xff] 0.0
        $region72: #{_fused_forward.1} parent=67 // pred_fallthru
          _
        %v983 = vld [vmem:[%s849] sm:$0xf]
        %v984 = vld [vmem:[%s849 + $0x4] sm:$0xf]
        %v985 = vunpack.c.l.bf16 %v983
        %v986 = vunpack.c.l.bf16 %v984
        %v987 = vld [vmem:[%s874] sm:$0xff]
        %v988 = vld [vmem:[%s874 + $0x8] sm:$0xff]
        %v989 = vld [vmem:[%s879] sm:$0xff]
        %v990 = vld [vmem:[%s879 + $0x8] sm:$0xff]
        %v991 = vld [vmem:[%s884] sm:$0xff]
        %v992 = vld [vmem:[%s884 + $0x8] sm:$0xff]
        %v993 = vld [vmem:[%s884 + $0x10] sm:$0xff]
        %v994 = vld [vmem:[%s884 + $0x18] sm:$0xff]
        %v995 = vld [vmem:[%s889] sm:$0xff]
        %v996 = vld [vmem:[%s889 + $0x8] sm:$0xff]
        %v997 = vld [vmem:[%s889 + $0x10] sm:$0xff]
        %v998 = vld [vmem:[%s889 + $0x18] sm:$0xff]
        %1000 = vset.pattern.permute.xlu0 0
        %1001 = vperm.xlu0 %1000, %v987
        %v1002 = vpop.permute.xlu0 %1001
        %1005 = vset.pattern.permute.xlu0 0
        %1006 = vperm.xlu0 %1005, %v988
        %v1007 = vpop.permute.xlu0 %1006
        %v1011 = vlaneseq
        %v1012 = vshrl.u32 %v1011, 7
        %v1013 = vsub.s32 0, %v1012
        %v1014 = vrot.slane %v985, %v1013
        %v1015 = vlaneseq
        %v1016 = vshrl.u32 %v1015, 7
        %v1017 = vsub.s32 4, %v1016
        %v1018 = vrot.slane %v985, %v1017
        %v1019 = vlaneseq
        %v1020 = vshrl.u32 %v1019, 7
        %v1021 = vsub.s32 0, %v1020
        %v1022 = vrot.slane %v986, %v1021
        %v1023 = vlaneseq
        %v1024 = vshrl.u32 %v1023, 7
        %v1025 = vsub.s32 4, %v1024
        %v1026 = vrot.slane %v986, %v1025
        %v1031 = vlaneseq
        %v1032 = vshrl.u32 %v1031, 7
        %v1033 = vsub.s32 0, %v1032
        %v1034 = vrot.slane %v1014, %v1033
        %v1035 = vlaneseq
        %v1036 = vshrl.u32 %v1035, 7
        %v1037 = vsub.s32 0, %v1036
        %v1038 = vrot.slane %v1018, %v1037
        %v1039 = vlaneseq
        %v1040 = vshrl.u32 %v1039, 7
        %v1041 = vsub.s32 0, %v1040
        %v1042 = vrot.slane %v1022, %v1041
        %v1043 = vlaneseq
        %v1044 = vshrl.u32 %v1043, 7
        %v1045 = vsub.s32 0, %v1044
        %v1046 = vrot.slane %v1026, %v1045
        %v1047 = vmul.f32 %v1002, %v1034
        %v1048 = vmul.f32 %v1002, %v1038
        %v1049 = vmul.f32 %v1007, %v1034
        %v1050 = vmul.f32 %v1007, %v1038
        %v1051 = vmul.f32 %v1002, %v1042
        %v1052 = vmul.f32 %v1002, %v1046
        %v1053 = vmul.f32 %v1007, %v1042
        %v1054 = vmul.f32 %v1007, %v1046
        %1055 = vset.pattern.permute.xlu0 1
        %1056 = vperm.xlu0 %1055, %v987
        %v1057 = vpop.permute.xlu0 %1056
        %1059 = vset.pattern.permute.xlu0 1
        %1060 = vperm.xlu0 %1059, %v988
        %v1061 = vpop.permute.xlu0 %1060
        %v1063 = vlaneseq
        %v1064 = vshrl.u32 %v1063, 7
        %v1065 = vsub.s32 1, %v1064
        %v1066 = vrot.slane %v985, %v1065
        %v1067 = vlaneseq
        %v1068 = vshrl.u32 %v1067, 7
        %v1069 = vsub.s32 5, %v1068
        %v1070 = vrot.slane %v985, %v1069
        %v1071 = vlaneseq
        %v1072 = vshrl.u32 %v1071, 7
        %v1073 = vsub.s32 1, %v1072
        %v1074 = vrot.slane %v986, %v1073
        %v1075 = vlaneseq
        %v1076 = vshrl.u32 %v1075, 7
        %v1077 = vsub.s32 5, %v1076
        %v1078 = vrot.slane %v986, %v1077
        %v1083 = vlaneseq
        %v1084 = vshrl.u32 %v1083, 7
        %v1085 = vsub.s32 1, %v1084
        %v1086 = vrot.slane %v1066, %v1085
        %v1087 = vlaneseq
        %v1088 = vshrl.u32 %v1087, 7
        %v1089 = vsub.s32 1, %v1088
        %v1090 = vrot.slane %v1070, %v1089
        %v1091 = vlaneseq
        %v1092 = vshrl.u32 %v1091, 7
        %v1093 = vsub.s32 1, %v1092
        %v1094 = vrot.slane %v1074, %v1093
        %v1095 = vlaneseq
        %v1096 = vshrl.u32 %v1095, 7
        %v1097 = vsub.s32 1, %v1096
        %v1098 = vrot.slane %v1078, %v1097
        %v1099 = vmul.f32 %v1057, %v1086
        %v1100 = vmul.f32 %v1057, %v1090
        %v1101 = vmul.f32 %v1061, %v1086
        %v1102 = vmul.f32 %v1061, %v1090
        %v1103 = vmul.f32 %v1057, %v1094
        %v1104 = vmul.f32 %v1057, %v1098
        %v1105 = vmul.f32 %v1061, %v1094
        %v1106 = vmul.f32 %v1061, %v1098
        %v1107 = vadd.f32 %v1047, %v1099
        %v1108 = vadd.f32 %v1048, %v1100
        %v1109 = vadd.f32 %v1049, %v1101
        %v1110 = vadd.f32 %v1050, %v1102
        %v1111 = vadd.f32 %v1051, %v1103
        %v1112 = vadd.f32 %v1052, %v1104
        %v1113 = vadd.f32 %v1053, %v1105
        %v1114 = vadd.f32 %v1054, %v1106
        %1115 = vset.pattern.permute.xlu0 2
        %1116 = vperm.xlu0 %1115, %v987
        %v1117 = vpop.permute.xlu0 %1116
        %1119 = vset.pattern.permute.xlu0 2
        %1120 = vperm.xlu0 %1119, %v988
        %v1121 = vpop.permute.xlu0 %1120
        %v1123 = vlaneseq
        %v1124 = vshrl.u32 %v1123, 7
        %v1125 = vsub.s32 2, %v1124
        %v1126 = vrot.slane %v985, %v1125
        %v1127 = vlaneseq
        %v1128 = vshrl.u32 %v1127, 7
        %v1129 = vsub.s32 6, %v1128
        %v1130 = vrot.slane %v985, %v1129
        %v1131 = vlaneseq
        %v1132 = vshrl.u32 %v1131, 7
        %v1133 = vsub.s32 2, %v1132
        %v1134 = vrot.slane %v986, %v1133
        %v1135 = vlaneseq
        %v1136 = vshrl.u32 %v1135, 7
        %v1137 = vsub.s32 6, %v1136
        %v1138 = vrot.slane %v986, %v1137
        %v1143 = vlaneseq
        %v1144 = vshrl.u32 %v1143, 7
        %v1145 = vsub.s32 2, %v1144
        %v1146 = vrot.slane %v1126, %v1145
        %v1147 = vlaneseq
        %v1148 = vshrl.u32 %v1147, 7
        %v1149 = vsub.s32 2, %v1148
        %v1150 = vrot.slane %v1130, %v1149
        %v1151 = vlaneseq
        %v1152 = vshrl.u32 %v1151, 7
        %v1153 = vsub.s32 2, %v1152
        %v1154 = vrot.slane %v1134, %v1153
        %v1155 = vlaneseq
        %v1156 = vshrl.u32 %v1155, 7
        %v1157 = vsub.s32 2, %v1156
        %v1158 = vrot.slane %v1138, %v1157
        %v1159 = vmul.f32 %v1117, %v1146
        %v1160 = vmul.f32 %v1117, %v1150
        %v1161 = vmul.f32 %v1121, %v1146
        %v1162 = vmul.f32 %v1121, %v1150
        %v1163 = vmul.f32 %v1117, %v1154
        %v1164 = vmul.f32 %v1117, %v1158
        %v1165 = vmul.f32 %v1121, %v1154
        %v1166 = vmul.f32 %v1121, %v1158
        %v1167 = vadd.f32 %v1107, %v1159
        %v1168 = vadd.f32 %v1108, %v1160
        %v1169 = vadd.f32 %v1109, %v1161
        %v1170 = vadd.f32 %v1110, %v1162
        %v1171 = vadd.f32 %v1111, %v1163
        %v1172 = vadd.f32 %v1112, %v1164
        %v1173 = vadd.f32 %v1113, %v1165
        %v1174 = vadd.f32 %v1114, %v1166
        %1175 = vset.pattern.permute.xlu0 3
        %1176 = vperm.xlu0 %1175, %v987
        %v1177 = vpop.permute.xlu0 %1176
        %1179 = vset.pattern.permute.xlu0 3
        %1180 = vperm.xlu0 %1179, %v988
        %v1181 = vpop.permute.xlu0 %1180
        %v1183 = vlaneseq
        %v1184 = vshrl.u32 %v1183, 7
        %v1185 = vsub.s32 3, %v1184
        %v1186 = vrot.slane %v985, %v1185
        %v1187 = vlaneseq
        %v1188 = vshrl.u32 %v1187, 7
        %v1189 = vsub.s32 7, %v1188
        %v1190 = vrot.slane %v985, %v1189
        %v1191 = vlaneseq
        %v1192 = vshrl.u32 %v1191, 7
        %v1193 = vsub.s32 3, %v1192
        %v1194 = vrot.slane %v986, %v1193
        %v1195 = vlaneseq
        %v1196 = vshrl.u32 %v1195, 7
        %v1197 = vsub.s32 7, %v1196
        %v1198 = vrot.slane %v986, %v1197
        %v1203 = vlaneseq
        %v1204 = vshrl.u32 %v1203, 7
        %v1205 = vsub.s32 3, %v1204
        %v1206 = vrot.slane %v1186, %v1205
        %v1207 = vlaneseq
        %v1208 = vshrl.u32 %v1207, 7
        %v1209 = vsub.s32 3, %v1208
        %v1210 = vrot.slane %v1190, %v1209
        %v1211 = vlaneseq
        %v1212 = vshrl.u32 %v1211, 7
        %v1213 = vsub.s32 3, %v1212
        %v1214 = vrot.slane %v1194, %v1213
        %v1215 = vlaneseq
        %v1216 = vshrl.u32 %v1215, 7
        %v1217 = vsub.s32 3, %v1216
        %v1218 = vrot.slane %v1198, %v1217
        %v1219 = vmul.f32 %v1177, %v1206
        %v1220 = vmul.f32 %v1177, %v1210
        %v1221 = vmul.f32 %v1181, %v1206
        %v1222 = vmul.f32 %v1181, %v1210
        %v1223 = vmul.f32 %v1177, %v1214
        %v1224 = vmul.f32 %v1177, %v1218
        %v1225 = vmul.f32 %v1181, %v1214
        %v1226 = vmul.f32 %v1181, %v1218
        %v1227 = vadd.f32 %v1167, %v1219
        %v1228 = vadd.f32 %v1168, %v1220
        %v1229 = vadd.f32 %v1169, %v1221
        %v1230 = vadd.f32 %v1170, %v1222
        %v1231 = vadd.f32 %v1171, %v1223
        %v1232 = vadd.f32 %v1172, %v1224
        %v1233 = vadd.f32 %v1173, %v1225
        %v1234 = vadd.f32 %v1174, %v1226
        %1236 = vset.pattern.permute.xlu0 0
        %1237 = vperm.xlu0 %1236, %v989
        %v1238 = vpop.permute.xlu0 %1237
        %1241 = vset.pattern.permute.xlu0 0
        %1242 = vperm.xlu0 %1241, %v990
        %v1243 = vpop.permute.xlu0 %1242
        %v1245 = vadd.f32 %v1227, %v1238
        %v1246 = vadd.f32 %v1228, %v1238
        %v1247 = vadd.f32 %v1229, %v1243
        %v1248 = vadd.f32 %v1230, %v1243
        %v1249 = vadd.f32 %v1231, %v1238
        %v1250 = vadd.f32 %v1232, %v1238
        %v1251 = vadd.f32 %v1233, %v1243
        %v1252 = vadd.f32 %v1234, %v1243
        %v1253 = vmax.f32 %v1245, 0.0
        %v1254 = vmax.f32 %v1246, 0.0
        %v1255 = vmax.f32 %v1247, 0.0
        %v1256 = vmax.f32 %v1248, 0.0
        %v1257 = vmax.f32 %v1249, 0.0
        %v1258 = vmax.f32 %v1250, 0.0
        %v1259 = vmax.f32 %v1251, 0.0
        %v1260 = vmax.f32 %v1252, 0.0
        %1262 = vset.pattern.permute.xlu0 0
        %1263 = vperm.xlu0 %1262, %v991
        %v1264 = vpop.permute.xlu0 %1263
        %1267 = vset.pattern.permute.xlu0 0
        %1268 = vperm.xlu0 %1267, %v992
        %v1269 = vpop.permute.xlu0 %1268
        %1272 = vset.pattern.permute.xlu0 0
        %1273 = vperm.xlu0 %1272, %v993
        %v1274 = vpop.permute.xlu0 %1273
        %1277 = vset.pattern.permute.xlu0 0
        %1278 = vperm.xlu0 %1277, %v994
        %v1279 = vpop.permute.xlu0 %1278
        %v1281 = vlaneseq
        %v1282 = vshrl.u32 %v1281, 7
        %v1283 = vsub.s32 0, %v1282
        %v1284 = vrot.slane %v1253, %v1283
        %v1285 = vlaneseq
        %v1286 = vshrl.u32 %v1285, 7
        %v1287 = vsub.s32 0, %v1286
        %v1288 = vrot.slane %v1254, %v1287
        %v1289 = vlaneseq
        %v1290 = vshrl.u32 %v1289, 7
        %v1291 = vsub.s32 0, %v1290
        %v1292 = vrot.slane %v1257, %v1291
        %v1293 = vlaneseq
        %v1294 = vshrl.u32 %v1293, 7
        %v1295 = vsub.s32 0, %v1294
        %v1296 = vrot.slane %v1258, %v1295
        %v1297 = vmul.f32 %v1264, %v1284
        %v1298 = vmul.f32 %v1264, %v1288
        %v1299 = vmul.f32 %v1269, %v1284
        %v1300 = vmul.f32 %v1269, %v1288
        %v1301 = vmul.f32 %v1274, %v1284
        %v1302 = vmul.f32 %v1274, %v1288
        %v1303 = vmul.f32 %v1279, %v1284
        %v1304 = vmul.f32 %v1279, %v1288
        %v1305 = vmul.f32 %v1264, %v1292
        %v1306 = vmul.f32 %v1264, %v1296
        %v1307 = vmul.f32 %v1269, %v1292
        %v1308 = vmul.f32 %v1269, %v1296
        %v1309 = vmul.f32 %v1274, %v1292
        %v1310 = vmul.f32 %v1274, %v1296
        %v1311 = vmul.f32 %v1279, %v1292
        %v1312 = vmul.f32 %v1279, %v1296
        %1313 = vset.pattern.permute.xlu0 1
        %1314 = vperm.xlu0 %1313, %v991
        %v1315 = vpop.permute.xlu0 %1314
        %1317 = vset.pattern.permute.xlu0 1
        %1318 = vperm.xlu0 %1317, %v992
        %v1319 = vpop.permute.xlu0 %1318
        %1321 = vset.pattern.permute.xlu0 1
        %1322 = vperm.xlu0 %1321, %v993
        %v1323 = vpop.permute.xlu0 %1322
        %1325 = vset.pattern.permute.xlu0 1
        %1326 = vperm.xlu0 %1325, %v994
        %v1327 = vpop.permute.xlu0 %1326
        %v1329 = vlaneseq
        %v1330 = vshrl.u32 %v1329, 7
        %v1331 = vsub.s32 1, %v1330
        %v1332 = vrot.slane %v1253, %v1331
        %v1333 = vlaneseq
        %v1334 = vshrl.u32 %v1333, 7
        %v1335 = vsub.s32 1, %v1334
        %v1336 = vrot.slane %v1254, %v1335
        %v1337 = vlaneseq
        %v1338 = vshrl.u32 %v1337, 7
        %v1339 = vsub.s32 1, %v1338
        %v1340 = vrot.slane %v1257, %v1339
        %v1341 = vlaneseq
        %v1342 = vshrl.u32 %v1341, 7
        %v1343 = vsub.s32 1, %v1342
        %v1344 = vrot.slane %v1258, %v1343
        %v1345 = vmul.f32 %v1315, %v1332
        %v1346 = vmul.f32 %v1315, %v1336
        %v1347 = vmul.f32 %v1319, %v1332
        %v1348 = vmul.f32 %v1319, %v1336
        %v1349 = vmul.f32 %v1323, %v1332
        %v1350 = vmul.f32 %v1323, %v1336
        %v1351 = vmul.f32 %v1327, %v1332
        %v1352 = vmul.f32 %v1327, %v1336
        %v1353 = vmul.f32 %v1315, %v1340
        %v1354 = vmul.f32 %v1315, %v1344
        %v1355 = vmul.f32 %v1319, %v1340
        %v1356 = vmul.f32 %v1319, %v1344
        %v1357 = vmul.f32 %v1323, %v1340
        %v1358 = vmul.f32 %v1323, %v1344
        %v1359 = vmul.f32 %v1327, %v1340
        %v1360 = vmul.f32 %v1327, %v1344
        %v1361 = vadd.f32 %v1297, %v1345
        %v1362 = vadd.f32 %v1298, %v1346
        %v1363 = vadd.f32 %v1299, %v1347
        %v1364 = vadd.f32 %v1300, %v1348
        %v1365 = vadd.f32 %v1301, %v1349
        %v1366 = vadd.f32 %v1302, %v1350
        %v1367 = vadd.f32 %v1303, %v1351
        %v1368 = vadd.f32 %v1304, %v1352
        %v1369 = vadd.f32 %v1305, %v1353
        %v1370 = vadd.f32 %v1306, %v1354
        %v1371 = vadd.f32 %v1307, %v1355
        %v1372 = vadd.f32 %v1308, %v1356
        %v1373 = vadd.f32 %v1309, %v1357
        %v1374 = vadd.f32 %v1310, %v1358
        %v1375 = vadd.f32 %v1311, %v1359
        %v1376 = vadd.f32 %v1312, %v1360
        %1377 = vset.pattern.permute.xlu0 2
        %1378 = vperm.xlu0 %1377, %v991
        %v1379 = vpop.permute.xlu0 %1378
        %1381 = vset.pattern.permute.xlu0 2
        %1382 = vperm.xlu0 %1381, %v992
        %v1383 = vpop.permute.xlu0 %1382
        %1385 = vset.pattern.permute.xlu0 2
        %1386 = vperm.xlu0 %1385, %v993
        %v1387 = vpop.permute.xlu0 %1386
        %1389 = vset.pattern.permute.xlu0 2
        %1390 = vperm.xlu0 %1389, %v994
        %v1391 = vpop.permute.xlu0 %1390
        %v1393 = vlaneseq
        %v1394 = vshrl.u32 %v1393, 7
        %v1395 = vsub.s32 2, %v1394
        %v1396 = vrot.slane %v1253, %v1395
        %v1397 = vlaneseq
        %v1398 = vshrl.u32 %v1397, 7
        %v1399 = vsub.s32 2, %v1398
        %v1400 = vrot.slane %v1254, %v1399
        %v1401 = vlaneseq
        %v1402 = vshrl.u32 %v1401, 7
        %v1403 = vsub.s32 2, %v1402
        %v1404 = vrot.slane %v1257, %v1403
        %v1405 = vlaneseq
        %v1406 = vshrl.u32 %v1405, 7
        %v1407 = vsub.s32 2, %v1406
        %v1408 = vrot.slane %v1258, %v1407
        %v1409 = vmul.f32 %v1379, %v1396
        %v1410 = vmul.f32 %v1379, %v1400
        %v1411 = vmul.f32 %v1383, %v1396
        %v1412 = vmul.f32 %v1383, %v1400
        %v1413 = vmul.f32 %v1387, %v1396
        %v1414 = vmul.f32 %v1387, %v1400
        %v1415 = vmul.f32 %v1391, %v1396
        %v1416 = vmul.f32 %v1391, %v1400
        %v1417 = vmul.f32 %v1379, %v1404
        %v1418 = vmul.f32 %v1379, %v1408
        %v1419 = vmul.f32 %v1383, %v1404
        %v1420 = vmul.f32 %v1383, %v1408
        %v1421 = vmul.f32 %v1387, %v1404
        %v1422 = vmul.f32 %v1387, %v1408
        %v1423 = vmul.f32 %v1391, %v1404
        %v1424 = vmul.f32 %v1391, %v1408
        %v1425 = vadd.f32 %v1361, %v1409
        %v1426 = vadd.f32 %v1362, %v1410
        %v1427 = vadd.f32 %v1363, %v1411
        %v1428 = vadd.f32 %v1364, %v1412
        %v1429 = vadd.f32 %v1365, %v1413
        %v1430 = vadd.f32 %v1366, %v1414
        %v1431 = vadd.f32 %v1367, %v1415
        %v1432 = vadd.f32 %v1368, %v1416
        %v1433 = vadd.f32 %v1369, %v1417
        %v1434 = vadd.f32 %v1370, %v1418
        %v1435 = vadd.f32 %v1371, %v1419
        %v1436 = vadd.f32 %v1372, %v1420
        %v1437 = vadd.f32 %v1373, %v1421
        %v1438 = vadd.f32 %v1374, %v1422
        %v1439 = vadd.f32 %v1375, %v1423
        %v1440 = vadd.f32 %v1376, %v1424
        %1441 = vset.pattern.permute.xlu0 3
        %1442 = vperm.xlu0 %1441, %v991
        %v1443 = vpop.permute.xlu0 %1442
        %1445 = vset.pattern.permute.xlu0 3
        %1446 = vperm.xlu0 %1445, %v992
        %v1447 = vpop.permute.xlu0 %1446
        %1449 = vset.pattern.permute.xlu0 3
        %1450 = vperm.xlu0 %1449, %v993
        %v1451 = vpop.permute.xlu0 %1450
        %1453 = vset.pattern.permute.xlu0 3
        %1454 = vperm.xlu0 %1453, %v994
        %v1455 = vpop.permute.xlu0 %1454
        %v1457 = vlaneseq
        %v1458 = vshrl.u32 %v1457, 7
        %v1459 = vsub.s32 3, %v1458
        %v1460 = vrot.slane %v1253, %v1459
        %v1461 = vlaneseq
        %v1462 = vshrl.u32 %v1461, 7
        %v1463 = vsub.s32 3, %v1462
        %v1464 = vrot.slane %v1254, %v1463
        %v1465 = vlaneseq
        %v1466 = vshrl.u32 %v1465, 7
        %v1467 = vsub.s32 3, %v1466
        %v1468 = vrot.slane %v1257, %v1467
        %v1469 = vlaneseq
        %v1470 = vshrl.u32 %v1469, 7
        %v1471 = vsub.s32 3, %v1470
        %v1472 = vrot.slane %v1258, %v1471
        %v1473 = vmul.f32 %v1443, %v1460
        %v1474 = vmul.f32 %v1443, %v1464
        %v1475 = vmul.f32 %v1447, %v1460
        %v1476 = vmul.f32 %v1447, %v1464
        %v1477 = vmul.f32 %v1451, %v1460
        %v1478 = vmul.f32 %v1451, %v1464
        %v1479 = vmul.f32 %v1455, %v1460
        %v1480 = vmul.f32 %v1455, %v1464
        %v1481 = vmul.f32 %v1443, %v1468
        %v1482 = vmul.f32 %v1443, %v1472
        %v1483 = vmul.f32 %v1447, %v1468
        %v1484 = vmul.f32 %v1447, %v1472
        %v1485 = vmul.f32 %v1451, %v1468
        %v1486 = vmul.f32 %v1451, %v1472
        %v1487 = vmul.f32 %v1455, %v1468
        %v1488 = vmul.f32 %v1455, %v1472
        %v1489 = vadd.f32 %v1425, %v1473
        %v1490 = vadd.f32 %v1426, %v1474
        %v1491 = vadd.f32 %v1427, %v1475
        %v1492 = vadd.f32 %v1428, %v1476
        %v1493 = vadd.f32 %v1429, %v1477
        %v1494 = vadd.f32 %v1430, %v1478
        %v1495 = vadd.f32 %v1431, %v1479
        %v1496 = vadd.f32 %v1432, %v1480
        %v1497 = vadd.f32 %v1433, %v1481
        %v1498 = vadd.f32 %v1434, %v1482
        %v1499 = vadd.f32 %v1435, %v1483
        %v1500 = vadd.f32 %v1436, %v1484
        %v1501 = vadd.f32 %v1437, %v1485
        %v1502 = vadd.f32 %v1438, %v1486
        %v1503 = vadd.f32 %v1439, %v1487
        %v1504 = vadd.f32 %v1440, %v1488
        %1505 = vset.pattern.permute.xlu0 4
        %1506 = vperm.xlu0 %1505, %v991
        %v1507 = vpop.permute.xlu0 %1506
        %1509 = vset.pattern.permute.xlu0 4
        %1510 = vperm.xlu0 %1509, %v992
        %v1511 = vpop.permute.xlu0 %1510
        %1513 = vset.pattern.permute.xlu0 4
        %1514 = vperm.xlu0 %1513, %v993
        %v1515 = vpop.permute.xlu0 %1514
        %1517 = vset.pattern.permute.xlu0 4
        %1518 = vperm.xlu0 %1517, %v994
        %v1519 = vpop.permute.xlu0 %1518
        %v1521 = vlaneseq
        %v1522 = vshrl.u32 %v1521, 7
        %v1523 = vsub.s32 4, %v1522
        %v1524 = vrot.slane %v1253, %v1523
        %v1525 = vlaneseq
        %v1526 = vshrl.u32 %v1525, 7
        %v1527 = vsub.s32 4, %v1526
        %v1528 = vrot.slane %v1254, %v1527
        %v1529 = vlaneseq
        %v1530 = vshrl.u32 %v1529, 7
        %v1531 = vsub.s32 4, %v1530
        %v1532 = vrot.slane %v1257, %v1531
        %v1533 = vlaneseq
        %v1534 = vshrl.u32 %v1533, 7
        %v1535 = vsub.s32 4, %v1534
        %v1536 = vrot.slane %v1258, %v1535
        %v1537 = vmul.f32 %v1507, %v1524
        %v1538 = vmul.f32 %v1507, %v1528
        %v1539 = vmul.f32 %v1511, %v1524
        %v1540 = vmul.f32 %v1511, %v1528
        %v1541 = vmul.f32 %v1515, %v1524
        %v1542 = vmul.f32 %v1515, %v1528
        %v1543 = vmul.f32 %v1519, %v1524
        %v1544 = vmul.f32 %v1519, %v1528
        %v1545 = vmul.f32 %v1507, %v1532
        %v1546 = vmul.f32 %v1507, %v1536
        %v1547 = vmul.f32 %v1511, %v1532
        %v1548 = vmul.f32 %v1511, %v1536
        %v1549 = vmul.f32 %v1515, %v1532
        %v1550 = vmul.f32 %v1515, %v1536
        %v1551 = vmul.f32 %v1519, %v1532
        %v1552 = vmul.f32 %v1519, %v1536
        %v1553 = vadd.f32 %v1489, %v1537
        %v1554 = vadd.f32 %v1490, %v1538
        %v1555 = vadd.f32 %v1491, %v1539
        %v1556 = vadd.f32 %v1492, %v1540
        %v1557 = vadd.f32 %v1493, %v1541
        %v1558 = vadd.f32 %v1494, %v1542
        %v1559 = vadd.f32 %v1495, %v1543
        %v1560 = vadd.f32 %v1496, %v1544
        %v1561 = vadd.f32 %v1497, %v1545
        %v1562 = vadd.f32 %v1498, %v1546
        %v1563 = vadd.f32 %v1499, %v1547
        %v1564 = vadd.f32 %v1500, %v1548
        %v1565 = vadd.f32 %v1501, %v1549
        %v1566 = vadd.f32 %v1502, %v1550
        %v1567 = vadd.f32 %v1503, %v1551
        %v1568 = vadd.f32 %v1504, %v1552
        %1569 = vset.pattern.permute.xlu0 5
        %1570 = vperm.xlu0 %1569, %v991
        %v1571 = vpop.permute.xlu0 %1570
        %1573 = vset.pattern.permute.xlu0 5
        %1574 = vperm.xlu0 %1573, %v992
        %v1575 = vpop.permute.xlu0 %1574
        %1577 = vset.pattern.permute.xlu0 5
        %1578 = vperm.xlu0 %1577, %v993
        %v1579 = vpop.permute.xlu0 %1578
        %1581 = vset.pattern.permute.xlu0 5
        %1582 = vperm.xlu0 %1581, %v994
        %v1583 = vpop.permute.xlu0 %1582
        %v1585 = vlaneseq
        %v1586 = vshrl.u32 %v1585, 7
        %v1587 = vsub.s32 5, %v1586
        %v1588 = vrot.slane %v1253, %v1587
        %v1589 = vlaneseq
        %v1590 = vshrl.u32 %v1589, 7
        %v1591 = vsub.s32 5, %v1590
        %v1592 = vrot.slane %v1254, %v1591
        %v1593 = vlaneseq
        %v1594 = vshrl.u32 %v1593, 7
        %v1595 = vsub.s32 5, %v1594
        %v1596 = vrot.slane %v1257, %v1595
        %v1597 = vlaneseq
        %v1598 = vshrl.u32 %v1597, 7
        %v1599 = vsub.s32 5, %v1598
        %v1600 = vrot.slane %v1258, %v1599
        %v1601 = vmul.f32 %v1571, %v1588
        %v1602 = vmul.f32 %v1571, %v1592
        %v1603 = vmul.f32 %v1575, %v1588
        %v1604 = vmul.f32 %v1575, %v1592
        %v1605 = vmul.f32 %v1579, %v1588
        %v1606 = vmul.f32 %v1579, %v1592
        %v1607 = vmul.f32 %v1583, %v1588
        %v1608 = vmul.f32 %v1583, %v1592
        %v1609 = vmul.f32 %v1571, %v1596
        %v1610 = vmul.f32 %v1571, %v1600
        %v1611 = vmul.f32 %v1575, %v1596
        %v1612 = vmul.f32 %v1575, %v1600
        %v1613 = vmul.f32 %v1579, %v1596
        %v1614 = vmul.f32 %v1579, %v1600
        %v1615 = vmul.f32 %v1583, %v1596
        %v1616 = vmul.f32 %v1583, %v1600
        %v1617 = vadd.f32 %v1553, %v1601
        %v1618 = vadd.f32 %v1554, %v1602
        %v1619 = vadd.f32 %v1555, %v1603
        %v1620 = vadd.f32 %v1556, %v1604
        %v1621 = vadd.f32 %v1557, %v1605
        %v1622 = vadd.f32 %v1558, %v1606
        %v1623 = vadd.f32 %v1559, %v1607
        %v1624 = vadd.f32 %v1560, %v1608
        %v1625 = vadd.f32 %v1561, %v1609
        %v1626 = vadd.f32 %v1562, %v1610
        %v1627 = vadd.f32 %v1563, %v1611
        %v1628 = vadd.f32 %v1564, %v1612
        %v1629 = vadd.f32 %v1565, %v1613
        %v1630 = vadd.f32 %v1566, %v1614
        %v1631 = vadd.f32 %v1567, %v1615
        %v1632 = vadd.f32 %v1568, %v1616
        %1633 = vset.pattern.permute.xlu0 6
        %1634 = vperm.xlu0 %1633, %v991
        %v1635 = vpop.permute.xlu0 %1634
        %1637 = vset.pattern.permute.xlu0 6
        %1638 = vperm.xlu0 %1637, %v992
        %v1639 = vpop.permute.xlu0 %1638
        %1641 = vset.pattern.permute.xlu0 6
        %1642 = vperm.xlu0 %1641, %v993
        %v1643 = vpop.permute.xlu0 %1642
        %1645 = vset.pattern.permute.xlu0 6
        %1646 = vperm.xlu0 %1645, %v994
        %v1647 = vpop.permute.xlu0 %1646
        %v1649 = vlaneseq
        %v1650 = vshrl.u32 %v1649, 7
        %v1651 = vsub.s32 6, %v1650
        %v1652 = vrot.slane %v1253, %v1651
        %v1653 = vlaneseq
        %v1654 = vshrl.u32 %v1653, 7
        %v1655 = vsub.s32 6, %v1654
        %v1656 = vrot.slane %v1254, %v1655
        %v1657 = vlaneseq
        %v1658 = vshrl.u32 %v1657, 7
        %v1659 = vsub.s32 6, %v1658
        %v1660 = vrot.slane %v1257, %v1659
        %v1661 = vlaneseq
        %v1662 = vshrl.u32 %v1661, 7
        %v1663 = vsub.s32 6, %v1662
        %v1664 = vrot.slane %v1258, %v1663
        %v1665 = vmul.f32 %v1635, %v1652
        %v1666 = vmul.f32 %v1635, %v1656
        %v1667 = vmul.f32 %v1639, %v1652
        %v1668 = vmul.f32 %v1639, %v1656
        %v1669 = vmul.f32 %v1643, %v1652
        %v1670 = vmul.f32 %v1643, %v1656
        %v1671 = vmul.f32 %v1647, %v1652
        %v1672 = vmul.f32 %v1647, %v1656
        %v1673 = vmul.f32 %v1635, %v1660
        %v1674 = vmul.f32 %v1635, %v1664
        %v1675 = vmul.f32 %v1639, %v1660
        %v1676 = vmul.f32 %v1639, %v1664
        %v1677 = vmul.f32 %v1643, %v1660
        %v1678 = vmul.f32 %v1643, %v1664
        %v1679 = vmul.f32 %v1647, %v1660
        %v1680 = vmul.f32 %v1647, %v1664
        %v1681 = vadd.f32 %v1617, %v1665
        %v1682 = vadd.f32 %v1618, %v1666
        %v1683 = vadd.f32 %v1619, %v1667
        %v1684 = vadd.f32 %v1620, %v1668
        %v1685 = vadd.f32 %v1621, %v1669
        %v1686 = vadd.f32 %v1622, %v1670
        %v1687 = vadd.f32 %v1623, %v1671
        %v1688 = vadd.f32 %v1624, %v1672
        %v1689 = vadd.f32 %v1625, %v1673
        %v1690 = vadd.f32 %v1626, %v1674
        %v1691 = vadd.f32 %v1627, %v1675
        %v1692 = vadd.f32 %v1628, %v1676
        %v1693 = vadd.f32 %v1629, %v1677
        %v1694 = vadd.f32 %v1630, %v1678
        %v1695 = vadd.f32 %v1631, %v1679
        %v1696 = vadd.f32 %v1632, %v1680
        %1697 = vset.pattern.permute.xlu0 7
        %1698 = vperm.xlu0 %1697, %v991
        %v1699 = vpop.permute.xlu0 %1698
        %1701 = vset.pattern.permute.xlu0 7
        %1702 = vperm.xlu0 %1701, %v992
        %v1703 = vpop.permute.xlu0 %1702
        %1705 = vset.pattern.permute.xlu0 7
        %1706 = vperm.xlu0 %1705, %v993
        %v1707 = vpop.permute.xlu0 %1706
        %1709 = vset.pattern.permute.xlu0 7
        %1710 = vperm.xlu0 %1709, %v994
        %v1711 = vpop.permute.xlu0 %1710
        %v1713 = vlaneseq
        %v1714 = vshrl.u32 %v1713, 7
        %v1715 = vsub.s32 7, %v1714
        %v1716 = vrot.slane %v1253, %v1715
        %v1717 = vlaneseq
        %v1718 = vshrl.u32 %v1717, 7
        %v1719 = vsub.s32 7, %v1718
        %v1720 = vrot.slane %v1254, %v1719
        %v1721 = vlaneseq
        %v1722 = vshrl.u32 %v1721, 7
        %v1723 = vsub.s32 7, %v1722
        %v1724 = vrot.slane %v1257, %v1723
        %v1725 = vlaneseq
        %v1726 = vshrl.u32 %v1725, 7
        %v1727 = vsub.s32 7, %v1726
        %v1728 = vrot.slane %v1258, %v1727
        %v1729 = vmul.f32 %v1699, %v1716
        %v1730 = vmul.f32 %v1699, %v1720
        %v1731 = vmul.f32 %v1703, %v1716
        %v1732 = vmul.f32 %v1703, %v1720
        %v1733 = vmul.f32 %v1707, %v1716
        %v1734 = vmul.f32 %v1707, %v1720
        %v1735 = vmul.f32 %v1711, %v1716
        %v1736 = vmul.f32 %v1711, %v1720
        %v1737 = vmul.f32 %v1699, %v1724
        %v1738 = vmul.f32 %v1699, %v1728
        %v1739 = vmul.f32 %v1703, %v1724
        %v1740 = vmul.f32 %v1703, %v1728
        %v1741 = vmul.f32 %v1707, %v1724
        %v1742 = vmul.f32 %v1707, %v1728
        %v1743 = vmul.f32 %v1711, %v1724
        %v1744 = vmul.f32 %v1711, %v1728
        %v1745 = vadd.f32 %v1681, %v1729
        %v1746 = vadd.f32 %v1682, %v1730
        %v1747 = vadd.f32 %v1683, %v1731
        %v1748 = vadd.f32 %v1684, %v1732
        %v1749 = vadd.f32 %v1685, %v1733
        %v1750 = vadd.f32 %v1686, %v1734
        %v1751 = vadd.f32 %v1687, %v1735
        %v1752 = vadd.f32 %v1688, %v1736
        %v1753 = vadd.f32 %v1689, %v1737
        %v1754 = vadd.f32 %v1690, %v1738
        %v1755 = vadd.f32 %v1691, %v1739
        %v1756 = vadd.f32 %v1692, %v1740
        %v1757 = vadd.f32 %v1693, %v1741
        %v1758 = vadd.f32 %v1694, %v1742
        %v1759 = vadd.f32 %v1695, %v1743
        %v1760 = vadd.f32 %v1696, %v1744
        %1761 = vset.pattern.permute.xlu0 8
        %1762 = vperm.xlu0 %1761, %v991
        %v1763 = vpop.permute.xlu0 %1762
        %1765 = vset.pattern.permute.xlu0 8
        %1766 = vperm.xlu0 %1765, %v992
        %v1767 = vpop.permute.xlu0 %1766
        %1769 = vset.pattern.permute.xlu0 8
        %1770 = vperm.xlu0 %1769, %v993
        %v1771 = vpop.permute.xlu0 %1770
        %1773 = vset.pattern.permute.xlu0 8
        %1774 = vperm.xlu0 %1773, %v994
        %v1775 = vpop.permute.xlu0 %1774
        %v1777 = vlaneseq
        %v1778 = vshrl.u32 %v1777, 7
        %v1779 = vsub.s32 0, %v1778
        %v1780 = vrot.slane %v1255, %v1779
        %v1781 = vlaneseq
        %v1782 = vshrl.u32 %v1781, 7
        %v1783 = vsub.s32 0, %v1782
        %v1784 = vrot.slane %v1256, %v1783
        %v1785 = vlaneseq
        %v1786 = vshrl.u32 %v1785, 7
        %v1787 = vsub.s32 0, %v1786
        %v1788 = vrot.slane %v1259, %v1787
        %v1789 = vlaneseq
        %v1790 = vshrl.u32 %v1789, 7
        %v1791 = vsub.s32 0, %v1790
        %v1792 = vrot.slane %v1260, %v1791
        %v1793 = vmul.f32 %v1763, %v1780
        %v1794 = vmul.f32 %v1763, %v1784
        %v1795 = vmul.f32 %v1767, %v1780
        %v1796 = vmul.f32 %v1767, %v1784
        %v1797 = vmul.f32 %v1771, %v1780
        %v1798 = vmul.f32 %v1771, %v1784
        %v1799 = vmul.f32 %v1775, %v1780
        %v1800 = vmul.f32 %v1775, %v1784
        %v1801 = vmul.f32 %v1763, %v1788
        %v1802 = vmul.f32 %v1763, %v1792
        %v1803 = vmul.f32 %v1767, %v1788
        %v1804 = vmul.f32 %v1767, %v1792
        %v1805 = vmul.f32 %v1771, %v1788
        %v1806 = vmul.f32 %v1771, %v1792
        %v1807 = vmul.f32 %v1775, %v1788
        %v1808 = vmul.f32 %v1775, %v1792
        %v1809 = vadd.f32 %v1745, %v1793
        %v1810 = vadd.f32 %v1746, %v1794
        %v1811 = vadd.f32 %v1747, %v1795
        %v1812 = vadd.f32 %v1748, %v1796
        %v1813 = vadd.f32 %v1749, %v1797
        %v1814 = vadd.f32 %v1750, %v1798
        %v1815 = vadd.f32 %v1751, %v1799
        %v1816 = vadd.f32 %v1752, %v1800
        %v1817 = vadd.f32 %v1753, %v1801
        %v1818 = vadd.f32 %v1754, %v1802
        %v1819 = vadd.f32 %v1755, %v1803
        %v1820 = vadd.f32 %v1756, %v1804
        %v1821 = vadd.f32 %v1757, %v1805
        %v1822 = vadd.f32 %v1758, %v1806
        %v1823 = vadd.f32 %v1759, %v1807
        %v1824 = vadd.f32 %v1760, %v1808
        %1825 = vset.pattern.permute.xlu0 9
        %1826 = vperm.xlu0 %1825, %v991
        %v1827 = vpop.permute.xlu0 %1826
        %1829 = vset.pattern.permute.xlu0 9
        %1830 = vperm.xlu0 %1829, %v992
        %v1831 = vpop.permute.xlu0 %1830
        %1833 = vset.pattern.permute.xlu0 9
        %1834 = vperm.xlu0 %1833, %v993
        %v1835 = vpop.permute.xlu0 %1834
        %1837 = vset.pattern.permute.xlu0 9
        %1838 = vperm.xlu0 %1837, %v994
        %v1839 = vpop.permute.xlu0 %1838
        %v1841 = vlaneseq
        %v1842 = vshrl.u32 %v1841, 7
        %v1843 = vsub.s32 1, %v1842
        %v1844 = vrot.slane %v1255, %v1843
        %v1845 = vlaneseq
        %v1846 = vshrl.u32 %v1845, 7
        %v1847 = vsub.s32 1, %v1846
        %v1848 = vrot.slane %v1256, %v1847
        %v1849 = vlaneseq
        %v1850 = vshrl.u32 %v1849, 7
        %v1851 = vsub.s32 1, %v1850
        %v1852 = vrot.slane %v1259, %v1851
        %v1853 = vlaneseq
        %v1854 = vshrl.u32 %v1853, 7
        %v1855 = vsub.s32 1, %v1854
        %v1856 = vrot.slane %v1260, %v1855
        %v1857 = vmul.f32 %v1827, %v1844
        %v1858 = vmul.f32 %v1827, %v1848
        %v1859 = vmul.f32 %v1831, %v1844
        %v1860 = vmul.f32 %v1831, %v1848
        %v1861 = vmul.f32 %v1835, %v1844
        %v1862 = vmul.f32 %v1835, %v1848
        %v1863 = vmul.f32 %v1839, %v1844
        %v1864 = vmul.f32 %v1839, %v1848
        %v1865 = vmul.f32 %v1827, %v1852
        %v1866 = vmul.f32 %v1827, %v1856
        %v1867 = vmul.f32 %v1831, %v1852
        %v1868 = vmul.f32 %v1831, %v1856
        %v1869 = vmul.f32 %v1835, %v1852
        %v1870 = vmul.f32 %v1835, %v1856
        %v1871 = vmul.f32 %v1839, %v1852
        %v1872 = vmul.f32 %v1839, %v1856
        %v1873 = vadd.f32 %v1809, %v1857
        %v1874 = vadd.f32 %v1810, %v1858
        %v1875 = vadd.f32 %v1811, %v1859
        %v1876 = vadd.f32 %v1812, %v1860
        %v1877 = vadd.f32 %v1813, %v1861
        %v1878 = vadd.f32 %v1814, %v1862
        %v1879 = vadd.f32 %v1815, %v1863
        %v1880 = vadd.f32 %v1816, %v1864
        %v1881 = vadd.f32 %v1817, %v1865
        %v1882 = vadd.f32 %v1818, %v1866
        %v1883 = vadd.f32 %v1819, %v1867
        %v1884 = vadd.f32 %v1820, %v1868
        %v1885 = vadd.f32 %v1821, %v1869
        %v1886 = vadd.f32 %v1822, %v1870
        %v1887 = vadd.f32 %v1823, %v1871
        %v1888 = vadd.f32 %v1824, %v1872
        %1889 = vset.pattern.permute.xlu0 10
        %1890 = vperm.xlu0 %1889, %v991
        %v1891 = vpop.permute.xlu0 %1890
        %1893 = vset.pattern.permute.xlu0 10
        %1894 = vperm.xlu0 %1893, %v992
        %v1895 = vpop.permute.xlu0 %1894
        %1897 = vset.pattern.permute.xlu0 10
        %1898 = vperm.xlu0 %1897, %v993
        %v1899 = vpop.permute.xlu0 %1898
        %1901 = vset.pattern.permute.xlu0 10
        %1902 = vperm.xlu0 %1901, %v994
        %v1903 = vpop.permute.xlu0 %1902
        %v1905 = vlaneseq
        %v1906 = vshrl.u32 %v1905, 7
        %v1907 = vsub.s32 2, %v1906
        %v1908 = vrot.slane %v1255, %v1907
        %v1909 = vlaneseq
        %v1910 = vshrl.u32 %v1909, 7
        %v1911 = vsub.s32 2, %v1910
        %v1912 = vrot.slane %v1256, %v1911
        %v1913 = vlaneseq
        %v1914 = vshrl.u32 %v1913, 7
        %v1915 = vsub.s32 2, %v1914
        %v1916 = vrot.slane %v1259, %v1915
        %v1917 = vlaneseq
        %v1918 = vshrl.u32 %v1917, 7
        %v1919 = vsub.s32 2, %v1918
        %v1920 = vrot.slane %v1260, %v1919
        %v1921 = vmul.f32 %v1891, %v1908
        %v1922 = vmul.f32 %v1891, %v1912
        %v1923 = vmul.f32 %v1895, %v1908
        %v1924 = vmul.f32 %v1895, %v1912
        %v1925 = vmul.f32 %v1899, %v1908
        %v1926 = vmul.f32 %v1899, %v1912
        %v1927 = vmul.f32 %v1903, %v1908
        %v1928 = vmul.f32 %v1903, %v1912
        %v1929 = vmul.f32 %v1891, %v1916
        %v1930 = vmul.f32 %v1891, %v1920
        %v1931 = vmul.f32 %v1895, %v1916
        %v1932 = vmul.f32 %v1895, %v1920
        %v1933 = vmul.f32 %v1899, %v1916
        %v1934 = vmul.f32 %v1899, %v1920
        %v1935 = vmul.f32 %v1903, %v1916
        %v1936 = vmul.f32 %v1903, %v1920
        %v1937 = vadd.f32 %v1873, %v1921
        %v1938 = vadd.f32 %v1874, %v1922
        %v1939 = vadd.f32 %v1875, %v1923
        %v1940 = vadd.f32 %v1876, %v1924
        %v1941 = vadd.f32 %v1877, %v1925
        %v1942 = vadd.f32 %v1878, %v1926
        %v1943 = vadd.f32 %v1879, %v1927
        %v1944 = vadd.f32 %v1880, %v1928
        %v1945 = vadd.f32 %v1881, %v1929
        %v1946 = vadd.f32 %v1882, %v1930
        %v1947 = vadd.f32 %v1883, %v1931
        %v1948 = vadd.f32 %v1884, %v1932
        %v1949 = vadd.f32 %v1885, %v1933
        %v1950 = vadd.f32 %v1886, %v1934
        %v1951 = vadd.f32 %v1887, %v1935
        %v1952 = vadd.f32 %v1888, %v1936
        %1953 = vset.pattern.permute.xlu0 11
        %1954 = vperm.xlu0 %1953, %v991
        %v1955 = vpop.permute.xlu0 %1954
        %1957 = vset.pattern.permute.xlu0 11
        %1958 = vperm.xlu0 %1957, %v992
        %v1959 = vpop.permute.xlu0 %1958
        %1961 = vset.pattern.permute.xlu0 11
        %1962 = vperm.xlu0 %1961, %v993
        %v1963 = vpop.permute.xlu0 %1962
        %1965 = vset.pattern.permute.xlu0 11
        %1966 = vperm.xlu0 %1965, %v994
        %v1967 = vpop.permute.xlu0 %1966
        %v1969 = vlaneseq
        %v1970 = vshrl.u32 %v1969, 7
        %v1971 = vsub.s32 3, %v1970
        %v1972 = vrot.slane %v1255, %v1971
        %v1973 = vlaneseq
        %v1974 = vshrl.u32 %v1973, 7
        %v1975 = vsub.s32 3, %v1974
        %v1976 = vrot.slane %v1256, %v1975
        %v1977 = vlaneseq
        %v1978 = vshrl.u32 %v1977, 7
        %v1979 = vsub.s32 3, %v1978
        %v1980 = vrot.slane %v1259, %v1979
        %v1981 = vlaneseq
        %v1982 = vshrl.u32 %v1981, 7
        %v1983 = vsub.s32 3, %v1982
        %v1984 = vrot.slane %v1260, %v1983
        %v1985 = vmul.f32 %v1955, %v1972
        %v1986 = vmul.f32 %v1955, %v1976
        %v1987 = vmul.f32 %v1959, %v1972
        %v1988 = vmul.f32 %v1959, %v1976
        %v1989 = vmul.f32 %v1963, %v1972
        %v1990 = vmul.f32 %v1963, %v1976
        %v1991 = vmul.f32 %v1967, %v1972
        %v1992 = vmul.f32 %v1967, %v1976
        %v1993 = vmul.f32 %v1955, %v1980
        %v1994 = vmul.f32 %v1955, %v1984
        %v1995 = vmul.f32 %v1959, %v1980
        %v1996 = vmul.f32 %v1959, %v1984
        %v1997 = vmul.f32 %v1963, %v1980
        %v1998 = vmul.f32 %v1963, %v1984
        %v1999 = vmul.f32 %v1967, %v1980
        %v2000 = vmul.f32 %v1967, %v1984
        %v2001 = vadd.f32 %v1937, %v1985
        %v2002 = vadd.f32 %v1938, %v1986
        %v2003 = vadd.f32 %v1939, %v1987
        %v2004 = vadd.f32 %v1940, %v1988
        %v2005 = vadd.f32 %v1941, %v1989
        %v2006 = vadd.f32 %v1942, %v1990
        %v2007 = vadd.f32 %v1943, %v1991
        %v2008 = vadd.f32 %v1944, %v1992
        %v2009 = vadd.f32 %v1945, %v1993
        %v2010 = vadd.f32 %v1946, %v1994
        %v2011 = vadd.f32 %v1947, %v1995
        %v2012 = vadd.f32 %v1948, %v1996
        %v2013 = vadd.f32 %v1949, %v1997
        %v2014 = vadd.f32 %v1950, %v1998
        %v2015 = vadd.f32 %v1951, %v1999
        %v2016 = vadd.f32 %v1952, %v2000
        %2017 = vset.pattern.permute.xlu0 12
        %2018 = vperm.xlu0 %2017, %v991
        %v2019 = vpop.permute.xlu0 %2018
        %2021 = vset.pattern.permute.xlu0 12
        %2022 = vperm.xlu0 %2021, %v992
        %v2023 = vpop.permute.xlu0 %2022
        %2025 = vset.pattern.permute.xlu0 12
        %2026 = vperm.xlu0 %2025, %v993
        %v2027 = vpop.permute.xlu0 %2026
        %2029 = vset.pattern.permute.xlu0 12
        %2030 = vperm.xlu0 %2029, %v994
        %v2031 = vpop.permute.xlu0 %2030
        %v2033 = vlaneseq
        %v2034 = vshrl.u32 %v2033, 7
        %v2035 = vsub.s32 4, %v2034
        %v2036 = vrot.slane %v1255, %v2035
        %v2037 = vlaneseq
        %v2038 = vshrl.u32 %v2037, 7
        %v2039 = vsub.s32 4, %v2038
        %v2040 = vrot.slane %v1256, %v2039
        %v2041 = vlaneseq
        %v2042 = vshrl.u32 %v2041, 7
        %v2043 = vsub.s32 4, %v2042
        %v2044 = vrot.slane %v1259, %v2043
        %v2045 = vlaneseq
        %v2046 = vshrl.u32 %v2045, 7
        %v2047 = vsub.s32 4, %v2046
        %v2048 = vrot.slane %v1260, %v2047
        %v2049 = vmul.f32 %v2019, %v2036
        %v2050 = vmul.f32 %v2019, %v2040
        %v2051 = vmul.f32 %v2023, %v2036
        %v2052 = vmul.f32 %v2023, %v2040
        %v2053 = vmul.f32 %v2027, %v2036
        %v2054 = vmul.f32 %v2027, %v2040
        %v2055 = vmul.f32 %v2031, %v2036
        %v2056 = vmul.f32 %v2031, %v2040
        %v2057 = vmul.f32 %v2019, %v2044
        %v2058 = vmul.f32 %v2019, %v2048
        %v2059 = vmul.f32 %v2023, %v2044
        %v2060 = vmul.f32 %v2023, %v2048
        %v2061 = vmul.f32 %v2027, %v2044
        %v2062 = vmul.f32 %v2027, %v2048
        %v2063 = vmul.f32 %v2031, %v2044
        %v2064 = vmul.f32 %v2031, %v2048
        %v2065 = vadd.f32 %v2001, %v2049
        %v2066 = vadd.f32 %v2002, %v2050
        %v2067 = vadd.f32 %v2003, %v2051
        %v2068 = vadd.f32 %v2004, %v2052
        %v2069 = vadd.f32 %v2005, %v2053
        %v2070 = vadd.f32 %v2006, %v2054
        %v2071 = vadd.f32 %v2007, %v2055
        %v2072 = vadd.f32 %v2008, %v2056
        %v2073 = vadd.f32 %v2009, %v2057
        %v2074 = vadd.f32 %v2010, %v2058
        %v2075 = vadd.f32 %v2011, %v2059
        %v2076 = vadd.f32 %v2012, %v2060
        %v2077 = vadd.f32 %v2013, %v2061
        %v2078 = vadd.f32 %v2014, %v2062
        %v2079 = vadd.f32 %v2015, %v2063
        %v2080 = vadd.f32 %v2016, %v2064
        %2081 = vset.pattern.permute.xlu0 13
        %2082 = vperm.xlu0 %2081, %v991
        %v2083 = vpop.permute.xlu0 %2082
        %2085 = vset.pattern.permute.xlu0 13
        %2086 = vperm.xlu0 %2085, %v992
        %v2087 = vpop.permute.xlu0 %2086
        %2089 = vset.pattern.permute.xlu0 13
        %2090 = vperm.xlu0 %2089, %v993
        %v2091 = vpop.permute.xlu0 %2090
        %2093 = vset.pattern.permute.xlu0 13
        %2094 = vperm.xlu0 %2093, %v994
        %v2095 = vpop.permute.xlu0 %2094
        %v2097 = vlaneseq
        %v2098 = vshrl.u32 %v2097, 7
        %v2099 = vsub.s32 5, %v2098
        %v2100 = vrot.slane %v1255, %v2099
        %v2101 = vlaneseq
        %v2102 = vshrl.u32 %v2101, 7
        %v2103 = vsub.s32 5, %v2102
        %v2104 = vrot.slane %v1256, %v2103
        %v2105 = vlaneseq
        %v2106 = vshrl.u32 %v2105, 7
        %v2107 = vsub.s32 5, %v2106
        %v2108 = vrot.slane %v1259, %v2107
        %v2109 = vlaneseq
        %v2110 = vshrl.u32 %v2109, 7
        %v2111 = vsub.s32 5, %v2110
        %v2112 = vrot.slane %v1260, %v2111
        %v2113 = vmul.f32 %v2083, %v2100
        %v2114 = vmul.f32 %v2083, %v2104
        %v2115 = vmul.f32 %v2087, %v2100
        %v2116 = vmul.f32 %v2087, %v2104
        %v2117 = vmul.f32 %v2091, %v2100
        %v2118 = vmul.f32 %v2091, %v2104
        %v2119 = vmul.f32 %v2095, %v2100
        %v2120 = vmul.f32 %v2095, %v2104
        %v2121 = vmul.f32 %v2083, %v2108
        %v2122 = vmul.f32 %v2083, %v2112
        %v2123 = vmul.f32 %v2087, %v2108
        %v2124 = vmul.f32 %v2087, %v2112
        %v2125 = vmul.f32 %v2091, %v2108
        %v2126 = vmul.f32 %v2091, %v2112
        %v2127 = vmul.f32 %v2095, %v2108
        %v2128 = vmul.f32 %v2095, %v2112
        %v2129 = vadd.f32 %v2065, %v2113
        %v2130 = vadd.f32 %v2066, %v2114
        %v2131 = vadd.f32 %v2067, %v2115
        %v2132 = vadd.f32 %v2068, %v2116
        %v2133 = vadd.f32 %v2069, %v2117
        %v2134 = vadd.f32 %v2070, %v2118
        %v2135 = vadd.f32 %v2071, %v2119
        %v2136 = vadd.f32 %v2072, %v2120
        %v2137 = vadd.f32 %v2073, %v2121
        %v2138 = vadd.f32 %v2074, %v2122
        %v2139 = vadd.f32 %v2075, %v2123
        %v2140 = vadd.f32 %v2076, %v2124
        %v2141 = vadd.f32 %v2077, %v2125
        %v2142 = vadd.f32 %v2078, %v2126
        %v2143 = vadd.f32 %v2079, %v2127
        %v2144 = vadd.f32 %v2080, %v2128
        %2145 = vset.pattern.permute.xlu0 14
        %2146 = vperm.xlu0 %2145, %v991
        %v2147 = vpop.permute.xlu0 %2146
        %2149 = vset.pattern.permute.xlu0 14
        %2150 = vperm.xlu0 %2149, %v992
        %v2151 = vpop.permute.xlu0 %2150
        %2153 = vset.pattern.permute.xlu0 14
        %2154 = vperm.xlu0 %2153, %v993
        %v2155 = vpop.permute.xlu0 %2154
        %2157 = vset.pattern.permute.xlu0 14
        %2158 = vperm.xlu0 %2157, %v994
        %v2159 = vpop.permute.xlu0 %2158
        %v2161 = vlaneseq
        %v2162 = vshrl.u32 %v2161, 7
        %v2163 = vsub.s32 6, %v2162
        %v2164 = vrot.slane %v1255, %v2163
        %v2165 = vlaneseq
        %v2166 = vshrl.u32 %v2165, 7
        %v2167 = vsub.s32 6, %v2166
        %v2168 = vrot.slane %v1256, %v2167
        %v2169 = vlaneseq
        %v2170 = vshrl.u32 %v2169, 7
        %v2171 = vsub.s32 6, %v2170
        %v2172 = vrot.slane %v1259, %v2171
        %v2173 = vlaneseq
        %v2174 = vshrl.u32 %v2173, 7
        %v2175 = vsub.s32 6, %v2174
        %v2176 = vrot.slane %v1260, %v2175
        %v2177 = vmul.f32 %v2147, %v2164
        %v2178 = vmul.f32 %v2147, %v2168
        %v2179 = vmul.f32 %v2151, %v2164
        %v2180 = vmul.f32 %v2151, %v2168
        %v2181 = vmul.f32 %v2155, %v2164
        %v2182 = vmul.f32 %v2155, %v2168
        %v2183 = vmul.f32 %v2159, %v2164
        %v2184 = vmul.f32 %v2159, %v2168
        %v2185 = vmul.f32 %v2147, %v2172
        %v2186 = vmul.f32 %v2147, %v2176
        %v2187 = vmul.f32 %v2151, %v2172
        %v2188 = vmul.f32 %v2151, %v2176
        %v2189 = vmul.f32 %v2155, %v2172
        %v2190 = vmul.f32 %v2155, %v2176
        %v2191 = vmul.f32 %v2159, %v2172
        %v2192 = vmul.f32 %v2159, %v2176
        %v2193 = vadd.f32 %v2129, %v2177
        %v2194 = vadd.f32 %v2130, %v2178
        %v2195 = vadd.f32 %v2131, %v2179
        %v2196 = vadd.f32 %v2132, %v2180
        %v2197 = vadd.f32 %v2133, %v2181
        %v2198 = vadd.f32 %v2134, %v2182
        %v2199 = vadd.f32 %v2135, %v2183
        %v2200 = vadd.f32 %v2136, %v2184
        %v2201 = vadd.f32 %v2137, %v2185
        %v2202 = vadd.f32 %v2138, %v2186
        %v2203 = vadd.f32 %v2139, %v2187
        %v2204 = vadd.f32 %v2140, %v2188
        %v2205 = vadd.f32 %v2141, %v2189
        %v2206 = vadd.f32 %v2142, %v2190
        %v2207 = vadd.f32 %v2143, %v2191
        %v2208 = vadd.f32 %v2144, %v2192
        %2209 = vset.pattern.permute.xlu0 15
        %2210 = vperm.xlu0 %2209, %v991
        %v2211 = vpop.permute.xlu0 %2210
        %2213 = vset.pattern.permute.xlu0 15
        %2214 = vperm.xlu0 %2213, %v992
        %v2215 = vpop.permute.xlu0 %2214
        %2217 = vset.pattern.permute.xlu0 15
        %2218 = vperm.xlu0 %2217, %v993
        %v2219 = vpop.permute.xlu0 %2218
        %2221 = vset.pattern.permute.xlu0 15
        %2222 = vperm.xlu0 %2221, %v994
        %v2223 = vpop.permute.xlu0 %2222
        %v2225 = vlaneseq
        %v2226 = vshrl.u32 %v2225, 7
        %v2227 = vsub.s32 7, %v2226
        %v2228 = vrot.slane %v1255, %v2227
        %v2229 = vlaneseq
        %v2230 = vshrl.u32 %v2229, 7
        %v2231 = vsub.s32 7, %v2230
        %v2232 = vrot.slane %v1256, %v2231
        %v2233 = vlaneseq
        %v2234 = vshrl.u32 %v2233, 7
        %v2235 = vsub.s32 7, %v2234
        %v2236 = vrot.slane %v1259, %v2235
        %v2237 = vlaneseq
        %v2238 = vshrl.u32 %v2237, 7
        %v2239 = vsub.s32 7, %v2238
        %v2240 = vrot.slane %v1260, %v2239
        %v2241 = vmul.f32 %v2211, %v2228
        %v2242 = vmul.f32 %v2211, %v2232
        %v2243 = vmul.f32 %v2215, %v2228
        %v2244 = vmul.f32 %v2215, %v2232
        %v2245 = vmul.f32 %v2219, %v2228
        %v2246 = vmul.f32 %v2219, %v2232
        %v2247 = vmul.f32 %v2223, %v2228
        %v2248 = vmul.f32 %v2223, %v2232
        %v2249 = vmul.f32 %v2211, %v2236
        %v2250 = vmul.f32 %v2211, %v2240
        %v2251 = vmul.f32 %v2215, %v2236
        %v2252 = vmul.f32 %v2215, %v2240
        %v2253 = vmul.f32 %v2219, %v2236
        %v2254 = vmul.f32 %v2219, %v2240
        %v2255 = vmul.f32 %v2223, %v2236
        %v2256 = vmul.f32 %v2223, %v2240
        %v2257 = vadd.f32 %v2193, %v2241
        %v2258 = vadd.f32 %v2194, %v2242
        %v2259 = vadd.f32 %v2195, %v2243
        %v2260 = vadd.f32 %v2196, %v2244
        %v2261 = vadd.f32 %v2197, %v2245
        %v2262 = vadd.f32 %v2198, %v2246
        %v2263 = vadd.f32 %v2199, %v2247
        %v2264 = vadd.f32 %v2200, %v2248
        %v2265 = vadd.f32 %v2201, %v2249
        %v2266 = vadd.f32 %v2202, %v2250
        %v2267 = vadd.f32 %v2203, %v2251
        %v2268 = vadd.f32 %v2204, %v2252
        %v2269 = vadd.f32 %v2205, %v2253
        %v2270 = vadd.f32 %v2206, %v2254
        %v2271 = vadd.f32 %v2207, %v2255
        %v2272 = vadd.f32 %v2208, %v2256
        %2274 = vset.pattern.permute.xlu0 0
        %2275 = vperm.xlu0 %2274, %v995
        %v2276 = vpop.permute.xlu0 %2275
        %2279 = vset.pattern.permute.xlu0 0
        %2280 = vperm.xlu0 %2279, %v996
        %v2281 = vpop.permute.xlu0 %2280
        %2284 = vset.pattern.permute.xlu0 0
        %2285 = vperm.xlu0 %2284, %v997
        %v2286 = vpop.permute.xlu0 %2285
        %2289 = vset.pattern.permute.xlu0 0
        %2290 = vperm.xlu0 %2289, %v998
        %v2291 = vpop.permute.xlu0 %2290
        %v2293 = vadd.f32 %v2257, %v2276
        %v2294 = vadd.f32 %v2258, %v2276
        %v2295 = vadd.f32 %v2259, %v2281
        %v2296 = vadd.f32 %v2260, %v2281
        %v2297 = vadd.f32 %v2261, %v2286
        %v2298 = vadd.f32 %v2262, %v2286
        %v2299 = vadd.f32 %v2263, %v2291
        %v2300 = vadd.f32 %v2264, %v2291
        %v2301 = vadd.f32 %v2265, %v2276
        %v2302 = vadd.f32 %v2266, %v2276
        %v2303 = vadd.f32 %v2267, %v2281
        %v2304 = vadd.f32 %v2268, %v2281
        %v2305 = vadd.f32 %v2269, %v2286
        %v2306 = vadd.f32 %v2270, %v2286
        %v2307 = vadd.f32 %v2271, %v2291
        %v2308 = vadd.f32 %v2272, %v2291
        %v2309 = vmax.f32 %v2293, 0.0
        %v2310 = vmax.f32 %v2294, 0.0
        %v2311 = vmax.f32 %v2295, 0.0
        %v2312 = vmax.f32 %v2296, 0.0
        %v2313 = vmax.f32 %v2297, 0.0
        %v2314 = vmax.f32 %v2298, 0.0
        %v2315 = vmax.f32 %v2299, 0.0
        %v2316 = vmax.f32 %v2300, 0.0
        %v2317 = vmax.f32 %v2301, 0.0
        %v2318 = vmax.f32 %v2302, 0.0
        %v2319 = vmax.f32 %v2303, 0.0
        %v2320 = vmax.f32 %v2304, 0.0
        %v2321 = vmax.f32 %v2305, 0.0
        %v2322 = vmax.f32 %v2306, 0.0
        %v2323 = vmax.f32 %v2307, 0.0
        %v2324 = vmax.f32 %v2308, 0.0
        %v2325 = vld [vmem:[%s893] sm:$0xf]
        %2327 = vset.pattern.permute.xlu0 0
        %2328 = vperm.xlu0 %2327, %v2325
        %v2329 = vpop.permute.xlu0 %2328
        %v2331 = vlaneseq
        %v2332 = vshrl.u32 %v2331, 7
        %v2333 = vsub.s32 0, %v2332
        %v2334 = vrot.slane %v2309, %v2333
        %v2335 = vlaneseq
        %v2336 = vshrl.u32 %v2335, 7
        %v2337 = vsub.s32 0, %v2336
        %v2338 = vrot.slane %v2310, %v2337
        %v2339 = vlaneseq
        %v2340 = vshrl.u32 %v2339, 7
        %v2341 = vsub.s32 0, %v2340
        %v2342 = vrot.slane %v2317, %v2341
        %v2343 = vlaneseq
        %v2344 = vshrl.u32 %v2343, 7
        %v2345 = vsub.s32 0, %v2344
        %v2346 = vrot.slane %v2318, %v2345
        %v2347 = vmul.f32 %v2329, %v2334
        %v2348 = vmul.f32 %v2329, %v2338
        %v2349 = vmul.f32 %v2329, %v2342
        %v2350 = vmul.f32 %v2329, %v2346
        %2351 = vset.pattern.permute.xlu0 1
        %2352 = vperm.xlu0 %2351, %v2325
        %v2353 = vpop.permute.xlu0 %2352
        %v2355 = vlaneseq
        %v2356 = vshrl.u32 %v2355, 7
        %v2357 = vsub.s32 1, %v2356
        %v2358 = vrot.slane %v2309, %v2357
        %v2359 = vlaneseq
        %v2360 = vshrl.u32 %v2359, 7
        %v2361 = vsub.s32 1, %v2360
        %v2362 = vrot.slane %v2310, %v2361
        %v2363 = vlaneseq
        %v2364 = vshrl.u32 %v2363, 7
        %v2365 = vsub.s32 1, %v2364
        %v2366 = vrot.slane %v2317, %v2365
        %v2367 = vlaneseq
        %v2368 = vshrl.u32 %v2367, 7
        %v2369 = vsub.s32 1, %v2368
        %v2370 = vrot.slane %v2318, %v2369
        %v2371 = vmul.f32 %v2353, %v2358
        %v2372 = vmul.f32 %v2353, %v2362
        %v2373 = vmul.f32 %v2353, %v2366
        %v2374 = vmul.f32 %v2353, %v2370
        %v2375 = vadd.f32 %v2347, %v2371
        %v2376 = vadd.f32 %v2348, %v2372
        %v2377 = vadd.f32 %v2349, %v2373
        %v2378 = vadd.f32 %v2350, %v2374
        %2379 = vset.pattern.permute.xlu0 2
        %2380 = vperm.xlu0 %2379, %v2325
        %v2381 = vpop.permute.xlu0 %2380
        %v2383 = vlaneseq
        %v2384 = vshrl.u32 %v2383, 7
        %v2385 = vsub.s32 2, %v2384
        %v2386 = vrot.slane %v2309, %v2385
        %v2387 = vlaneseq
        %v2388 = vshrl.u32 %v2387, 7
        %v2389 = vsub.s32 2, %v2388
        %v2390 = vrot.slane %v2310, %v2389
        %v2391 = vlaneseq
        %v2392 = vshrl.u32 %v2391, 7
        %v2393 = vsub.s32 2, %v2392
        %v2394 = vrot.slane %v2317, %v2393
        %v2395 = vlaneseq
        %v2396 = vshrl.u32 %v2395, 7
        %v2397 = vsub.s32 2, %v2396
        %v2398 = vrot.slane %v2318, %v2397
        %v2399 = vmul.f32 %v2381, %v2386
        %v2400 = vmul.f32 %v2381, %v2390
        %v2401 = vmul.f32 %v2381, %v2394
        %v2402 = vmul.f32 %v2381, %v2398
        %v2403 = vadd.f32 %v2375, %v2399
        %v2404 = vadd.f32 %v2376, %v2400
        %v2405 = vadd.f32 %v2377, %v2401
        %v2406 = vadd.f32 %v2378, %v2402
        %2407 = vset.pattern.permute.xlu0 3
        %2408 = vperm.xlu0 %2407, %v2325
        %v2409 = vpop.permute.xlu0 %2408
        %v2411 = vlaneseq
        %v2412 = vshrl.u32 %v2411, 7
        %v2413 = vsub.s32 3, %v2412
        %v2414 = vrot.slane %v2309, %v2413
        %v2415 = vlaneseq
        %v2416 = vshrl.u32 %v2415, 7
        %v2417 = vsub.s32 3, %v2416
        %v2418 = vrot.slane %v2310, %v2417
        %v2419 = vlaneseq
        %v2420 = vshrl.u32 %v2419, 7
        %v2421 = vsub.s32 3, %v2420
        %v2422 = vrot.slane %v2317, %v2421
        %v2423 = vlaneseq
        %v2424 = vshrl.u32 %v2423, 7
        %v2425 = vsub.s32 3, %v2424
        %v2426 = vrot.slane %v2318, %v2425
        %v2427 = vmul.f32 %v2409, %v2414
        %v2428 = vmul.f32 %v2409, %v2418
        %v2429 = vmul.f32 %v2409, %v2422
        %v2430 = vmul.f32 %v2409, %v2426
        %v2431 = vadd.f32 %v2403, %v2427
        %v2432 = vadd.f32 %v2404, %v2428
        %v2433 = vadd.f32 %v2405, %v2429
        %v2434 = vadd.f32 %v2406, %v2430
        %2435 = vset.pattern.permute.xlu0 4
        %2436 = vperm.xlu0 %2435, %v2325
        %v2437 = vpop.permute.xlu0 %2436
        %v2439 = vlaneseq
        %v2440 = vshrl.u32 %v2439, 7
        %v2441 = vsub.s32 4, %v2440
        %v2442 = vrot.slane %v2309, %v2441
        %v2443 = vlaneseq
        %v2444 = vshrl.u32 %v2443, 7
        %v2445 = vsub.s32 4, %v2444
        %v2446 = vrot.slane %v2310, %v2445
        %v2447 = vlaneseq
        %v2448 = vshrl.u32 %v2447, 7
        %v2449 = vsub.s32 4, %v2448
        %v2450 = vrot.slane %v2317, %v2449
        %v2451 = vlaneseq
        %v2452 = vshrl.u32 %v2451, 7
        %v2453 = vsub.s32 4, %v2452
        %v2454 = vrot.slane %v2318, %v2453
        %v2455 = vmul.f32 %v2437, %v2442
        %v2456 = vmul.f32 %v2437, %v2446
        %v2457 = vmul.f32 %v2437, %v2450
        %v2458 = vmul.f32 %v2437, %v2454
        %v2459 = vadd.f32 %v2431, %v2455
        %v2460 = vadd.f32 %v2432, %v2456
        %v2461 = vadd.f32 %v2433, %v2457
        %v2462 = vadd.f32 %v2434, %v2458
        %2463 = vset.pattern.permute.xlu0 5
        %2464 = vperm.xlu0 %2463, %v2325
        %v2465 = vpop.permute.xlu0 %2464
        %v2467 = vlaneseq
        %v2468 = vshrl.u32 %v2467, 7
        %v2469 = vsub.s32 5, %v2468
        %v2470 = vrot.slane %v2309, %v2469
        %v2471 = vlaneseq
        %v2472 = vshrl.u32 %v2471, 7
        %v2473 = vsub.s32 5, %v2472
        %v2474 = vrot.slane %v2310, %v2473
        %v2475 = vlaneseq
        %v2476 = vshrl.u32 %v2475, 7
        %v2477 = vsub.s32 5, %v2476
        %v2478 = vrot.slane %v2317, %v2477
        %v2479 = vlaneseq
        %v2480 = vshrl.u32 %v2479, 7
        %v2481 = vsub.s32 5, %v2480
        %v2482 = vrot.slane %v2318, %v2481
        %v2483 = vmul.f32 %v2465, %v2470
        %v2484 = vmul.f32 %v2465, %v2474
        %v2485 = vmul.f32 %v2465, %v2478
        %v2486 = vmul.f32 %v2465, %v2482
        %v2487 = vadd.f32 %v2459, %v2483
        %v2488 = vadd.f32 %v2460, %v2484
        %v2489 = vadd.f32 %v2461, %v2485
        %v2490 = vadd.f32 %v2462, %v2486
        %2491 = vset.pattern.permute.xlu0 6
        %2492 = vperm.xlu0 %2491, %v2325
        %v2493 = vpop.permute.xlu0 %2492
        %v2495 = vlaneseq
        %v2496 = vshrl.u32 %v2495, 7
        %v2497 = vsub.s32 6, %v2496
        %v2498 = vrot.slane %v2309, %v2497
        %v2499 = vlaneseq
        %v2500 = vshrl.u32 %v2499, 7
        %v2501 = vsub.s32 6, %v2500
        %v2502 = vrot.slane %v2310, %v2501
        %v2503 = vlaneseq
        %v2504 = vshrl.u32 %v2503, 7
        %v2505 = vsub.s32 6, %v2504
        %v2506 = vrot.slane %v2317, %v2505
        %v2507 = vlaneseq
        %v2508 = vshrl.u32 %v2507, 7
        %v2509 = vsub.s32 6, %v2508
        %v2510 = vrot.slane %v2318, %v2509
        %v2511 = vmul.f32 %v2493, %v2498
        %v2512 = vmul.f32 %v2493, %v2502
        %v2513 = vmul.f32 %v2493, %v2506
        %v2514 = vmul.f32 %v2493, %v2510
        %v2515 = vadd.f32 %v2487, %v2511
        %v2516 = vadd.f32 %v2488, %v2512
        %v2517 = vadd.f32 %v2489, %v2513
        %v2518 = vadd.f32 %v2490, %v2514
        %2519 = vset.pattern.permute.xlu0 7
        %2520 = vperm.xlu0 %2519, %v2325
        %v2521 = vpop.permute.xlu0 %2520
        %v2523 = vlaneseq
        %v2524 = vshrl.u32 %v2523, 7
        %v2525 = vsub.s32 7, %v2524
        %v2526 = vrot.slane %v2309, %v2525
        %v2527 = vlaneseq
        %v2528 = vshrl.u32 %v2527, 7
        %v2529 = vsub.s32 7, %v2528
        %v2530 = vrot.slane %v2310, %v2529
        %v2531 = vlaneseq
        %v2532 = vshrl.u32 %v2531, 7
        %v2533 = vsub.s32 7, %v2532
        %v2534 = vrot.slane %v2317, %v2533
        %v2535 = vlaneseq
        %v2536 = vshrl.u32 %v2535, 7
        %v2537 = vsub.s32 7, %v2536
        %v2538 = vrot.slane %v2318, %v2537
        %v2539 = vmul.f32 %v2521, %v2526
        %v2540 = vmul.f32 %v2521, %v2530
        %v2541 = vmul.f32 %v2521, %v2534
        %v2542 = vmul.f32 %v2521, %v2538
        %v2543 = vadd.f32 %v2515, %v2539
        %v2544 = vadd.f32 %v2516, %v2540
        %v2545 = vadd.f32 %v2517, %v2541
        %v2546 = vadd.f32 %v2518, %v2542
        %2547 = vset.pattern.permute.xlu0 8
        %2548 = vperm.xlu0 %2547, %v2325
        %v2549 = vpop.permute.xlu0 %2548
        %v2551 = vlaneseq
        %v2552 = vshrl.u32 %v2551, 7
        %v2553 = vsub.s32 0, %v2552
        %v2554 = vrot.slane %v2311, %v2553
        %v2555 = vlaneseq
        %v2556 = vshrl.u32 %v2555, 7
        %v2557 = vsub.s32 0, %v2556
        %v2558 = vrot.slane %v2312, %v2557
        %v2559 = vlaneseq
        %v2560 = vshrl.u32 %v2559, 7
        %v2561 = vsub.s32 0, %v2560
        %v2562 = vrot.slane %v2319, %v2561
        %v2563 = vlaneseq
        %v2564 = vshrl.u32 %v2563, 7
        %v2565 = vsub.s32 0, %v2564
        %v2566 = vrot.slane %v2320, %v2565
        %v2567 = vmul.f32 %v2549, %v2554
        %v2568 = vmul.f32 %v2549, %v2558
        %v2569 = vmul.f32 %v2549, %v2562
        %v2570 = vmul.f32 %v2549, %v2566
        %v2571 = vadd.f32 %v2543, %v2567
        %v2572 = vadd.f32 %v2544, %v2568
        %v2573 = vadd.f32 %v2545, %v2569
        %v2574 = vadd.f32 %v2546, %v2570
        %2575 = vset.pattern.permute.xlu0 9
        %2576 = vperm.xlu0 %2575, %v2325
        %v2577 = vpop.permute.xlu0 %2576
        %v2579 = vlaneseq
        %v2580 = vshrl.u32 %v2579, 7
        %v2581 = vsub.s32 1, %v2580
        %v2582 = vrot.slane %v2311, %v2581
        %v2583 = vlaneseq
        %v2584 = vshrl.u32 %v2583, 7
        %v2585 = vsub.s32 1, %v2584
        %v2586 = vrot.slane %v2312, %v2585
        %v2587 = vlaneseq
        %v2588 = vshrl.u32 %v2587, 7
        %v2589 = vsub.s32 1, %v2588
        %v2590 = vrot.slane %v2319, %v2589
        %v2591 = vlaneseq
        %v2592 = vshrl.u32 %v2591, 7
        %v2593 = vsub.s32 1, %v2592
        %v2594 = vrot.slane %v2320, %v2593
        %v2595 = vmul.f32 %v2577, %v2582
        %v2596 = vmul.f32 %v2577, %v2586
        %v2597 = vmul.f32 %v2577, %v2590
        %v2598 = vmul.f32 %v2577, %v2594
        %v2599 = vadd.f32 %v2571, %v2595
        %v2600 = vadd.f32 %v2572, %v2596
        %v2601 = vadd.f32 %v2573, %v2597
        %v2602 = vadd.f32 %v2574, %v2598
        %2603 = vset.pattern.permute.xlu0 10
        %2604 = vperm.xlu0 %2603, %v2325
        %v2605 = vpop.permute.xlu0 %2604
        %v2607 = vlaneseq
        %v2608 = vshrl.u32 %v2607, 7
        %v2609 = vsub.s32 2, %v2608
        %v2610 = vrot.slane %v2311, %v2609
        %v2611 = vlaneseq
        %v2612 = vshrl.u32 %v2611, 7
        %v2613 = vsub.s32 2, %v2612
        %v2614 = vrot.slane %v2312, %v2613
        %v2615 = vlaneseq
        %v2616 = vshrl.u32 %v2615, 7
        %v2617 = vsub.s32 2, %v2616
        %v2618 = vrot.slane %v2319, %v2617
        %v2619 = vlaneseq
        %v2620 = vshrl.u32 %v2619, 7
        %v2621 = vsub.s32 2, %v2620
        %v2622 = vrot.slane %v2320, %v2621
        %v2623 = vmul.f32 %v2605, %v2610
        %v2624 = vmul.f32 %v2605, %v2614
        %v2625 = vmul.f32 %v2605, %v2618
        %v2626 = vmul.f32 %v2605, %v2622
        %v2627 = vadd.f32 %v2599, %v2623
        %v2628 = vadd.f32 %v2600, %v2624
        %v2629 = vadd.f32 %v2601, %v2625
        %v2630 = vadd.f32 %v2602, %v2626
        %2631 = vset.pattern.permute.xlu0 11
        %2632 = vperm.xlu0 %2631, %v2325
        %v2633 = vpop.permute.xlu0 %2632
        %v2635 = vlaneseq
        %v2636 = vshrl.u32 %v2635, 7
        %v2637 = vsub.s32 3, %v2636
        %v2638 = vrot.slane %v2311, %v2637
        %v2639 = vlaneseq
        %v2640 = vshrl.u32 %v2639, 7
        %v2641 = vsub.s32 3, %v2640
        %v2642 = vrot.slane %v2312, %v2641
        %v2643 = vlaneseq
        %v2644 = vshrl.u32 %v2643, 7
        %v2645 = vsub.s32 3, %v2644
        %v2646 = vrot.slane %v2319, %v2645
        %v2647 = vlaneseq
        %v2648 = vshrl.u32 %v2647, 7
        %v2649 = vsub.s32 3, %v2648
        %v2650 = vrot.slane %v2320, %v2649
        %v2651 = vmul.f32 %v2633, %v2638
        %v2652 = vmul.f32 %v2633, %v2642
        %v2653 = vmul.f32 %v2633, %v2646
        %v2654 = vmul.f32 %v2633, %v2650
        %v2655 = vadd.f32 %v2627, %v2651
        %v2656 = vadd.f32 %v2628, %v2652
        %v2657 = vadd.f32 %v2629, %v2653
        %v2658 = vadd.f32 %v2630, %v2654
        %2659 = vset.pattern.permute.xlu0 12
        %2660 = vperm.xlu0 %2659, %v2325
        %v2661 = vpop.permute.xlu0 %2660
        %v2663 = vlaneseq
        %v2664 = vshrl.u32 %v2663, 7
        %v2665 = vsub.s32 4, %v2664
        %v2666 = vrot.slane %v2311, %v2665
        %v2667 = vlaneseq
        %v2668 = vshrl.u32 %v2667, 7
        %v2669 = vsub.s32 4, %v2668
        %v2670 = vrot.slane %v2312, %v2669
        %v2671 = vlaneseq
        %v2672 = vshrl.u32 %v2671, 7
        %v2673 = vsub.s32 4, %v2672
        %v2674 = vrot.slane %v2319, %v2673
        %v2675 = vlaneseq
        %v2676 = vshrl.u32 %v2675, 7
        %v2677 = vsub.s32 4, %v2676
        %v2678 = vrot.slane %v2320, %v2677
        %v2679 = vmul.f32 %v2661, %v2666
        %v2680 = vmul.f32 %v2661, %v2670
        %v2681 = vmul.f32 %v2661, %v2674
        %v2682 = vmul.f32 %v2661, %v2678
        %v2683 = vadd.f32 %v2655, %v2679
        %v2684 = vadd.f32 %v2656, %v2680
        %v2685 = vadd.f32 %v2657, %v2681
        %v2686 = vadd.f32 %v2658, %v2682
        %2687 = vset.pattern.permute.xlu0 13
        %2688 = vperm.xlu0 %2687, %v2325
        %v2689 = vpop.permute.xlu0 %2688
        %v2691 = vlaneseq
        %v2692 = vshrl.u32 %v2691, 7
        %v2693 = vsub.s32 5, %v2692
        %v2694 = vrot.slane %v2311, %v2693
        %v2695 = vlaneseq
        %v2696 = vshrl.u32 %v2695, 7
        %v2697 = vsub.s32 5, %v2696
        %v2698 = vrot.slane %v2312, %v2697
        %v2699 = vlaneseq
        %v2700 = vshrl.u32 %v2699, 7
        %v2701 = vsub.s32 5, %v2700
        %v2702 = vrot.slane %v2319, %v2701
        %v2703 = vlaneseq
        %v2704 = vshrl.u32 %v2703, 7
        %v2705 = vsub.s32 5, %v2704
        %v2706 = vrot.slane %v2320, %v2705
        %v2707 = vmul.f32 %v2689, %v2694
        %v2708 = vmul.f32 %v2689, %v2698
        %v2709 = vmul.f32 %v2689, %v2702
        %v2710 = vmul.f32 %v2689, %v2706
        %v2711 = vadd.f32 %v2683, %v2707
        %v2712 = vadd.f32 %v2684, %v2708
        %v2713 = vadd.f32 %v2685, %v2709
        %v2714 = vadd.f32 %v2686, %v2710
        %2715 = vset.pattern.permute.xlu0 14
        %2716 = vperm.xlu0 %2715, %v2325
        %v2717 = vpop.permute.xlu0 %2716
        %v2719 = vlaneseq
        %v2720 = vshrl.u32 %v2719, 7
        %v2721 = vsub.s32 6, %v2720
        %v2722 = vrot.slane %v2311, %v2721
        %v2723 = vlaneseq
        %v2724 = vshrl.u32 %v2723, 7
        %v2725 = vsub.s32 6, %v2724
        %v2726 = vrot.slane %v2312, %v2725
        %v2727 = vlaneseq
        %v2728 = vshrl.u32 %v2727, 7
        %v2729 = vsub.s32 6, %v2728
        %v2730 = vrot.slane %v2319, %v2729
        %v2731 = vlaneseq
        %v2732 = vshrl.u32 %v2731, 7
        %v2733 = vsub.s32 6, %v2732
        %v2734 = vrot.slane %v2320, %v2733
        %v2735 = vmul.f32 %v2717, %v2722
        %v2736 = vmul.f32 %v2717, %v2726
        %v2737 = vmul.f32 %v2717, %v2730
        %v2738 = vmul.f32 %v2717, %v2734
        %v2739 = vadd.f32 %v2711, %v2735
        %v2740 = vadd.f32 %v2712, %v2736
        %v2741 = vadd.f32 %v2713, %v2737
        %v2742 = vadd.f32 %v2714, %v2738
        %2743 = vset.pattern.permute.xlu0 15
        %2744 = vperm.xlu0 %2743, %v2325
        %v2745 = vpop.permute.xlu0 %2744
        %v2747 = vlaneseq
        %v2748 = vshrl.u32 %v2747, 7
        %v2749 = vsub.s32 7, %v2748
        %v2750 = vrot.slane %v2311, %v2749
        %v2751 = vlaneseq
        %v2752 = vshrl.u32 %v2751, 7
        %v2753 = vsub.s32 7, %v2752
        %v2754 = vrot.slane %v2312, %v2753
        %v2755 = vlaneseq
        %v2756 = vshrl.u32 %v2755, 7
        %v2757 = vsub.s32 7, %v2756
        %v2758 = vrot.slane %v2319, %v2757
        %v2759 = vlaneseq
        %v2760 = vshrl.u32 %v2759, 7
        %v2761 = vsub.s32 7, %v2760
        %v2762 = vrot.slane %v2320, %v2761
        %v2763 = vmul.f32 %v2745, %v2750
        %v2764 = vmul.f32 %v2745, %v2754
        %v2765 = vmul.f32 %v2745, %v2758
        %v2766 = vmul.f32 %v2745, %v2762
        %v2767 = vadd.f32 %v2739, %v2763
        %v2768 = vadd.f32 %v2740, %v2764
        %v2769 = vadd.f32 %v2741, %v2765
        %v2770 = vadd.f32 %v2742, %v2766
        %2771 = vset.pattern.permute.xlu0 16
        %2772 = vperm.xlu0 %2771, %v2325
        %v2773 = vpop.permute.xlu0 %2772
        %v2775 = vlaneseq
        %v2776 = vshrl.u32 %v2775, 7
        %v2777 = vsub.s32 0, %v2776
        %v2778 = vrot.slane %v2313, %v2777
        %v2779 = vlaneseq
        %v2780 = vshrl.u32 %v2779, 7
        %v2781 = vsub.s32 0, %v2780
        %v2782 = vrot.slane %v2314, %v2781
        %v2783 = vlaneseq
        %v2784 = vshrl.u32 %v2783, 7
        %v2785 = vsub.s32 0, %v2784
        %v2786 = vrot.slane %v2321, %v2785
        %v2787 = vlaneseq
        %v2788 = vshrl.u32 %v2787, 7
        %v2789 = vsub.s32 0, %v2788
        %v2790 = vrot.slane %v2322, %v2789
        %v2791 = vmul.f32 %v2773, %v2778
        %v2792 = vmul.f32 %v2773, %v2782
        %v2793 = vmul.f32 %v2773, %v2786
        %v2794 = vmul.f32 %v2773, %v2790
        %v2795 = vadd.f32 %v2767, %v2791
        %v2796 = vadd.f32 %v2768, %v2792
        %v2797 = vadd.f32 %v2769, %v2793
        %v2798 = vadd.f32 %v2770, %v2794
        %2799 = vset.pattern.permute.xlu0 17
        %2800 = vperm.xlu0 %2799, %v2325
        %v2801 = vpop.permute.xlu0 %2800
        %v2803 = vlaneseq
        %v2804 = vshrl.u32 %v2803, 7
        %v2805 = vsub.s32 1, %v2804
        %v2806 = vrot.slane %v2313, %v2805
        %v2807 = vlaneseq
        %v2808 = vshrl.u32 %v2807, 7
        %v2809 = vsub.s32 1, %v2808
        %v2810 = vrot.slane %v2314, %v2809
        %v2811 = vlaneseq
        %v2812 = vshrl.u32 %v2811, 7
        %v2813 = vsub.s32 1, %v2812
        %v2814 = vrot.slane %v2321, %v2813
        %v2815 = vlaneseq
        %v2816 = vshrl.u32 %v2815, 7
        %v2817 = vsub.s32 1, %v2816
        %v2818 = vrot.slane %v2322, %v2817
        %v2819 = vmul.f32 %v2801, %v2806
        %v2820 = vmul.f32 %v2801, %v2810
        %v2821 = vmul.f32 %v2801, %v2814
        %v2822 = vmul.f32 %v2801, %v2818
        %v2823 = vadd.f32 %v2795, %v2819
        %v2824 = vadd.f32 %v2796, %v2820
        %v2825 = vadd.f32 %v2797, %v2821
        %v2826 = vadd.f32 %v2798, %v2822
        %2827 = vset.pattern.permute.xlu0 18
        %2828 = vperm.xlu0 %2827, %v2325
        %v2829 = vpop.permute.xlu0 %2828
        %v2831 = vlaneseq
        %v2832 = vshrl.u32 %v2831, 7
        %v2833 = vsub.s32 2, %v2832
        %v2834 = vrot.slane %v2313, %v2833
        %v2835 = vlaneseq
        %v2836 = vshrl.u32 %v2835, 7
        %v2837 = vsub.s32 2, %v2836
        %v2838 = vrot.slane %v2314, %v2837
        %v2839 = vlaneseq
        %v2840 = vshrl.u32 %v2839, 7
        %v2841 = vsub.s32 2, %v2840
        %v2842 = vrot.slane %v2321, %v2841
        %v2843 = vlaneseq
        %v2844 = vshrl.u32 %v2843, 7
        %v2845 = vsub.s32 2, %v2844
        %v2846 = vrot.slane %v2322, %v2845
        %v2847 = vmul.f32 %v2829, %v2834
        %v2848 = vmul.f32 %v2829, %v2838
        %v2849 = vmul.f32 %v2829, %v2842
        %v2850 = vmul.f32 %v2829, %v2846
        %v2851 = vadd.f32 %v2823, %v2847
        %v2852 = vadd.f32 %v2824, %v2848
        %v2853 = vadd.f32 %v2825, %v2849
        %v2854 = vadd.f32 %v2826, %v2850
        %2855 = vset.pattern.permute.xlu0 19
        %2856 = vperm.xlu0 %2855, %v2325
        %v2857 = vpop.permute.xlu0 %2856
        %v2859 = vlaneseq
        %v2860 = vshrl.u32 %v2859, 7
        %v2861 = vsub.s32 3, %v2860
        %v2862 = vrot.slane %v2313, %v2861
        %v2863 = vlaneseq
        %v2864 = vshrl.u32 %v2863, 7
        %v2865 = vsub.s32 3, %v2864
        %v2866 = vrot.slane %v2314, %v2865
        %v2867 = vlaneseq
        %v2868 = vshrl.u32 %v2867, 7
        %v2869 = vsub.s32 3, %v2868
        %v2870 = vrot.slane %v2321, %v2869
        %v2871 = vlaneseq
        %v2872 = vshrl.u32 %v2871, 7
        %v2873 = vsub.s32 3, %v2872
        %v2874 = vrot.slane %v2322, %v2873
        %v2875 = vmul.f32 %v2857, %v2862
        %v2876 = vmul.f32 %v2857, %v2866
        %v2877 = vmul.f32 %v2857, %v2870
        %v2878 = vmul.f32 %v2857, %v2874
        %v2879 = vadd.f32 %v2851, %v2875
        %v2880 = vadd.f32 %v2852, %v2876
        %v2881 = vadd.f32 %v2853, %v2877
        %v2882 = vadd.f32 %v2854, %v2878
        %2883 = vset.pattern.permute.xlu0 20
        %2884 = vperm.xlu0 %2883, %v2325
        %v2885 = vpop.permute.xlu0 %2884
        %v2887 = vlaneseq
        %v2888 = vshrl.u32 %v2887, 7
        %v2889 = vsub.s32 4, %v2888
        %v2890 = vrot.slane %v2313, %v2889
        %v2891 = vlaneseq
        %v2892 = vshrl.u32 %v2891, 7
        %v2893 = vsub.s32 4, %v2892
        %v2894 = vrot.slane %v2314, %v2893
        %v2895 = vlaneseq
        %v2896 = vshrl.u32 %v2895, 7
        %v2897 = vsub.s32 4, %v2896
        %v2898 = vrot.slane %v2321, %v2897
        %v2899 = vlaneseq
        %v2900 = vshrl.u32 %v2899, 7
        %v2901 = vsub.s32 4, %v2900
        %v2902 = vrot.slane %v2322, %v2901
        %v2903 = vmul.f32 %v2885, %v2890
        %v2904 = vmul.f32 %v2885, %v2894
        %v2905 = vmul.f32 %v2885, %v2898
        %v2906 = vmul.f32 %v2885, %v2902
        %v2907 = vadd.f32 %v2879, %v2903
        %v2908 = vadd.f32 %v2880, %v2904
        %v2909 = vadd.f32 %v2881, %v2905
        %v2910 = vadd.f32 %v2882, %v2906
        %2911 = vset.pattern.permute.xlu0 21
        %2912 = vperm.xlu0 %2911, %v2325
        %v2913 = vpop.permute.xlu0 %2912
        %v2915 = vlaneseq
        %v2916 = vshrl.u32 %v2915, 7
        %v2917 = vsub.s32 5, %v2916
        %v2918 = vrot.slane %v2313, %v2917
        %v2919 = vlaneseq
        %v2920 = vshrl.u32 %v2919, 7
        %v2921 = vsub.s32 5, %v2920
        %v2922 = vrot.slane %v2314, %v2921
        %v2923 = vlaneseq
        %v2924 = vshrl.u32 %v2923, 7
        %v2925 = vsub.s32 5, %v2924
        %v2926 = vrot.slane %v2321, %v2925
        %v2927 = vlaneseq
        %v2928 = vshrl.u32 %v2927, 7
        %v2929 = vsub.s32 5, %v2928
        %v2930 = vrot.slane %v2322, %v2929
        %v2931 = vmul.f32 %v2913, %v2918
        %v2932 = vmul.f32 %v2913, %v2922
        %v2933 = vmul.f32 %v2913, %v2926
        %v2934 = vmul.f32 %v2913, %v2930
        %v2935 = vadd.f32 %v2907, %v2931
        %v2936 = vadd.f32 %v2908, %v2932
        %v2937 = vadd.f32 %v2909, %v2933
        %v2938 = vadd.f32 %v2910, %v2934
        %2939 = vset.pattern.permute.xlu0 22
        %2940 = vperm.xlu0 %2939, %v2325
        %v2941 = vpop.permute.xlu0 %2940
        %v2943 = vlaneseq
        %v2944 = vshrl.u32 %v2943, 7
        %v2945 = vsub.s32 6, %v2944
        %v2946 = vrot.slane %v2313, %v2945
        %v2947 = vlaneseq
        %v2948 = vshrl.u32 %v2947, 7
        %v2949 = vsub.s32 6, %v2948
        %v2950 = vrot.slane %v2314, %v2949
        %v2951 = vlaneseq
        %v2952 = vshrl.u32 %v2951, 7
        %v2953 = vsub.s32 6, %v2952
        %v2954 = vrot.slane %v2321, %v2953
        %v2955 = vlaneseq
        %v2956 = vshrl.u32 %v2955, 7
        %v2957 = vsub.s32 6, %v2956
        %v2958 = vrot.slane %v2322, %v2957
        %v2959 = vmul.f32 %v2941, %v2946
        %v2960 = vmul.f32 %v2941, %v2950
        %v2961 = vmul.f32 %v2941, %v2954
        %v2962 = vmul.f32 %v2941, %v2958
        %v2963 = vadd.f32 %v2935, %v2959
        %v2964 = vadd.f32 %v2936, %v2960
        %v2965 = vadd.f32 %v2937, %v2961
        %v2966 = vadd.f32 %v2938, %v2962
        %2967 = vset.pattern.permute.xlu0 23
        %2968 = vperm.xlu0 %2967, %v2325
        %v2969 = vpop.permute.xlu0 %2968
        %v2971 = vlaneseq
        %v2972 = vshrl.u32 %v2971, 7
        %v2973 = vsub.s32 7, %v2972
        %v2974 = vrot.slane %v2313, %v2973
        %v2975 = vlaneseq
        %v2976 = vshrl.u32 %v2975, 7
        %v2977 = vsub.s32 7, %v2976
        %v2978 = vrot.slane %v2314, %v2977
        %v2979 = vlaneseq
        %v2980 = vshrl.u32 %v2979, 7
        %v2981 = vsub.s32 7, %v2980
        %v2982 = vrot.slane %v2321, %v2981
        %v2983 = vlaneseq
        %v2984 = vshrl.u32 %v2983, 7
        %v2985 = vsub.s32 7, %v2984
        %v2986 = vrot.slane %v2322, %v2985
        %v2987 = vmul.f32 %v2969, %v2974
        %v2988 = vmul.f32 %v2969, %v2978
        %v2989 = vmul.f32 %v2969, %v2982
        %v2990 = vmul.f32 %v2969, %v2986
        %v2991 = vadd.f32 %v2963, %v2987
        %v2992 = vadd.f32 %v2964, %v2988
        %v2993 = vadd.f32 %v2965, %v2989
        %v2994 = vadd.f32 %v2966, %v2990
        %2995 = vset.pattern.permute.xlu0 24
        %2996 = vperm.xlu0 %2995, %v2325
        %v2997 = vpop.permute.xlu0 %2996
        %v2999 = vlaneseq
        %v3000 = vshrl.u32 %v2999, 7
        %v3001 = vsub.s32 0, %v3000
        %v3002 = vrot.slane %v2315, %v3001
        %v3003 = vlaneseq
        %v3004 = vshrl.u32 %v3003, 7
        %v3005 = vsub.s32 0, %v3004
        %v3006 = vrot.slane %v2316, %v3005
        %v3007 = vlaneseq
        %v3008 = vshrl.u32 %v3007, 7
        %v3009 = vsub.s32 0, %v3008
        %v3010 = vrot.slane %v2323, %v3009
        %v3011 = vlaneseq
        %v3012 = vshrl.u32 %v3011, 7
        %v3013 = vsub.s32 0, %v3012
        %v3014 = vrot.slane %v2324, %v3013
        %v3015 = vmul.f32 %v2997, %v3002
        %v3016 = vmul.f32 %v2997, %v3006
        %v3017 = vmul.f32 %v2997, %v3010
        %v3018 = vmul.f32 %v2997, %v3014
        %v3019 = vadd.f32 %v2991, %v3015
        %v3020 = vadd.f32 %v2992, %v3016
        %v3021 = vadd.f32 %v2993, %v3017
        %v3022 = vadd.f32 %v2994, %v3018
        %3023 = vset.pattern.permute.xlu0 25
        %3024 = vperm.xlu0 %3023, %v2325
        %v3025 = vpop.permute.xlu0 %3024
        %v3027 = vlaneseq
        %v3028 = vshrl.u32 %v3027, 7
        %v3029 = vsub.s32 1, %v3028
        %v3030 = vrot.slane %v2315, %v3029
        %v3031 = vlaneseq
        %v3032 = vshrl.u32 %v3031, 7
        %v3033 = vsub.s32 1, %v3032
        %v3034 = vrot.slane %v2316, %v3033
        %v3035 = vlaneseq
        %v3036 = vshrl.u32 %v3035, 7
        %v3037 = vsub.s32 1, %v3036
        %v3038 = vrot.slane %v2323, %v3037
        %v3039 = vlaneseq
        %v3040 = vshrl.u32 %v3039, 7
        %v3041 = vsub.s32 1, %v3040
        %v3042 = vrot.slane %v2324, %v3041
        %v3043 = vmul.f32 %v3025, %v3030
        %v3044 = vmul.f32 %v3025, %v3034
        %v3045 = vmul.f32 %v3025, %v3038
        %v3046 = vmul.f32 %v3025, %v3042
        %v3047 = vadd.f32 %v3019, %v3043
        %v3048 = vadd.f32 %v3020, %v3044
        %v3049 = vadd.f32 %v3021, %v3045
        %v3050 = vadd.f32 %v3022, %v3046
        %3051 = vset.pattern.permute.xlu0 26
        %3052 = vperm.xlu0 %3051, %v2325
        %v3053 = vpop.permute.xlu0 %3052
        %v3055 = vlaneseq
        %v3056 = vshrl.u32 %v3055, 7
        %v3057 = vsub.s32 2, %v3056
        %v3058 = vrot.slane %v2315, %v3057
        %v3059 = vlaneseq
        %v3060 = vshrl.u32 %v3059, 7
        %v3061 = vsub.s32 2, %v3060
        %v3062 = vrot.slane %v2316, %v3061
        %v3063 = vlaneseq
        %v3064 = vshrl.u32 %v3063, 7
        %v3065 = vsub.s32 2, %v3064
        %v3066 = vrot.slane %v2323, %v3065
        %v3067 = vlaneseq
        %v3068 = vshrl.u32 %v3067, 7
        %v3069 = vsub.s32 2, %v3068
        %v3070 = vrot.slane %v2324, %v3069
        %v3071 = vmul.f32 %v3053, %v3058
        %v3072 = vmul.f32 %v3053, %v3062
        %v3073 = vmul.f32 %v3053, %v3066
        %v3074 = vmul.f32 %v3053, %v3070
        %v3075 = vadd.f32 %v3047, %v3071
        %v3076 = vadd.f32 %v3048, %v3072
        %v3077 = vadd.f32 %v3049, %v3073
        %v3078 = vadd.f32 %v3050, %v3074
        %3079 = vset.pattern.permute.xlu0 27
        %3080 = vperm.xlu0 %3079, %v2325
        %v3081 = vpop.permute.xlu0 %3080
        %v3083 = vlaneseq
        %v3084 = vshrl.u32 %v3083, 7
        %v3085 = vsub.s32 3, %v3084
        %v3086 = vrot.slane %v2315, %v3085
        %v3087 = vlaneseq
        %v3088 = vshrl.u32 %v3087, 7
        %v3089 = vsub.s32 3, %v3088
        %v3090 = vrot.slane %v2316, %v3089
        %v3091 = vlaneseq
        %v3092 = vshrl.u32 %v3091, 7
        %v3093 = vsub.s32 3, %v3092
        %v3094 = vrot.slane %v2323, %v3093
        %v3095 = vlaneseq
        %v3096 = vshrl.u32 %v3095, 7
        %v3097 = vsub.s32 3, %v3096
        %v3098 = vrot.slane %v2324, %v3097
        %v3099 = vmul.f32 %v3081, %v3086
        %v3100 = vmul.f32 %v3081, %v3090
        %v3101 = vmul.f32 %v3081, %v3094
        %v3102 = vmul.f32 %v3081, %v3098
        %v3103 = vadd.f32 %v3075, %v3099
        %v3104 = vadd.f32 %v3076, %v3100
        %v3105 = vadd.f32 %v3077, %v3101
        %v3106 = vadd.f32 %v3078, %v3102
        %3107 = vset.pattern.permute.xlu0 28
        %3108 = vperm.xlu0 %3107, %v2325
        %v3109 = vpop.permute.xlu0 %3108
        %v3111 = vlaneseq
        %v3112 = vshrl.u32 %v3111, 7
        %v3113 = vsub.s32 4, %v3112
        %v3114 = vrot.slane %v2315, %v3113
        %v3115 = vlaneseq
        %v3116 = vshrl.u32 %v3115, 7
        %v3117 = vsub.s32 4, %v3116
        %v3118 = vrot.slane %v2316, %v3117
        %v3119 = vlaneseq
        %v3120 = vshrl.u32 %v3119, 7
        %v3121 = vsub.s32 4, %v3120
        %v3122 = vrot.slane %v2323, %v3121
        %v3123 = vlaneseq
        %v3124 = vshrl.u32 %v3123, 7
        %v3125 = vsub.s32 4, %v3124
        %v3126 = vrot.slane %v2324, %v3125
        %v3127 = vmul.f32 %v3109, %v3114
        %v3128 = vmul.f32 %v3109, %v3118
        %v3129 = vmul.f32 %v3109, %v3122
        %v3130 = vmul.f32 %v3109, %v3126
        %v3131 = vadd.f32 %v3103, %v3127
        %v3132 = vadd.f32 %v3104, %v3128
        %v3133 = vadd.f32 %v3105, %v3129
        %v3134 = vadd.f32 %v3106, %v3130
        %3135 = vset.pattern.permute.xlu0 29
        %3136 = vperm.xlu0 %3135, %v2325
        %v3137 = vpop.permute.xlu0 %3136
        %v3139 = vlaneseq
        %v3140 = vshrl.u32 %v3139, 7
        %v3141 = vsub.s32 5, %v3140
        %v3142 = vrot.slane %v2315, %v3141
        %v3143 = vlaneseq
        %v3144 = vshrl.u32 %v3143, 7
        %v3145 = vsub.s32 5, %v3144
        %v3146 = vrot.slane %v2316, %v3145
        %v3147 = vlaneseq
        %v3148 = vshrl.u32 %v3147, 7
        %v3149 = vsub.s32 5, %v3148
        %v3150 = vrot.slane %v2323, %v3149
        %v3151 = vlaneseq
        %v3152 = vshrl.u32 %v3151, 7
        %v3153 = vsub.s32 5, %v3152
        %v3154 = vrot.slane %v2324, %v3153
        %v3155 = vmul.f32 %v3137, %v3142
        %v3156 = vmul.f32 %v3137, %v3146
        %v3157 = vmul.f32 %v3137, %v3150
        %v3158 = vmul.f32 %v3137, %v3154
        %v3159 = vadd.f32 %v3131, %v3155
        %v3160 = vadd.f32 %v3132, %v3156
        %v3161 = vadd.f32 %v3133, %v3157
        %v3162 = vadd.f32 %v3134, %v3158
        %3163 = vset.pattern.permute.xlu0 30
        %3164 = vperm.xlu0 %3163, %v2325
        %v3165 = vpop.permute.xlu0 %3164
        %v3167 = vlaneseq
        %v3168 = vshrl.u32 %v3167, 7
        %v3169 = vsub.s32 6, %v3168
        %v3170 = vrot.slane %v2315, %v3169
        %v3171 = vlaneseq
        %v3172 = vshrl.u32 %v3171, 7
        %v3173 = vsub.s32 6, %v3172
        %v3174 = vrot.slane %v2316, %v3173
        %v3175 = vlaneseq
        %v3176 = vshrl.u32 %v3175, 7
        %v3177 = vsub.s32 6, %v3176
        %v3178 = vrot.slane %v2323, %v3177
        %v3179 = vlaneseq
        %v3180 = vshrl.u32 %v3179, 7
        %v3181 = vsub.s32 6, %v3180
        %v3182 = vrot.slane %v2324, %v3181
        %v3183 = vmul.f32 %v3165, %v3170
        %v3184 = vmul.f32 %v3165, %v3174
        %v3185 = vmul.f32 %v3165, %v3178
        %v3186 = vmul.f32 %v3165, %v3182
        %v3187 = vadd.f32 %v3159, %v3183
        %v3188 = vadd.f32 %v3160, %v3184
        %v3189 = vadd.f32 %v3161, %v3185
        %v3190 = vadd.f32 %v3162, %v3186
        %3191 = vset.pattern.permute.xlu0 31
        %3192 = vperm.xlu0 %3191, %v2325
        %v3193 = vpop.permute.xlu0 %3192
        %v3195 = vlaneseq
        %v3196 = vshrl.u32 %v3195, 7
        %v3197 = vsub.s32 7, %v3196
        %v3198 = vrot.slane %v2315, %v3197
        %v3199 = vlaneseq
        %v3200 = vshrl.u32 %v3199, 7
        %v3201 = vsub.s32 7, %v3200
        %v3202 = vrot.slane %v2316, %v3201
        %v3203 = vlaneseq
        %v3204 = vshrl.u32 %v3203, 7
        %v3205 = vsub.s32 7, %v3204
        %v3206 = vrot.slane %v2323, %v3205
        %v3207 = vlaneseq
        %v3208 = vshrl.u32 %v3207, 7
        %v3209 = vsub.s32 7, %v3208
        %v3210 = vrot.slane %v2324, %v3209
        %v3211 = vmul.f32 %v3193, %v3198
        %v3212 = vmul.f32 %v3193, %v3202
        %v3213 = vmul.f32 %v3193, %v3206
        %v3214 = vmul.f32 %v3193, %v3210
        %v3215 = vadd.f32 %v3187, %v3211
        %v3216 = vadd.f32 %v3188, %v3212
        %v3217 = vadd.f32 %v3189, %v3213
        %v3218 = vadd.f32 %v3190, %v3214
        %v3219 = vld [vmem:[%s897] sm:$0xf]
        %3221 = vset.pattern.permute.xlu0 0
        %3222 = vperm.xlu0 %3221, %v3219
        %v3223 = vpop.permute.xlu0 %3222
        %v3225 = vadd.f32 %v3215, %v3223
        %v3226 = vadd.f32 %v3216, %v3223
        %v3227 = vadd.f32 %v3217, %v3223
        %v3228 = vadd.f32 %v3218, %v3223
        %v3229 = vtanh.pop %v3225
        %v3230 = vtanh.pop %v3226
        %v3231 = vtanh.pop %v3227
        %v3232 = vtanh.pop %v3228
        %v3233 = vpack.c.bf16 %v3229, %v3229
        %v3234 = vpack.c.bf16 %v3230, %v3230
        %v3235 = vpack.c.bf16 %v3231, %v3231
        %v3236 = vpack.c.bf16 %v3232, %v3232
        %v3241 = vcombine.low %v3233, %v3234
        %v3243 = vunpack.c.l.s4 1983009808
        %v3244 = vunpack.c.0.s8 %v3243
        %v3245 = vlaneseq
        %v3246 = vshrl.u32 %v3245, 7
        %v3247 = vsub.s32 %v3244, %v3246
        %v3248 = vrot.slane %v3241, %v3247
        %v3249 = vcombine.low %v3235, %v3236
        %v3251 = vunpack.c.l.s4 1983009808
        %v3252 = vunpack.c.0.s8 %v3251
        %v3253 = vlaneseq
        %v3254 = vshrl.u32 %v3253, 7
        %v3255 = vsub.s32 %v3252, %v3254
        %v3256 = vrot.slane %v3249, %v3255
        %3259 = vst [vmem:[%s791] sm:$0xf] %v3248
        %3260 = vst [vmem:[%s791 + $0x4] sm:$0xf] %v3256
        %v3261 = vlaneseq
        %v3262 = vshrl.u32 %v3261, 7
        %v3263 = vsub.s32 0, %v3262
        %v3264 = vrot.slane %v3229, %v3263
        %v3265 = vlaneseq
        %v3266 = vshrl.u32 %v3265, 7
        %v3267 = vsub.s32 0, %v3266
        %v3268 = vrot.slane %v3230, %v3267
        %v3269 = vlaneseq
        %v3270 = vshrl.u32 %v3269, 7
        %v3271 = vsub.s32 0, %v3270
        %v3272 = vrot.slane %v3231, %v3271
        %v3273 = vlaneseq
        %v3274 = vshrl.u32 %v3273, 7
        %v3275 = vsub.s32 0, %v3274
        %v3276 = vrot.slane %v3232, %v3275
        %v3277 = vmul.f32 %v1002, %v3264
        %v3278 = vmul.f32 %v1002, %v3268
        %v3279 = vmul.f32 %v1007, %v3264
        %v3280 = vmul.f32 %v1007, %v3268
        %v3281 = vmul.f32 %v1002, %v3272
        %v3282 = vmul.f32 %v1002, %v3276
        %v3283 = vmul.f32 %v1007, %v3272
        %v3284 = vmul.f32 %v1007, %v3276
        %v3285 = vlaneseq
        %v3286 = vshrl.u32 %v3285, 7
        %v3287 = vsub.s32 1, %v3286
        %v3288 = vrot.slane %v3229, %v3287
        %v3289 = vlaneseq
        %v3290 = vshrl.u32 %v3289, 7
        %v3291 = vsub.s32 1, %v3290
        %v3292 = vrot.slane %v3230, %v3291
        %v3293 = vlaneseq
        %v3294 = vshrl.u32 %v3293, 7
        %v3295 = vsub.s32 1, %v3294
        %v3296 = vrot.slane %v3231, %v3295
        %v3297 = vlaneseq
        %v3298 = vshrl.u32 %v3297, 7
        %v3299 = vsub.s32 1, %v3298
        %v3300 = vrot.slane %v3232, %v3299
        %v3301 = vmul.f32 %v1057, %v3288
        %v3302 = vmul.f32 %v1057, %v3292
        %v3303 = vmul.f32 %v1061, %v3288
        %v3304 = vmul.f32 %v1061, %v3292
        %v3305 = vmul.f32 %v1057, %v3296
        %v3306 = vmul.f32 %v1057, %v3300
        %v3307 = vmul.f32 %v1061, %v3296
        %v3308 = vmul.f32 %v1061, %v3300
        %v3309 = vadd.f32 %v3277, %v3301
        %v3310 = vadd.f32 %v3278, %v3302
        %v3311 = vadd.f32 %v3279, %v3303
        %v3312 = vadd.f32 %v3280, %v3304
        %v3313 = vadd.f32 %v3281, %v3305
        %v3314 = vadd.f32 %v3282, %v3306
        %v3315 = vadd.f32 %v3283, %v3307
        %v3316 = vadd.f32 %v3284, %v3308
        %v3317 = vlaneseq
        %v3318 = vshrl.u32 %v3317, 7
        %v3319 = vsub.s32 2, %v3318
        %v3320 = vrot.slane %v3229, %v3319
        %v3321 = vlaneseq
        %v3322 = vshrl.u32 %v3321, 7
        %v3323 = vsub.s32 2, %v3322
        %v3324 = vrot.slane %v3230, %v3323
        %v3325 = vlaneseq
        %v3326 = vshrl.u32 %v3325, 7
        %v3327 = vsub.s32 2, %v3326
        %v3328 = vrot.slane %v3231, %v3327
        %v3329 = vlaneseq
        %v3330 = vshrl.u32 %v3329, 7
        %v3331 = vsub.s32 2, %v3330
        %v3332 = vrot.slane %v3232, %v3331
        %v3333 = vmul.f32 %v1117, %v3320
        %v3334 = vmul.f32 %v1117, %v3324
        %v3335 = vmul.f32 %v1121, %v3320
        %v3336 = vmul.f32 %v1121, %v3324
        %v3337 = vmul.f32 %v1117, %v3328
        %v3338 = vmul.f32 %v1117, %v3332
        %v3339 = vmul.f32 %v1121, %v3328
        %v3340 = vmul.f32 %v1121, %v3332
        %v3341 = vadd.f32 %v3309, %v3333
        %v3342 = vadd.f32 %v3310, %v3334
        %v3343 = vadd.f32 %v3311, %v3335
        %v3344 = vadd.f32 %v3312, %v3336
        %v3345 = vadd.f32 %v3313, %v3337
        %v3346 = vadd.f32 %v3314, %v3338
        %v3347 = vadd.f32 %v3315, %v3339
        %v3348 = vadd.f32 %v3316, %v3340
        %v3349 = vlaneseq
        %v3350 = vshrl.u32 %v3349, 7
        %v3351 = vsub.s32 3, %v3350
        %v3352 = vrot.slane %v3229, %v3351
        %v3353 = vlaneseq
        %v3354 = vshrl.u32 %v3353, 7
        %v3355 = vsub.s32 3, %v3354
        %v3356 = vrot.slane %v3230, %v3355
        %v3357 = vlaneseq
        %v3358 = vshrl.u32 %v3357, 7
        %v3359 = vsub.s32 3, %v3358
        %v3360 = vrot.slane %v3231, %v3359
        %v3361 = vlaneseq
        %v3362 = vshrl.u32 %v3361, 7
        %v3363 = vsub.s32 3, %v3362
        %v3364 = vrot.slane %v3232, %v3363
        %v3365 = vmul.f32 %v1177, %v3352
        %v3366 = vmul.f32 %v1177, %v3356
        %v3367 = vmul.f32 %v1181, %v3352
        %v3368 = vmul.f32 %v1181, %v3356
        %v3369 = vmul.f32 %v1177, %v3360
        %v3370 = vmul.f32 %v1177, %v3364
        %v3371 = vmul.f32 %v1181, %v3360
        %v3372 = vmul.f32 %v1181, %v3364
        %v3373 = vadd.f32 %v3341, %v3365
        %v3374 = vadd.f32 %v3342, %v3366
        %v3375 = vadd.f32 %v3343, %v3367
        %v3376 = vadd.f32 %v3344, %v3368
        %v3377 = vadd.f32 %v3345, %v3369
        %v3378 = vadd.f32 %v3346, %v3370
        %v3379 = vadd.f32 %v3347, %v3371
        %v3380 = vadd.f32 %v3348, %v3372
        %v3381 = vadd.f32 %v3373, %v1238
        %v3382 = vadd.f32 %v3374, %v1238
        %v3383 = vadd.f32 %v3375, %v1243
        %v3384 = vadd.f32 %v3376, %v1243
        %v3385 = vadd.f32 %v3377, %v1238
        %v3386 = vadd.f32 %v3378, %v1238
        %v3387 = vadd.f32 %v3379, %v1243
        %v3388 = vadd.f32 %v3380, %v1243
        %v3389 = vmax.f32 %v3381, 0.0
        %v3390 = vmax.f32 %v3382, 0.0
        %v3391 = vmax.f32 %v3383, 0.0
        %v3392 = vmax.f32 %v3384, 0.0
        %v3393 = vmax.f32 %v3385, 0.0
        %v3394 = vmax.f32 %v3386, 0.0
        %v3395 = vmax.f32 %v3387, 0.0
        %v3396 = vmax.f32 %v3388, 0.0
        %v3397 = vlaneseq
        %v3398 = vshrl.u32 %v3397, 7
        %v3399 = vsub.s32 0, %v3398
        %v3400 = vrot.slane %v3389, %v3399
        %v3401 = vlaneseq
        %v3402 = vshrl.u32 %v3401, 7
        %v3403 = vsub.s32 0, %v3402
        %v3404 = vrot.slane %v3390, %v3403
        %v3405 = vlaneseq
        %v3406 = vshrl.u32 %v3405, 7
        %v3407 = vsub.s32 0, %v3406
        %v3408 = vrot.slane %v3393, %v3407
        %v3409 = vlaneseq
        %v3410 = vshrl.u32 %v3409, 7
        %v3411 = vsub.s32 0, %v3410
        %v3412 = vrot.slane %v3394, %v3411
        %v3413 = vmul.f32 %v1264, %v3400
        %v3414 = vmul.f32 %v1264, %v3404
        %v3415 = vmul.f32 %v1269, %v3400
        %v3416 = vmul.f32 %v1269, %v3404
        %v3417 = vmul.f32 %v1274, %v3400
        %v3418 = vmul.f32 %v1274, %v3404
        %v3419 = vmul.f32 %v1279, %v3400
        %v3420 = vmul.f32 %v1279, %v3404
        %v3421 = vmul.f32 %v1264, %v3408
        %v3422 = vmul.f32 %v1264, %v3412
        %v3423 = vmul.f32 %v1269, %v3408
        %v3424 = vmul.f32 %v1269, %v3412
        %v3425 = vmul.f32 %v1274, %v3408
        %v3426 = vmul.f32 %v1274, %v3412
        %v3427 = vmul.f32 %v1279, %v3408
        %v3428 = vmul.f32 %v1279, %v3412
        %v3429 = vlaneseq
        %v3430 = vshrl.u32 %v3429, 7
        %v3431 = vsub.s32 1, %v3430
        %v3432 = vrot.slane %v3389, %v3431
        %v3433 = vlaneseq
        %v3434 = vshrl.u32 %v3433, 7
        %v3435 = vsub.s32 1, %v3434
        %v3436 = vrot.slane %v3390, %v3435
        %v3437 = vlaneseq
        %v3438 = vshrl.u32 %v3437, 7
        %v3439 = vsub.s32 1, %v3438
        %v3440 = vrot.slane %v3393, %v3439
        %v3441 = vlaneseq
        %v3442 = vshrl.u32 %v3441, 7
        %v3443 = vsub.s32 1, %v3442
        %v3444 = vrot.slane %v3394, %v3443
        %v3445 = vmul.f32 %v1315, %v3432
        %v3446 = vmul.f32 %v1315, %v3436
        %v3447 = vmul.f32 %v1319, %v3432
        %v3448 = vmul.f32 %v1319, %v3436
        %v3449 = vmul.f32 %v1323, %v3432
        %v3450 = vmul.f32 %v1323, %v3436
        %v3451 = vmul.f32 %v1327, %v3432
        %v3452 = vmul.f32 %v1327, %v3436
        %v3453 = vmul.f32 %v1315, %v3440
        %v3454 = vmul.f32 %v1315, %v3444
        %v3455 = vmul.f32 %v1319, %v3440
        %v3456 = vmul.f32 %v1319, %v3444
        %v3457 = vmul.f32 %v1323, %v3440
        %v3458 = vmul.f32 %v1323, %v3444
        %v3459 = vmul.f32 %v1327, %v3440
        %v3460 = vmul.f32 %v1327, %v3444
        %v3461 = vadd.f32 %v3413, %v3445
        %v3462 = vadd.f32 %v3414, %v3446
        %v3463 = vadd.f32 %v3415, %v3447
        %v3464 = vadd.f32 %v3416, %v3448
        %v3465 = vadd.f32 %v3417, %v3449
        %v3466 = vadd.f32 %v3418, %v3450
        %v3467 = vadd.f32 %v3419, %v3451
        %v3468 = vadd.f32 %v3420, %v3452
        %v3469 = vadd.f32 %v3421, %v3453
        %v3470 = vadd.f32 %v3422, %v3454
        %v3471 = vadd.f32 %v3423, %v3455
        %v3472 = vadd.f32 %v3424, %v3456
        %v3473 = vadd.f32 %v3425, %v3457
        %v3474 = vadd.f32 %v3426, %v3458
        %v3475 = vadd.f32 %v3427, %v3459
        %v3476 = vadd.f32 %v3428, %v3460
        %v3477 = vlaneseq
        %v3478 = vshrl.u32 %v3477, 7
        %v3479 = vsub.s32 2, %v3478
        %v3480 = vrot.slane %v3389, %v3479
        %v3481 = vlaneseq
        %v3482 = vshrl.u32 %v3481, 7
        %v3483 = vsub.s32 2, %v3482
        %v3484 = vrot.slane %v3390, %v3483
        %v3485 = vlaneseq
        %v3486 = vshrl.u32 %v3485, 7
        %v3487 = vsub.s32 2, %v3486
        %v3488 = vrot.slane %v3393, %v3487
        %v3489 = vlaneseq
        %v3490 = vshrl.u32 %v3489, 7
        %v3491 = vsub.s32 2, %v3490
        %v3492 = vrot.slane %v3394, %v3491
        %v3493 = vmul.f32 %v1379, %v3480
        %v3494 = vmul.f32 %v1379, %v3484
        %v3495 = vmul.f32 %v1383, %v3480
        %v3496 = vmul.f32 %v1383, %v3484
        %v3497 = vmul.f32 %v1387, %v3480
        %v3498 = vmul.f32 %v1387, %v3484
        %v3499 = vmul.f32 %v1391, %v3480
        %v3500 = vmul.f32 %v1391, %v3484
        %v3501 = vmul.f32 %v1379, %v3488
        %v3502 = vmul.f32 %v1379, %v3492
        %v3503 = vmul.f32 %v1383, %v3488
        %v3504 = vmul.f32 %v1383, %v3492
        %v3505 = vmul.f32 %v1387, %v3488
        %v3506 = vmul.f32 %v1387, %v3492
        %v3507 = vmul.f32 %v1391, %v3488
        %v3508 = vmul.f32 %v1391, %v3492
        %v3509 = vadd.f32 %v3461, %v3493
        %v3510 = vadd.f32 %v3462, %v3494
        %v3511 = vadd.f32 %v3463, %v3495
        %v3512 = vadd.f32 %v3464, %v3496
        %v3513 = vadd.f32 %v3465, %v3497
        %v3514 = vadd.f32 %v3466, %v3498
        %v3515 = vadd.f32 %v3467, %v3499
        %v3516 = vadd.f32 %v3468, %v3500
        %v3517 = vadd.f32 %v3469, %v3501
        %v3518 = vadd.f32 %v3470, %v3502
        %v3519 = vadd.f32 %v3471, %v3503
        %v3520 = vadd.f32 %v3472, %v3504
        %v3521 = vadd.f32 %v3473, %v3505
        %v3522 = vadd.f32 %v3474, %v3506
        %v3523 = vadd.f32 %v3475, %v3507
        %v3524 = vadd.f32 %v3476, %v3508
        %v3525 = vlaneseq
        %v3526 = vshrl.u32 %v3525, 7
        %v3527 = vsub.s32 3, %v3526
        %v3528 = vrot.slane %v3389, %v3527
        %v3529 = vlaneseq
        %v3530 = vshrl.u32 %v3529, 7
        %v3531 = vsub.s32 3, %v3530
        %v3532 = vrot.slane %v3390, %v3531
        %v3533 = vlaneseq
        %v3534 = vshrl.u32 %v3533, 7
        %v3535 = vsub.s32 3, %v3534
        %v3536 = vrot.slane %v3393, %v3535
        %v3537 = vlaneseq
        %v3538 = vshrl.u32 %v3537, 7
        %v3539 = vsub.s32 3, %v3538
        %v3540 = vrot.slane %v3394, %v3539
        %v3541 = vmul.f32 %v1443, %v3528
        %v3542 = vmul.f32 %v1443, %v3532
        %v3543 = vmul.f32 %v1447, %v3528
        %v3544 = vmul.f32 %v1447, %v3532
        %v3545 = vmul.f32 %v1451, %v3528
        %v3546 = vmul.f32 %v1451, %v3532
        %v3547 = vmul.f32 %v1455, %v3528
        %v3548 = vmul.f32 %v1455, %v3532
        %v3549 = vmul.f32 %v1443, %v3536
        %v3550 = vmul.f32 %v1443, %v3540
        %v3551 = vmul.f32 %v1447, %v3536
        %v3552 = vmul.f32 %v1447, %v3540
        %v3553 = vmul.f32 %v1451, %v3536
        %v3554 = vmul.f32 %v1451, %v3540
        %v3555 = vmul.f32 %v1455, %v3536
        %v3556 = vmul.f32 %v1455, %v3540
        %v3557 = vadd.f32 %v3509, %v3541
        %v3558 = vadd.f32 %v3510, %v3542
        %v3559 = vadd.f32 %v3511, %v3543
        %v3560 = vadd.f32 %v3512, %v3544
        %v3561 = vadd.f32 %v3513, %v3545
        %v3562 = vadd.f32 %v3514, %v3546
        %v3563 = vadd.f32 %v3515, %v3547
        %v3564 = vadd.f32 %v3516, %v3548
        %v3565 = vadd.f32 %v3517, %v3549
        %v3566 = vadd.f32 %v3518, %v3550
        %v3567 = vadd.f32 %v3519, %v3551
        %v3568 = vadd.f32 %v3520, %v3552
        %v3569 = vadd.f32 %v3521, %v3553
        %v3570 = vadd.f32 %v3522, %v3554
        %v3571 = vadd.f32 %v3523, %v3555
        %v3572 = vadd.f32 %v3524, %v3556
        %v3573 = vlaneseq
        %v3574 = vshrl.u32 %v3573, 7
        %v3575 = vsub.s32 4, %v3574
        %v3576 = vrot.slane %v3389, %v3575
        %v3577 = vlaneseq
        %v3578 = vshrl.u32 %v3577, 7
        %v3579 = vsub.s32 4, %v3578
        %v3580 = vrot.slane %v3390, %v3579
        %v3581 = vlaneseq
        %v3582 = vshrl.u32 %v3581, 7
        %v3583 = vsub.s32 4, %v3582
        %v3584 = vrot.slane %v3393, %v3583
        %v3585 = vlaneseq
        %v3586 = vshrl.u32 %v3585, 7
        %v3587 = vsub.s32 4, %v3586
        %v3588 = vrot.slane %v3394, %v3587
        %v3589 = vmul.f32 %v1507, %v3576
        %v3590 = vmul.f32 %v1507, %v3580
        %v3591 = vmul.f32 %v1511, %v3576
        %v3592 = vmul.f32 %v1511, %v3580
        %v3593 = vmul.f32 %v1515, %v3576
        %v3594 = vmul.f32 %v1515, %v3580
        %v3595 = vmul.f32 %v1519, %v3576
        %v3596 = vmul.f32 %v1519, %v3580
        %v3597 = vmul.f32 %v1507, %v3584
        %v3598 = vmul.f32 %v1507, %v3588
        %v3599 = vmul.f32 %v1511, %v3584
        %v3600 = vmul.f32 %v1511, %v3588
        %v3601 = vmul.f32 %v1515, %v3584
        %v3602 = vmul.f32 %v1515, %v3588
        %v3603 = vmul.f32 %v1519, %v3584
        %v3604 = vmul.f32 %v1519, %v3588
        %v3605 = vadd.f32 %v3557, %v3589
        %v3606 = vadd.f32 %v3558, %v3590
        %v3607 = vadd.f32 %v3559, %v3591
        %v3608 = vadd.f32 %v3560, %v3592
        %v3609 = vadd.f32 %v3561, %v3593
        %v3610 = vadd.f32 %v3562, %v3594
        %v3611 = vadd.f32 %v3563, %v3595
        %v3612 = vadd.f32 %v3564, %v3596
        %v3613 = vadd.f32 %v3565, %v3597
        %v3614 = vadd.f32 %v3566, %v3598
        %v3615 = vadd.f32 %v3567, %v3599
        %v3616 = vadd.f32 %v3568, %v3600
        %v3617 = vadd.f32 %v3569, %v3601
        %v3618 = vadd.f32 %v3570, %v3602
        %v3619 = vadd.f32 %v3571, %v3603
        %v3620 = vadd.f32 %v3572, %v3604
        %v3621 = vlaneseq
        %v3622 = vshrl.u32 %v3621, 7
        %v3623 = vsub.s32 5, %v3622
        %v3624 = vrot.slane %v3389, %v3623
        %v3625 = vlaneseq
        %v3626 = vshrl.u32 %v3625, 7
        %v3627 = vsub.s32 5, %v3626
        %v3628 = vrot.slane %v3390, %v3627
        %v3629 = vlaneseq
        %v3630 = vshrl.u32 %v3629, 7
        %v3631 = vsub.s32 5, %v3630
        %v3632 = vrot.slane %v3393, %v3631
        %v3633 = vlaneseq
        %v3634 = vshrl.u32 %v3633, 7
        %v3635 = vsub.s32 5, %v3634
        %v3636 = vrot.slane %v3394, %v3635
        %v3637 = vmul.f32 %v1571, %v3624
        %v3638 = vmul.f32 %v1571, %v3628
        %v3639 = vmul.f32 %v1575, %v3624
        %v3640 = vmul.f32 %v1575, %v3628
        %v3641 = vmul.f32 %v1579, %v3624
        %v3642 = vmul.f32 %v1579, %v3628
        %v3643 = vmul.f32 %v1583, %v3624
        %v3644 = vmul.f32 %v1583, %v3628
        %v3645 = vmul.f32 %v1571, %v3632
        %v3646 = vmul.f32 %v1571, %v3636
        %v3647 = vmul.f32 %v1575, %v3632
        %v3648 = vmul.f32 %v1575, %v3636
        %v3649 = vmul.f32 %v1579, %v3632
        %v3650 = vmul.f32 %v1579, %v3636
        %v3651 = vmul.f32 %v1583, %v3632
        %v3652 = vmul.f32 %v1583, %v3636
        %v3653 = vadd.f32 %v3605, %v3637
        %v3654 = vadd.f32 %v3606, %v3638
        %v3655 = vadd.f32 %v3607, %v3639
        %v3656 = vadd.f32 %v3608, %v3640
        %v3657 = vadd.f32 %v3609, %v3641
        %v3658 = vadd.f32 %v3610, %v3642
        %v3659 = vadd.f32 %v3611, %v3643
        %v3660 = vadd.f32 %v3612, %v3644
        %v3661 = vadd.f32 %v3613, %v3645
        %v3662 = vadd.f32 %v3614, %v3646
        %v3663 = vadd.f32 %v3615, %v3647
        %v3664 = vadd.f32 %v3616, %v3648
        %v3665 = vadd.f32 %v3617, %v3649
        %v3666 = vadd.f32 %v3618, %v3650
        %v3667 = vadd.f32 %v3619, %v3651
        %v3668 = vadd.f32 %v3620, %v3652
        %v3669 = vlaneseq
        %v3670 = vshrl.u32 %v3669, 7
        %v3671 = vsub.s32 6, %v3670
        %v3672 = vrot.slane %v3389, %v3671
        %v3673 = vlaneseq
        %v3674 = vshrl.u32 %v3673, 7
        %v3675 = vsub.s32 6, %v3674
        %v3676 = vrot.slane %v3390, %v3675
        %v3677 = vlaneseq
        %v3678 = vshrl.u32 %v3677, 7
        %v3679 = vsub.s32 6, %v3678
        %v3680 = vrot.slane %v3393, %v3679
        %v3681 = vlaneseq
        %v3682 = vshrl.u32 %v3681, 7
        %v3683 = vsub.s32 6, %v3682
        %v3684 = vrot.slane %v3394, %v3683
        %v3685 = vmul.f32 %v1635, %v3672
        %v3686 = vmul.f32 %v1635, %v3676
        %v3687 = vmul.f32 %v1639, %v3672
        %v3688 = vmul.f32 %v1639, %v3676
        %v3689 = vmul.f32 %v1643, %v3672
        %v3690 = vmul.f32 %v1643, %v3676
        %v3691 = vmul.f32 %v1647, %v3672
        %v3692 = vmul.f32 %v1647, %v3676
        %v3693 = vmul.f32 %v1635, %v3680
        %v3694 = vmul.f32 %v1635, %v3684
        %v3695 = vmul.f32 %v1639, %v3680
        %v3696 = vmul.f32 %v1639, %v3684
        %v3697 = vmul.f32 %v1643, %v3680
        %v3698 = vmul.f32 %v1643, %v3684
        %v3699 = vmul.f32 %v1647, %v3680
        %v3700 = vmul.f32 %v1647, %v3684
        %v3701 = vadd.f32 %v3653, %v3685
        %v3702 = vadd.f32 %v3654, %v3686
        %v3703 = vadd.f32 %v3655, %v3687
        %v3704 = vadd.f32 %v3656, %v3688
        %v3705 = vadd.f32 %v3657, %v3689
        %v3706 = vadd.f32 %v3658, %v3690
        %v3707 = vadd.f32 %v3659, %v3691
        %v3708 = vadd.f32 %v3660, %v3692
        %v3709 = vadd.f32 %v3661, %v3693
        %v3710 = vadd.f32 %v3662, %v3694
        %v3711 = vadd.f32 %v3663, %v3695
        %v3712 = vadd.f32 %v3664, %v3696
        %v3713 = vadd.f32 %v3665, %v3697
        %v3714 = vadd.f32 %v3666, %v3698
        %v3715 = vadd.f32 %v3667, %v3699
        %v3716 = vadd.f32 %v3668, %v3700
        %v3717 = vlaneseq
        %v3718 = vshrl.u32 %v3717, 7
        %v3719 = vsub.s32 7, %v3718
        %v3720 = vrot.slane %v3389, %v3719
        %v3721 = vlaneseq
        %v3722 = vshrl.u32 %v3721, 7
        %v3723 = vsub.s32 7, %v3722
        %v3724 = vrot.slane %v3390, %v3723
        %v3725 = vlaneseq
        %v3726 = vshrl.u32 %v3725, 7
        %v3727 = vsub.s32 7, %v3726
        %v3728 = vrot.slane %v3393, %v3727
        %v3729 = vlaneseq
        %v3730 = vshrl.u32 %v3729, 7
        %v3731 = vsub.s32 7, %v3730
        %v3732 = vrot.slane %v3394, %v3731
        %v3733 = vmul.f32 %v1699, %v3720
        %v3734 = vmul.f32 %v1699, %v3724
        %v3735 = vmul.f32 %v1703, %v3720
        %v3736 = vmul.f32 %v1703, %v3724
        %v3737 = vmul.f32 %v1707, %v3720
        %v3738 = vmul.f32 %v1707, %v3724
        %v3739 = vmul.f32 %v1711, %v3720
        %v3740 = vmul.f32 %v1711, %v3724
        %v3741 = vmul.f32 %v1699, %v3728
        %v3742 = vmul.f32 %v1699, %v3732
        %v3743 = vmul.f32 %v1703, %v3728
        %v3744 = vmul.f32 %v1703, %v3732
        %v3745 = vmul.f32 %v1707, %v3728
        %v3746 = vmul.f32 %v1707, %v3732
        %v3747 = vmul.f32 %v1711, %v3728
        %v3748 = vmul.f32 %v1711, %v3732
        %v3749 = vadd.f32 %v3701, %v3733
        %v3750 = vadd.f32 %v3702, %v3734
        %v3751 = vadd.f32 %v3703, %v3735
        %v3752 = vadd.f32 %v3704, %v3736
        %v3753 = vadd.f32 %v3705, %v3737
        %v3754 = vadd.f32 %v3706, %v3738
        %v3755 = vadd.f32 %v3707, %v3739
        %v3756 = vadd.f32 %v3708, %v3740
        %v3757 = vadd.f32 %v3709, %v3741
        %v3758 = vadd.f32 %v3710, %v3742
        %v3759 = vadd.f32 %v3711, %v3743
        %v3760 = vadd.f32 %v3712, %v3744
        %v3761 = vadd.f32 %v3713, %v3745
        %v3762 = vadd.f32 %v3714, %v3746
        %v3763 = vadd.f32 %v3715, %v3747
        %v3764 = vadd.f32 %v3716, %v3748
        %v3765 = vlaneseq
        %v3766 = vshrl.u32 %v3765, 7
        %v3767 = vsub.s32 0, %v3766
        %v3768 = vrot.slane %v3391, %v3767
        %v3769 = vlaneseq
        %v3770 = vshrl.u32 %v3769, 7
        %v3771 = vsub.s32 0, %v3770
        %v3772 = vrot.slane %v3392, %v3771
        %v3773 = vlaneseq
        %v3774 = vshrl.u32 %v3773, 7
        %v3775 = vsub.s32 0, %v3774
        %v3776 = vrot.slane %v3395, %v3775
        %v3777 = vlaneseq
        %v3778 = vshrl.u32 %v3777, 7
        %v3779 = vsub.s32 0, %v3778
        %v3780 = vrot.slane %v3396, %v3779
        %v3781 = vmul.f32 %v1763, %v3768
        %v3782 = vmul.f32 %v1763, %v3772
        %v3783 = vmul.f32 %v1767, %v3768
        %v3784 = vmul.f32 %v1767, %v3772
        %v3785 = vmul.f32 %v1771, %v3768
        %v3786 = vmul.f32 %v1771, %v3772
        %v3787 = vmul.f32 %v1775, %v3768
        %v3788 = vmul.f32 %v1775, %v3772
        %v3789 = vmul.f32 %v1763, %v3776
        %v3790 = vmul.f32 %v1763, %v3780
        %v3791 = vmul.f32 %v1767, %v3776
        %v3792 = vmul.f32 %v1767, %v3780
        %v3793 = vmul.f32 %v1771, %v3776
        %v3794 = vmul.f32 %v1771, %v3780
        %v3795 = vmul.f32 %v1775, %v3776
        %v3796 = vmul.f32 %v1775, %v3780
        %v3797 = vadd.f32 %v3749, %v3781
        %v3798 = vadd.f32 %v3750, %v3782
        %v3799 = vadd.f32 %v3751, %v3783
        %v3800 = vadd.f32 %v3752, %v3784
        %v3801 = vadd.f32 %v3753, %v3785
        %v3802 = vadd.f32 %v3754, %v3786
        %v3803 = vadd.f32 %v3755, %v3787
        %v3804 = vadd.f32 %v3756, %v3788
        %v3805 = vadd.f32 %v3757, %v3789
        %v3806 = vadd.f32 %v3758, %v3790
        %v3807 = vadd.f32 %v3759, %v3791
        %v3808 = vadd.f32 %v3760, %v3792
        %v3809 = vadd.f32 %v3761, %v3793
        %v3810 = vadd.f32 %v3762, %v3794
        %v3811 = vadd.f32 %v3763, %v3795
        %v3812 = vadd.f32 %v3764, %v3796
        %v3813 = vlaneseq
        %v3814 = vshrl.u32 %v3813, 7
        %v3815 = vsub.s32 1, %v3814
        %v3816 = vrot.slane %v3391, %v3815
        %v3817 = vlaneseq
        %v3818 = vshrl.u32 %v3817, 7
        %v3819 = vsub.s32 1, %v3818
        %v3820 = vrot.slane %v3392, %v3819
        %v3821 = vlaneseq
        %v3822 = vshrl.u32 %v3821, 7
        %v3823 = vsub.s32 1, %v3822
        %v3824 = vrot.slane %v3395, %v3823
        %v3825 = vlaneseq
        %v3826 = vshrl.u32 %v3825, 7
        %v3827 = vsub.s32 1, %v3826
        %v3828 = vrot.slane %v3396, %v3827
        %v3829 = vmul.f32 %v1827, %v3816
        %v3830 = vmul.f32 %v1827, %v3820
        %v3831 = vmul.f32 %v1831, %v3816
        %v3832 = vmul.f32 %v1831, %v3820
        %v3833 = vmul.f32 %v1835, %v3816
        %v3834 = vmul.f32 %v1835, %v3820
        %v3835 = vmul.f32 %v1839, %v3816
        %v3836 = vmul.f32 %v1839, %v3820
        %v3837 = vmul.f32 %v1827, %v3824
        %v3838 = vmul.f32 %v1827, %v3828
        %v3839 = vmul.f32 %v1831, %v3824
        %v3840 = vmul.f32 %v1831, %v3828
        %v3841 = vmul.f32 %v1835, %v3824
        %v3842 = vmul.f32 %v1835, %v3828
        %v3843 = vmul.f32 %v1839, %v3824
        %v3844 = vmul.f32 %v1839, %v3828
        %v3845 = vadd.f32 %v3797, %v3829
        %v3846 = vadd.f32 %v3798, %v3830
        %v3847 = vadd.f32 %v3799, %v3831
        %v3848 = vadd.f32 %v3800, %v3832
        %v3849 = vadd.f32 %v3801, %v3833
        %v3850 = vadd.f32 %v3802, %v3834
        %v3851 = vadd.f32 %v3803, %v3835
        %v3852 = vadd.f32 %v3804, %v3836
        %v3853 = vadd.f32 %v3805, %v3837
        %v3854 = vadd.f32 %v3806, %v3838
        %v3855 = vadd.f32 %v3807, %v3839
        %v3856 = vadd.f32 %v3808, %v3840
        %v3857 = vadd.f32 %v3809, %v3841
        %v3858 = vadd.f32 %v3810, %v3842
        %v3859 = vadd.f32 %v3811, %v3843
        %v3860 = vadd.f32 %v3812, %v3844
        %v3861 = vlaneseq
        %v3862 = vshrl.u32 %v3861, 7
        %v3863 = vsub.s32 2, %v3862
        %v3864 = vrot.slane %v3391, %v3863
        %v3865 = vlaneseq
        %v3866 = vshrl.u32 %v3865, 7
        %v3867 = vsub.s32 2, %v3866
        %v3868 = vrot.slane %v3392, %v3867
        %v3869 = vlaneseq
        %v3870 = vshrl.u32 %v3869, 7
        %v3871 = vsub.s32 2, %v3870
        %v3872 = vrot.slane %v3395, %v3871
        %v3873 = vlaneseq
        %v3874 = vshrl.u32 %v3873, 7
        %v3875 = vsub.s32 2, %v3874
        %v3876 = vrot.slane %v3396, %v3875
        %v3877 = vmul.f32 %v1891, %v3864
        %v3878 = vmul.f32 %v1891, %v3868
        %v3879 = vmul.f32 %v1895, %v3864
        %v3880 = vmul.f32 %v1895, %v3868
        %v3881 = vmul.f32 %v1899, %v3864
        %v3882 = vmul.f32 %v1899, %v3868
        %v3883 = vmul.f32 %v1903, %v3864
        %v3884 = vmul.f32 %v1903, %v3868
        %v3885 = vmul.f32 %v1891, %v3872
        %v3886 = vmul.f32 %v1891, %v3876
        %v3887 = vmul.f32 %v1895, %v3872
        %v3888 = vmul.f32 %v1895, %v3876
        %v3889 = vmul.f32 %v1899, %v3872
        %v3890 = vmul.f32 %v1899, %v3876
        %v3891 = vmul.f32 %v1903, %v3872
        %v3892 = vmul.f32 %v1903, %v3876
        %v3893 = vadd.f32 %v3845, %v3877
        %v3894 = vadd.f32 %v3846, %v3878
        %v3895 = vadd.f32 %v3847, %v3879
        %v3896 = vadd.f32 %v3848, %v3880
        %v3897 = vadd.f32 %v3849, %v3881
        %v3898 = vadd.f32 %v3850, %v3882
        %v3899 = vadd.f32 %v3851, %v3883
        %v3900 = vadd.f32 %v3852, %v3884
        %v3901 = vadd.f32 %v3853, %v3885
        %v3902 = vadd.f32 %v3854, %v3886
        %v3903 = vadd.f32 %v3855, %v3887
        %v3904 = vadd.f32 %v3856, %v3888
        %v3905 = vadd.f32 %v3857, %v3889
        %v3906 = vadd.f32 %v3858, %v3890
        %v3907 = vadd.f32 %v3859, %v3891
        %v3908 = vadd.f32 %v3860, %v3892
        %v3909 = vlaneseq
        %v3910 = vshrl.u32 %v3909, 7
        %v3911 = vsub.s32 3, %v3910
        %v3912 = vrot.slane %v3391, %v3911
        %v3913 = vlaneseq
        %v3914 = vshrl.u32 %v3913, 7
        %v3915 = vsub.s32 3, %v3914
        %v3916 = vrot.slane %v3392, %v3915
        %v3917 = vlaneseq
        %v3918 = vshrl.u32 %v3917, 7
        %v3919 = vsub.s32 3, %v3918
        %v3920 = vrot.slane %v3395, %v3919
        %v3921 = vlaneseq
        %v3922 = vshrl.u32 %v3921, 7
        %v3923 = vsub.s32 3, %v3922
        %v3924 = vrot.slane %v3396, %v3923
        %v3925 = vmul.f32 %v1955, %v3912
        %v3926 = vmul.f32 %v1955, %v3916
        %v3927 = vmul.f32 %v1959, %v3912
        %v3928 = vmul.f32 %v1959, %v3916
        %v3929 = vmul.f32 %v1963, %v3912
        %v3930 = vmul.f32 %v1963, %v3916
        %v3931 = vmul.f32 %v1967, %v3912
        %v3932 = vmul.f32 %v1967, %v3916
        %v3933 = vmul.f32 %v1955, %v3920
        %v3934 = vmul.f32 %v1955, %v3924
        %v3935 = vmul.f32 %v1959, %v3920
        %v3936 = vmul.f32 %v1959, %v3924
        %v3937 = vmul.f32 %v1963, %v3920
        %v3938 = vmul.f32 %v1963, %v3924
        %v3939 = vmul.f32 %v1967, %v3920
        %v3940 = vmul.f32 %v1967, %v3924
        %v3941 = vadd.f32 %v3893, %v3925
        %v3942 = vadd.f32 %v3894, %v3926
        %v3943 = vadd.f32 %v3895, %v3927
        %v3944 = vadd.f32 %v3896, %v3928
        %v3945 = vadd.f32 %v3897, %v3929
        %v3946 = vadd.f32 %v3898, %v3930
        %v3947 = vadd.f32 %v3899, %v3931
        %v3948 = vadd.f32 %v3900, %v3932
        %v3949 = vadd.f32 %v3901, %v3933
        %v3950 = vadd.f32 %v3902, %v3934
        %v3951 = vadd.f32 %v3903, %v3935
        %v3952 = vadd.f32 %v3904, %v3936
        %v3953 = vadd.f32 %v3905, %v3937
        %v3954 = vadd.f32 %v3906, %v3938
        %v3955 = vadd.f32 %v3907, %v3939
        %v3956 = vadd.f32 %v3908, %v3940
        %v3957 = vlaneseq
        %v3958 = vshrl.u32 %v3957, 7
        %v3959 = vsub.s32 4, %v3958
        %v3960 = vrot.slane %v3391, %v3959
        %v3961 = vlaneseq
        %v3962 = vshrl.u32 %v3961, 7
        %v3963 = vsub.s32 4, %v3962
        %v3964 = vrot.slane %v3392, %v3963
        %v3965 = vlaneseq
        %v3966 = vshrl.u32 %v3965, 7
        %v3967 = vsub.s32 4, %v3966
        %v3968 = vrot.slane %v3395, %v3967
        %v3969 = vlaneseq
        %v3970 = vshrl.u32 %v3969, 7
        %v3971 = vsub.s32 4, %v3970
        %v3972 = vrot.slane %v3396, %v3971
        %v3973 = vmul.f32 %v2019, %v3960
        %v3974 = vmul.f32 %v2019, %v3964
        %v3975 = vmul.f32 %v2023, %v3960
        %v3976 = vmul.f32 %v2023, %v3964
        %v3977 = vmul.f32 %v2027, %v3960
        %v3978 = vmul.f32 %v2027, %v3964
        %v3979 = vmul.f32 %v2031, %v3960
        %v3980 = vmul.f32 %v2031, %v3964
        %v3981 = vmul.f32 %v2019, %v3968
        %v3982 = vmul.f32 %v2019, %v3972
        %v3983 = vmul.f32 %v2023, %v3968
        %v3984 = vmul.f32 %v2023, %v3972
        %v3985 = vmul.f32 %v2027, %v3968
        %v3986 = vmul.f32 %v2027, %v3972
        %v3987 = vmul.f32 %v2031, %v3968
        %v3988 = vmul.f32 %v2031, %v3972
        %v3989 = vadd.f32 %v3941, %v3973
        %v3990 = vadd.f32 %v3942, %v3974
        %v3991 = vadd.f32 %v3943, %v3975
        %v3992 = vadd.f32 %v3944, %v3976
        %v3993 = vadd.f32 %v3945, %v3977
        %v3994 = vadd.f32 %v3946, %v3978
        %v3995 = vadd.f32 %v3947, %v3979
        %v3996 = vadd.f32 %v3948, %v3980
        %v3997 = vadd.f32 %v3949, %v3981
        %v3998 = vadd.f32 %v3950, %v3982
        %v3999 = vadd.f32 %v3951, %v3983
        %v4000 = vadd.f32 %v3952, %v3984
        %v4001 = vadd.f32 %v3953, %v3985
        %v4002 = vadd.f32 %v3954, %v3986
        %v4003 = vadd.f32 %v3955, %v3987
        %v4004 = vadd.f32 %v3956, %v3988
        %v4005 = vlaneseq
        %v4006 = vshrl.u32 %v4005, 7
        %v4007 = vsub.s32 5, %v4006
        %v4008 = vrot.slane %v3391, %v4007
        %v4009 = vlaneseq
        %v4010 = vshrl.u32 %v4009, 7
        %v4011 = vsub.s32 5, %v4010
        %v4012 = vrot.slane %v3392, %v4011
        %v4013 = vlaneseq
        %v4014 = vshrl.u32 %v4013, 7
        %v4015 = vsub.s32 5, %v4014
        %v4016 = vrot.slane %v3395, %v4015
        %v4017 = vlaneseq
        %v4018 = vshrl.u32 %v4017, 7
        %v4019 = vsub.s32 5, %v4018
        %v4020 = vrot.slane %v3396, %v4019
        %v4021 = vmul.f32 %v2083, %v4008
        %v4022 = vmul.f32 %v2083, %v4012
        %v4023 = vmul.f32 %v2087, %v4008
        %v4024 = vmul.f32 %v2087, %v4012
        %v4025 = vmul.f32 %v2091, %v4008
        %v4026 = vmul.f32 %v2091, %v4012
        %v4027 = vmul.f32 %v2095, %v4008
        %v4028 = vmul.f32 %v2095, %v4012
        %v4029 = vmul.f32 %v2083, %v4016
        %v4030 = vmul.f32 %v2083, %v4020
        %v4031 = vmul.f32 %v2087, %v4016
        %v4032 = vmul.f32 %v2087, %v4020
        %v4033 = vmul.f32 %v2091, %v4016
        %v4034 = vmul.f32 %v2091, %v4020
        %v4035 = vmul.f32 %v2095, %v4016
        %v4036 = vmul.f32 %v2095, %v4020
        %v4037 = vadd.f32 %v3989, %v4021
        %v4038 = vadd.f32 %v3990, %v4022
        %v4039 = vadd.f32 %v3991, %v4023
        %v4040 = vadd.f32 %v3992, %v4024
        %v4041 = vadd.f32 %v3993, %v4025
        %v4042 = vadd.f32 %v3994, %v4026
        %v4043 = vadd.f32 %v3995, %v4027
        %v4044 = vadd.f32 %v3996, %v4028
        %v4045 = vadd.f32 %v3997, %v4029
        %v4046 = vadd.f32 %v3998, %v4030
        %v4047 = vadd.f32 %v3999, %v4031
        %v4048 = vadd.f32 %v4000, %v4032
        %v4049 = vadd.f32 %v4001, %v4033
        %v4050 = vadd.f32 %v4002, %v4034
        %v4051 = vadd.f32 %v4003, %v4035
        %v4052 = vadd.f32 %v4004, %v4036
        %v4053 = vlaneseq
        %v4054 = vshrl.u32 %v4053, 7
        %v4055 = vsub.s32 6, %v4054
        %v4056 = vrot.slane %v3391, %v4055
        %v4057 = vlaneseq
        %v4058 = vshrl.u32 %v4057, 7
        %v4059 = vsub.s32 6, %v4058
        %v4060 = vrot.slane %v3392, %v4059
        %v4061 = vlaneseq
        %v4062 = vshrl.u32 %v4061, 7
        %v4063 = vsub.s32 6, %v4062
        %v4064 = vrot.slane %v3395, %v4063
        %v4065 = vlaneseq
        %v4066 = vshrl.u32 %v4065, 7
        %v4067 = vsub.s32 6, %v4066
        %v4068 = vrot.slane %v3396, %v4067
        %v4069 = vmul.f32 %v2147, %v4056
        %v4070 = vmul.f32 %v2147, %v4060
        %v4071 = vmul.f32 %v2151, %v4056
        %v4072 = vmul.f32 %v2151, %v4060
        %v4073 = vmul.f32 %v2155, %v4056
        %v4074 = vmul.f32 %v2155, %v4060
        %v4075 = vmul.f32 %v2159, %v4056
        %v4076 = vmul.f32 %v2159, %v4060
        %v4077 = vmul.f32 %v2147, %v4064
        %v4078 = vmul.f32 %v2147, %v4068
        %v4079 = vmul.f32 %v2151, %v4064
        %v4080 = vmul.f32 %v2151, %v4068
        %v4081 = vmul.f32 %v2155, %v4064
        %v4082 = vmul.f32 %v2155, %v4068
        %v4083 = vmul.f32 %v2159, %v4064
        %v4084 = vmul.f32 %v2159, %v4068
        %v4085 = vadd.f32 %v4037, %v4069
        %v4086 = vadd.f32 %v4038, %v4070
        %v4087 = vadd.f32 %v4039, %v4071
        %v4088 = vadd.f32 %v4040, %v4072
        %v4089 = vadd.f32 %v4041, %v4073
        %v4090 = vadd.f32 %v4042, %v4074
        %v4091 = vadd.f32 %v4043, %v4075
        %v4092 = vadd.f32 %v4044, %v4076
        %v4093 = vadd.f32 %v4045, %v4077
        %v4094 = vadd.f32 %v4046, %v4078
        %v4095 = vadd.f32 %v4047, %v4079
        %v4096 = vadd.f32 %v4048, %v4080
        %v4097 = vadd.f32 %v4049, %v4081
        %v4098 = vadd.f32 %v4050, %v4082
        %v4099 = vadd.f32 %v4051, %v4083
        %v4100 = vadd.f32 %v4052, %v4084
        %v4101 = vlaneseq
        %v4102 = vshrl.u32 %v4101, 7
        %v4103 = vsub.s32 7, %v4102
        %v4104 = vrot.slane %v3391, %v4103
        %v4105 = vlaneseq
        %v4106 = vshrl.u32 %v4105, 7
        %v4107 = vsub.s32 7, %v4106
        %v4108 = vrot.slane %v3392, %v4107
        %v4109 = vlaneseq
        %v4110 = vshrl.u32 %v4109, 7
        %v4111 = vsub.s32 7, %v4110
        %v4112 = vrot.slane %v3395, %v4111
        %v4113 = vlaneseq
        %v4114 = vshrl.u32 %v4113, 7
        %v4115 = vsub.s32 7, %v4114
        %v4116 = vrot.slane %v3396, %v4115
        %v4117 = vmul.f32 %v2211, %v4104
        %v4118 = vmul.f32 %v2211, %v4108
        %v4119 = vmul.f32 %v2215, %v4104
        %v4120 = vmul.f32 %v2215, %v4108
        %v4121 = vmul.f32 %v2219, %v4104
        %v4122 = vmul.f32 %v2219, %v4108
        %v4123 = vmul.f32 %v2223, %v4104
        %v4124 = vmul.f32 %v2223, %v4108
        %v4125 = vmul.f32 %v2211, %v4112
        %v4126 = vmul.f32 %v2211, %v4116
        %v4127 = vmul.f32 %v2215, %v4112
        %v4128 = vmul.f32 %v2215, %v4116
        %v4129 = vmul.f32 %v2219, %v4112
        %v4130 = vmul.f32 %v2219, %v4116
        %v4131 = vmul.f32 %v2223, %v4112
        %v4132 = vmul.f32 %v2223, %v4116
        %v4133 = vadd.f32 %v4085, %v4117
        %v4134 = vadd.f32 %v4086, %v4118
        %v4135 = vadd.f32 %v4087, %v4119
        %v4136 = vadd.f32 %v4088, %v4120
        %v4137 = vadd.f32 %v4089, %v4121
        %v4138 = vadd.f32 %v4090, %v4122
        %v4139 = vadd.f32 %v4091, %v4123
        %v4140 = vadd.f32 %v4092, %v4124
        %v4141 = vadd.f32 %v4093, %v4125
        %v4142 = vadd.f32 %v4094, %v4126
        %v4143 = vadd.f32 %v4095, %v4127
        %v4144 = vadd.f32 %v4096, %v4128
        %v4145 = vadd.f32 %v4097, %v4129
        %v4146 = vadd.f32 %v4098, %v4130
        %v4147 = vadd.f32 %v4099, %v4131
        %v4148 = vadd.f32 %v4100, %v4132
        %v4149 = vadd.f32 %v4133, %v2276
        %v4150 = vadd.f32 %v4134, %v2276
        %v4151 = vadd.f32 %v4135, %v2281
        %v4152 = vadd.f32 %v4136, %v2281
        %v4153 = vadd.f32 %v4137, %v2286
        %v4154 = vadd.f32 %v4138, %v2286
        %v4155 = vadd.f32 %v4139, %v2291
        %v4156 = vadd.f32 %v4140, %v2291
        %v4157 = vadd.f32 %v4141, %v2276
        %v4158 = vadd.f32 %v4142, %v2276
        %v4159 = vadd.f32 %v4143, %v2281
        %v4160 = vadd.f32 %v4144, %v2281
        %v4161 = vadd.f32 %v4145, %v2286
        %v4162 = vadd.f32 %v4146, %v2286
        %v4163 = vadd.f32 %v4147, %v2291
        %v4164 = vadd.f32 %v4148, %v2291
        %v4165 = vmax.f32 %v4149, 0.0
        %v4166 = vmax.f32 %v4150, 0.0
        %v4167 = vmax.f32 %v4151, 0.0
        %v4168 = vmax.f32 %v4152, 0.0
        %v4169 = vmax.f32 %v4153, 0.0
        %v4170 = vmax.f32 %v4154, 0.0
        %v4171 = vmax.f32 %v4155, 0.0
        %v4172 = vmax.f32 %v4156, 0.0
        %v4173 = vmax.f32 %v4157, 0.0
        %v4174 = vmax.f32 %v4158, 0.0
        %v4175 = vmax.f32 %v4159, 0.0
        %v4176 = vmax.f32 %v4160, 0.0
        %v4177 = vmax.f32 %v4161, 0.0
        %v4178 = vmax.f32 %v4162, 0.0
        %v4179 = vmax.f32 %v4163, 0.0
        %v4180 = vmax.f32 %v4164, 0.0
        %v4181 = vld [vmem:[%s866] sm:$0xf]
        %v4182 = vld [vmem:[%s866 + $0x4] sm:$0xf]
        %v4183 = vunpack.c.l.bf16 %v4181
        %v4184 = vunpack.c.l.bf16 %v4182
        %v4187 = vcombine.high %v4183, %v4183
        %v4188 = vcombine.high %v4184, %v4184
        %v4191 = vsub.f32 %v3229, %v4183
        %v4192 = vsub.f32 %v3230, %v4187
        %v4193 = vsub.f32 %v3231, %v4184
        %v4194 = vsub.f32 %v3232, %v4188
        %v4195 = vand.u32 2147483647, %v4191
        %v4196 = vand.u32 2147483647, %v4192
        %v4197 = vand.u32 2147483647, %v4193
        %v4198 = vand.u32 2147483647, %v4194
        %v4199 = vld [vmem:[#allocation2] sm:$0xff]
        %v4200 = vld [vmem:[#allocation2 + $0x8] sm:$0xff]
        %v4201 = vld [vmem:[#allocation2 + $0x10] sm:$0xff]
        %v4202 = vld [vmem:[#allocation2 + $0x18] sm:$0xff]
        %v4203 = vld [vmem:[#allocation2 + $0x20] sm:$0xff]
        %v4204 = vld [vmem:[#allocation2 + $0x28] sm:$0xff]
        %v4205 = vld [vmem:[#allocation2 + $0x30] sm:$0xff]
        %v4206 = vld [vmem:[#allocation2 + $0x38] sm:$0xff]
        %v4207 = vld [vmem:[#allocation2 + $0x40] sm:$0xff]
        %v4208 = vld [vmem:[#allocation2 + $0x48] sm:$0xff]
        %v4209 = vld [vmem:[#allocation2 + $0x50] sm:$0xff]
        %v4210 = vld [vmem:[#allocation2 + $0x58] sm:$0xff]
        %v4211 = vld [vmem:[#allocation2 + $0x60] sm:$0xff]
        %v4212 = vld [vmem:[#allocation2 + $0x68] sm:$0xff]
        %v4213 = vld [vmem:[#allocation2 + $0x70] sm:$0xff]
        %v4214 = vld [vmem:[#allocation2 + $0x78] sm:$0xff]
        %v4215 = vadd.f32 %v4199, %v2309
        %v4216 = vadd.f32 %v4200, %v2310
        %v4217 = vadd.f32 %v4201, %v2311
        %v4218 = vadd.f32 %v4202, %v2312
        %v4219 = vadd.f32 %v4203, %v2313
        %v4220 = vadd.f32 %v4204, %v2314
        %v4221 = vadd.f32 %v4205, %v2315
        %v4222 = vadd.f32 %v4206, %v2316
        %v4223 = vadd.f32 %v4207, %v2317
        %v4224 = vadd.f32 %v4208, %v2318
        %v4225 = vadd.f32 %v4209, %v2319
        %v4226 = vadd.f32 %v4210, %v2320
        %v4227 = vadd.f32 %v4211, %v2321
        %v4228 = vadd.f32 %v4212, %v2322
        %v4229 = vadd.f32 %v4213, %v2323
        %v4230 = vadd.f32 %v4214, %v2324
        %4231 = vst [vmem:[#allocation2] sm:$0xff] %v4215
        %4232 = vst [vmem:[#allocation2 + $0x8] sm:$0xff] %v4216
        %4233 = vst [vmem:[#allocation2 + $0x10] sm:$0xff] %v4217
        %4234 = vst [vmem:[#allocation2 + $0x18] sm:$0xff] %v4218
        %4235 = vst [vmem:[#allocation2 + $0x20] sm:$0xff] %v4219
        %4236 = vst [vmem:[#allocation2 + $0x28] sm:$0xff] %v4220
        %4237 = vst [vmem:[#allocation2 + $0x30] sm:$0xff] %v4221
        %4238 = vst [vmem:[#allocation2 + $0x38] sm:$0xff] %v4222
        %4239 = vst [vmem:[#allocation2 + $0x40] sm:$0xff] %v4223
        %4240 = vst [vmem:[#allocation2 + $0x48] sm:$0xff] %v4224
        %4241 = vst [vmem:[#allocation2 + $0x50] sm:$0xff] %v4225
        %4242 = vst [vmem:[#allocation2 + $0x58] sm:$0xff] %v4226
        %4243 = vst [vmem:[#allocation2 + $0x60] sm:$0xff] %v4227
        %4244 = vst [vmem:[#allocation2 + $0x68] sm:$0xff] %v4228
        %4245 = vst [vmem:[#allocation2 + $0x70] sm:$0xff] %v4229
        %4246 = vst [vmem:[#allocation2 + $0x78] sm:$0xff] %v4230
        %v4247 = vld [vmem:[#allocation3] sm:$0xff]
        %v4248 = vld [vmem:[#allocation3 + $0x8] sm:$0xff]
        %v4249 = vld [vmem:[#allocation3 + $0x10] sm:$0xff]
        %v4250 = vld [vmem:[#allocation3 + $0x18] sm:$0xff]
        %v4251 = vld [vmem:[#allocation3 + $0x20] sm:$0xff]
        %v4252 = vld [vmem:[#allocation3 + $0x28] sm:$0xff]
        %v4253 = vld [vmem:[#allocation3 + $0x30] sm:$0xff]
        %v4254 = vld [vmem:[#allocation3 + $0x38] sm:$0xff]
        %v4255 = vld [vmem:[#allocation3 + $0x40] sm:$0xff]
        %v4256 = vld [vmem:[#allocation3 + $0x48] sm:$0xff]
        %v4257 = vld [vmem:[#allocation3 + $0x50] sm:$0xff]
        %v4258 = vld [vmem:[#allocation3 + $0x58] sm:$0xff]
        %v4259 = vld [vmem:[#allocation3 + $0x60] sm:$0xff]
        %v4260 = vld [vmem:[#allocation3 + $0x68] sm:$0xff]
        %v4261 = vld [vmem:[#allocation3 + $0x70] sm:$0xff]
        %v4262 = vld [vmem:[#allocation3 + $0x78] sm:$0xff]
        %v4263 = vadd.f32 %v4247, %v4165
        %v4264 = vadd.f32 %v4248, %v4166
        %v4265 = vadd.f32 %v4249, %v4167
        %v4266 = vadd.f32 %v4250, %v4168
        %v4267 = vadd.f32 %v4251, %v4169
        %v4268 = vadd.f32 %v4252, %v4170
        %v4269 = vadd.f32 %v4253, %v4171
        %v4270 = vadd.f32 %v4254, %v4172
        %v4271 = vadd.f32 %v4255, %v4173
        %v4272 = vadd.f32 %v4256, %v4174
        %v4273 = vadd.f32 %v4257, %v4175
        %v4274 = vadd.f32 %v4258, %v4176
        %v4275 = vadd.f32 %v4259, %v4177
        %v4276 = vadd.f32 %v4260, %v4178
        %v4277 = vadd.f32 %v4261, %v4179
        %v4278 = vadd.f32 %v4262, %v4180
        %4279 = vst [vmem:[#allocation3] sm:$0xff] %v4263
        %4280 = vst [vmem:[#allocation3 + $0x8] sm:$0xff] %v4264
        %4281 = vst [vmem:[#allocation3 + $0x10] sm:$0xff] %v4265
        %4282 = vst [vmem:[#allocation3 + $0x18] sm:$0xff] %v4266
        %4283 = vst [vmem:[#allocation3 + $0x20] sm:$0xff] %v4267
        %4284 = vst [vmem:[#allocation3 + $0x28] sm:$0xff] %v4268
        %4285 = vst [vmem:[#allocation3 + $0x30] sm:$0xff] %v4269
        %4286 = vst [vmem:[#allocation3 + $0x38] sm:$0xff] %v4270
        %4287 = vst [vmem:[#allocation3 + $0x40] sm:$0xff] %v4271
        %4288 = vst [vmem:[#allocation3 + $0x48] sm:$0xff] %v4272
        %4289 = vst [vmem:[#allocation3 + $0x50] sm:$0xff] %v4273
        %4290 = vst [vmem:[#allocation3 + $0x58] sm:$0xff] %v4274
        %4291 = vst [vmem:[#allocation3 + $0x60] sm:$0xff] %v4275
        %4292 = vst [vmem:[#allocation3 + $0x68] sm:$0xff] %v4276
        %4293 = vst [vmem:[#allocation3 + $0x70] sm:$0xff] %v4277
        %4294 = vst [vmem:[#allocation3 + $0x78] sm:$0xff] %v4278
        %v4295 = vld [vmem:[#allocation4] sm:$0xff]
        %v4296 = vld [vmem:[#allocation4 + $0x8] sm:$0xff]
        %v4301 = vcombine.low %v4195, %v4196
        %v4302 = vcombine.low %v4197, %v4198
        %v4305 = vadd.f32 %v4295, %v4301
        %v4306 = vadd.f32 %v4296, %v4302
        %4307 = vst [vmem:[#allocation4] sm:$0xff] %v4305
        %4308 = vst [vmem:[#allocation4 + $0x8] sm:$0xff] %v4306
        // Predicated region
        $region73: #{_fused_forward.1} parent=67 // pred_check
          %p4309 = pneg %p945
        $region74: #{_fused_forward.1} parent=67 // pred_check_branch
          %4311 = sbr.rel (%p4309) target = $region76
        $region75: #{_fused_forward.1} parent=67 // pred_region
          %v4312 = vld [vmem:[#allocation2] sm:$0xff]
          %v4313 = vld [vmem:[#allocation2 + $0x8] sm:$0xff]
          %v4314 = vld [vmem:[#allocation2 + $0x10] sm:$0xff]
          %v4315 = vld [vmem:[#allocation2 + $0x18] sm:$0xff]
          %v4316 = vld [vmem:[#allocation2 + $0x20] sm:$0xff]
          %v4317 = vld [vmem:[#allocation2 + $0x28] sm:$0xff]
          %v4318 = vld [vmem:[#allocation2 + $0x30] sm:$0xff]
          %v4319 = vld [vmem:[#allocation2 + $0x38] sm:$0xff]
          %v4320 = vld [vmem:[#allocation2 + $0x40] sm:$0xff]
          %v4321 = vld [vmem:[#allocation2 + $0x48] sm:$0xff]
          %v4322 = vld [vmem:[#allocation2 + $0x50] sm:$0xff]
          %v4323 = vld [vmem:[#allocation2 + $0x58] sm:$0xff]
          %v4324 = vld [vmem:[#allocation2 + $0x60] sm:$0xff]
          %v4325 = vld [vmem:[#allocation2 + $0x68] sm:$0xff]
          %v4326 = vld [vmem:[#allocation2 + $0x70] sm:$0xff]
          %v4327 = vld [vmem:[#allocation2 + $0x78] sm:$0xff]
          %v4328 = vadd.f32 %v4312, %v4313
          %4329 = vadd.xlane.f32.xlu0 %v4328
          %v4330 = vpop.xlane.xlu0 %4329
          %v4331 = vadd.f32 %v4314, %v4315
          %4332 = vadd.xlane.f32.xlu0 %v4331
          %v4333 = vpop.xlane.xlu0 %4332
          %v4334 = vadd.f32 %v4316, %v4317
          %4335 = vadd.xlane.f32.xlu0 %v4334
          %v4336 = vpop.xlane.xlu0 %4335
          %v4337 = vadd.f32 %v4318, %v4319
          %4338 = vadd.xlane.f32.xlu0 %v4337
          %v4339 = vpop.xlane.xlu0 %4338
          %v4340 = vadd.f32 %v4320, %v4321
          %4341 = vadd.xlane.f32.xlu0 %v4340
          %v4342 = vpop.xlane.xlu0 %4341
          %v4343 = vadd.f32 %v4322, %v4323
          %4344 = vadd.xlane.f32.xlu0 %v4343
          %v4345 = vpop.xlane.xlu0 %4344
          %v4346 = vadd.f32 %v4324, %v4325
          %4347 = vadd.xlane.f32.xlu0 %v4346
          %v4348 = vpop.xlane.xlu0 %4347
          %v4349 = vadd.f32 %v4326, %v4327
          %4350 = vadd.xlane.f32.xlu0 %v4349
          %v4351 = vpop.xlane.xlu0 %4350
          %v4352 = vmul.f32 %v4330, 0.00390625
          %v4353 = vmul.f32 %v4333, 0.00390625
          %v4354 = vmul.f32 %v4336, 0.00390625
          %v4355 = vmul.f32 %v4339, 0.00390625
          %v4356 = vmul.f32 %v4342, 0.00390625
          %v4357 = vmul.f32 %v4345, 0.00390625
          %v4358 = vmul.f32 %v4348, 0.00390625
          %v4359 = vmul.f32 %v4351, 0.00390625
          %v4360 = vld [vmem:[#allocation3] sm:$0xff]
          %v4361 = vld [vmem:[#allocation3 + $0x8] sm:$0xff]
          %v4362 = vld [vmem:[#allocation3 + $0x10] sm:$0xff]
          %v4363 = vld [vmem:[#allocation3 + $0x18] sm:$0xff]
          %v4364 = vld [vmem:[#allocation3 + $0x20] sm:$0xff]
          %v4365 = vld [vmem:[#allocation3 + $0x28] sm:$0xff]
          %v4366 = vld [vmem:[#allocation3 + $0x30] sm:$0xff]
          %v4367 = vld [vmem:[#allocation3 + $0x38] sm:$0xff]
          %v4368 = vld [vmem:[#allocation3 + $0x40] sm:$0xff]
          %v4369 = vld [vmem:[#allocation3 + $0x48] sm:$0xff]
          %v4370 = vld [vmem:[#allocation3 + $0x50] sm:$0xff]
          %v4371 = vld [vmem:[#allocation3 + $0x58] sm:$0xff]
          %v4372 = vld [vmem:[#allocation3 + $0x60] sm:$0xff]
          %v4373 = vld [vmem:[#allocation3 + $0x68] sm:$0xff]
          %v4374 = vld [vmem:[#allocation3 + $0x70] sm:$0xff]
          %v4375 = vld [vmem:[#allocation3 + $0x78] sm:$0xff]
          %v4376 = vadd.f32 %v4360, %v4361
          %4377 = vadd.xlane.f32.xlu0 %v4376
          %v4378 = vpop.xlane.xlu0 %4377
          %v4379 = vadd.f32 %v4362, %v4363
          %4380 = vadd.xlane.f32.xlu0 %v4379
          %v4381 = vpop.xlane.xlu0 %4380
          %v4382 = vadd.f32 %v4364, %v4365
          %4383 = vadd.xlane.f32.xlu0 %v4382
          %v4384 = vpop.xlane.xlu0 %4383
          %v4385 = vadd.f32 %v4366, %v4367
          %4386 = vadd.xlane.f32.xlu0 %v4385
          %v4387 = vpop.xlane.xlu0 %4386
          %v4388 = vadd.f32 %v4368, %v4369
          %4389 = vadd.xlane.f32.xlu0 %v4388
          %v4390 = vpop.xlane.xlu0 %4389
          %v4391 = vadd.f32 %v4370, %v4371
          %4392 = vadd.xlane.f32.xlu0 %v4391
          %v4393 = vpop.xlane.xlu0 %4392
          %v4394 = vadd.f32 %v4372, %v4373
          %4395 = vadd.xlane.f32.xlu0 %v4394
          %v4396 = vpop.xlane.xlu0 %4395
          %v4397 = vadd.f32 %v4374, %v4375
          %4398 = vadd.xlane.f32.xlu0 %v4397
          %v4399 = vpop.xlane.xlu0 %4398
          %v4400 = vmul.f32 %v4378, 0.00390625
          %v4401 = vmul.f32 %v4381, 0.00390625
          %v4402 = vmul.f32 %v4384, 0.00390625
          %v4403 = vmul.f32 %v4387, 0.00390625
          %v4404 = vmul.f32 %v4390, 0.00390625
          %v4405 = vmul.f32 %v4393, 0.00390625
          %v4406 = vmul.f32 %v4396, 0.00390625
          %v4407 = vmul.f32 %v4399, 0.00390625
          %v4408 = vld [vmem:[%s902] sm:$0xff]
          %v4409 = vld [vmem:[%s902 + $0x8] sm:$0xff]
          %v4410 = vld [vmem:[%s902 + $0x10] sm:$0xff]
          %v4411 = vld [vmem:[%s902 + $0x18] sm:$0xff]
          %v4412 = vmul.f32 %v4352, %v4408
          %v4413 = vmul.f32 %v4353, %v4409
          %v4414 = vmul.f32 %v4354, %v4410
          %v4415 = vmul.f32 %v4355, %v4411
          %v4416 = vmul.f32 %v4356, %v4408
          %v4417 = vmul.f32 %v4357, %v4409
          %v4418 = vmul.f32 %v4358, %v4410
          %v4419 = vmul.f32 %v4359, %v4411
          %vm4420 = vcmask 64512
          %v4421 = vsel %vm4420, %v4412, 0.0
          %v4422 = vsel %vm4420, %v4413, 0.0
          %v4423 = vadd.f32 %v4421, %v4422
          %v4424 = vsel %vm4420, %v4414, 0.0
          %v4425 = vadd.f32 %v4423, %v4424
          %v4426 = vsel %vm4420, %v4415, 0.0
          %v4427 = vadd.f32 %v4425, %v4426
          %v4428 = vrot.slane %v4427, 4
          %v4429 = vadd.f32 %v4427, %v4428
          %v4430 = vrot.slane %v4429, 2
          %v4431 = vadd.f32 %v4429, %v4430
          %v4432 = vrot.slane %v4431, 1
          %v4433 = vadd.f32 %v4431, %v4432
          %v4434 = vsel %vm4420, %v4416, 0.0
          %v4435 = vsel %vm4420, %v4417, 0.0
          %v4436 = vadd.f32 %v4434, %v4435
          %v4437 = vsel %vm4420, %v4418, 0.0
          %v4438 = vadd.f32 %v4436, %v4437
          %v4439 = vsel %vm4420, %v4419, 0.0
          %v4440 = vadd.f32 %v4438, %v4439
          %v4441 = vrot.slane %v4440, 4
          %v4442 = vadd.f32 %v4440, %v4441
          %v4443 = vrot.slane %v4442, 2
          %v4444 = vadd.f32 %v4442, %v4443
          %v4445 = vrot.slane %v4444, 1
          %v4446 = vadd.f32 %v4444, %v4445
          %v4447 = vld [vmem:[%s905] sm:$0x1]
          %v4449 = vlaneseq
          %v4450 = vshrl.u32 %v4449, 7
          %v4451 = vsub.s32 0, %v4450
          %v4452 = vrot.slane %v4447, %v4451
          %v4454 = vadd.f32 %v4433, %v4452
          %v4455 = vadd.f32 %v4446, %v4452
          %v4456 = vld [vmem:[%s910] sm:$0xff]
          %v4457 = vld [vmem:[%s910 + $0x8] sm:$0xff]
          %v4458 = vld [vmem:[%s910 + $0x10] sm:$0xff]
          %v4459 = vld [vmem:[%s910 + $0x18] sm:$0xff]
          %v4460 = vmul.f32 %v4400, %v4456
          %v4461 = vmul.f32 %v4401, %v4457
          %v4462 = vmul.f32 %v4402, %v4458
          %v4463 = vmul.f32 %v4403, %v4459
          %v4464 = vmul.f32 %v4404, %v4456
          %v4465 = vmul.f32 %v4405, %v4457
          %v4466 = vmul.f32 %v4406, %v4458
          %v4467 = vmul.f32 %v4407, %v4459
          %v4468 = vsel %vm4420, %v4460, 0.0
          %v4469 = vsel %vm4420, %v4461, 0.0
          %v4470 = vadd.f32 %v4468, %v4469
          %v4471 = vsel %vm4420, %v4462, 0.0
          %v4472 = vadd.f32 %v4470, %v4471
          %v4473 = vsel %vm4420, %v4463, 0.0
          %v4474 = vadd.f32 %v4472, %v4473
          %v4475 = vrot.slane %v4474, 4
          %v4476 = vadd.f32 %v4474, %v4475
          %v4477 = vrot.slane %v4476, 2
          %v4478 = vadd.f32 %v4476, %v4477
          %v4479 = vrot.slane %v4478, 1
          %v4480 = vadd.f32 %v4478, %v4479
          %v4481 = vsel %vm4420, %v4464, 0.0
          %v4482 = vsel %vm4420, %v4465, 0.0
          %v4483 = vadd.f32 %v4481, %v4482
          %v4484 = vsel %vm4420, %v4466, 0.0
          %v4485 = vadd.f32 %v4483, %v4484
          %v4486 = vsel %vm4420, %v4467, 0.0
          %v4487 = vadd.f32 %v4485, %v4486
          %v4488 = vrot.slane %v4487, 4
          %v4489 = vadd.f32 %v4487, %v4488
          %v4490 = vrot.slane %v4489, 2
          %v4491 = vadd.f32 %v4489, %v4490
          %v4492 = vrot.slane %v4491, 1
          %v4493 = vadd.f32 %v4491, %v4492
          %v4494 = vld [vmem:[%s913] sm:$0x1]
          %v4496 = vlaneseq
          %v4497 = vshrl.u32 %v4496, 7
          %v4498 = vsub.s32 0, %v4497
          %v4499 = vrot.slane %v4494, %v4498
          %v4501 = vadd.f32 %v4480, %v4499
          %v4502 = vadd.f32 %v4493, %v4499
          %v4503 = vld [vmem:[#allocation4] sm:$0xff]
          %v4504 = vld [vmem:[#allocation4 + $0x8] sm:$0xff]
          %v4507 = vcombine.high %v4503, %v4503
          %v4508 = vcombine.high %v4504, %v4504
          %vm4511 = vcmask 1043456
          %v4512 = vsel %vm4511, %v4503, 0.0
          %v4513 = vsel %vm4511, %v4507, 0.0
          %v4514 = vadd.f32 %v4512, %v4513
          %4515 = vadd.xlane.f32.xlu0 %v4514
          %v4516 = vpop.xlane.xlu0 %4515
          %v4517 = vsel %vm4511, %v4504, 0.0
          %v4518 = vsel %vm4511, %v4508, 0.0
          %v4519 = vadd.f32 %v4517, %v4518
          %4520 = vadd.xlane.f32.xlu0 %v4519
          %v4521 = vpop.xlane.xlu0 %4520
          %v4522 = vsel %vm4511, %v4516, 0.0
          %v4523 = vrot.slane %v4522, 4
          %v4524 = vadd.f32 %v4522, %v4523
          %v4525 = vrot.slane %v4524, 2
          %v4526 = vadd.f32 %v4524, %v4525
          %v4527 = vrot.slane %v4526, 1
          %v4528 = vadd.f32 %v4526, %v4527
          %v4529 = vsel %vm4511, %v4521, 0.0
          %v4530 = vrot.slane %v4529, 4
          %v4531 = vadd.f32 %v4529, %v4530
          %v4532 = vrot.slane %v4531, 2
          %v4533 = vadd.f32 %v4531, %v4532
          %v4534 = vrot.slane %v4533, 1
          %v4535 = vadd.f32 %v4533, %v4534
          %vm4536 = vcmask 0
          %4537 = vst.msk [vmem:[%s943] sm:$0x1] %vm4536, %v4528
          %4538 = vst.msk [vmem:[%s943 + $0x1] sm:$0x1] %vm4536, %v4535
          %s4539 = smul.u32 %s48, 2
          %s4540 = sld [smem:[#allocation6 + %s4539]]
          %vm4541 = vcmask 57344
          %4542 = vst.msk [vmem:[%s798] sm:$0x1] %vm4541, %v4454
          %v4543 = vsel %vm4541, %v4454, -inf
          %4544 = vmax.xlane.f32.xlu0 %v4543
          %v4545 = vpop.xlane.xlu0 %4544
          %v4546 = vsub.f32 %v4454, %v4545
          %v4547 = vmul.f32 %v4546, 1.442695
          %v4548 = vpow.pop %v4547
          %v4549 = vsel %vm4541, %v4548, 0.0
          %4550 = vadd.xlane.f32.xlu0 %v4549
          %v4551 = vpop.xlane.xlu0 %4550
          %v4552 = vlog2.pop %v4551
          %v4553 = vmul.f32 %v4552, 0.6931472
          %v4554 = vadd.f32 %v4545, %v4553
          %v4555 = vlaneseq
          %v4556 = vand.u32 %v4555, 127
          %v4557 = vstv %s4540
          %vm4558 = vcmp.eq.s32.totalorder %v4556, %v4557
          %v4559 = vsel %vm4558, %v4454, 0.0
          %v4560 = vsel %vm4541, %v4559, 0.0
          %4561 = vadd.xlane.f32.xlu0 %v4560
          %v4562 = vpop.xlane.xlu0 %4561
          %v4563 = vsub.f32 %v4554, %v4562
          %4564 = vst.msk [vmem:[%s925] sm:$0x1] %vm4536, %v4563
          %4565 = vst.msk [vmem:[%s805] sm:$0x1] %vm4541, %v4501
          %v4566 = vsel %vm4541, %v4501, -inf
          %4567 = vmax.xlane.f32.xlu0 %v4566
          %v4568 = vpop.xlane.xlu0 %4567
          %v4569 = vsub.f32 %v4501, %v4568
          %v4570 = vmul.f32 %v4569, 1.442695
          %v4571 = vpow.pop %v4570
          %v4572 = vsel %vm4541, %v4571, 0.0
          %4573 = vadd.xlane.f32.xlu0 %v4572
          %v4574 = vpop.xlane.xlu0 %4573
          %v4575 = vlog2.pop %v4574
          %v4576 = vmul.f32 %v4575, 0.6931472
          %v4577 = vadd.f32 %v4568, %v4576
          %v4578 = vsel %vm4558, %v4501, 0.0
          %v4579 = vsel %vm4541, %v4578, 0.0
          %4580 = vadd.xlane.f32.xlu0 %v4579
          %v4581 = vpop.xlane.xlu0 %4580
          %v4582 = vsub.f32 %v4577, %v4581
          %4583 = vst.msk [vmem:[%s934] sm:$0x1] %vm4536, %v4582
          %s4584 = sadd.s32 %s4539, 1
          %s4585 = sld [smem:[#allocation6 + %s4584]]
          %s4586 = scalar_lea.vmem %s798, 1 [#allocation9]
          %4587 = vst.msk [vmem:[%s4586] sm:$0x1] %vm4541, %v4455
          %v4588 = vsel %vm4541, %v4455, -inf
          %4589 = vmax.xlane.f32.xlu0 %v4588
          %v4590 = vpop.xlane.xlu0 %4589
          %v4591 = vsub.f32 %v4455, %v4590
          %v4592 = vmul.f32 %v4591, 1.442695
          %v4593 = vpow.pop %v4592
          %v4594 = vsel %vm4541, %v4593, 0.0
          %4595 = vadd.xlane.f32.xlu0 %v4594
          %v4596 = vpop.xlane.xlu0 %4595
          %v4597 = vlog2.pop %v4596
          %v4598 = vmul.f32 %v4597, 0.6931472
          %v4599 = vadd.f32 %v4590, %v4598
          %v4600 = vstv %s4585
          %vm4601 = vcmp.eq.s32.totalorder %v4556, %v4600
          %v4602 = vsel %vm4601, %v4455, 0.0
          %v4603 = vsel %vm4541, %v4602, 0.0
          %4604 = vadd.xlane.f32.xlu0 %v4603
          %v4605 = vpop.xlane.xlu0 %4604
          %v4606 = vsub.f32 %v4599, %v4605
          %s4607 = scalar_lea.vmem %s925, 1
          %4608 = vst.msk [vmem:[%s4607] sm:$0x1] %vm4536, %v4606
          %s4609 = scalar_lea.vmem %s805, 1 [#allocation11]
          %4610 = vst.msk [vmem:[%s4609] sm:$0x1] %vm4541, %v4502
          %v4611 = vsel %vm4541, %v4502, -inf
          %4612 = vmax.xlane.f32.xlu0 %v4611
          %v4613 = vpop.xlane.xlu0 %4612
          %v4614 = vsub.f32 %v4502, %v4613
          %v4615 = vmul.f32 %v4614, 1.442695
          %v4616 = vpow.pop %v4615
          %v4617 = vsel %vm4541, %v4616, 0.0
          %4618 = vadd.xlane.f32.xlu0 %v4617
          %v4619 = vpop.xlane.xlu0 %4618
          %v4620 = vlog2.pop %v4619
          %v4621 = vmul.f32 %v4620, 0.6931472
          %v4622 = vadd.f32 %v4613, %v4621
          %v4623 = vsel %vm4601, %v4502, 0.0
          %v4624 = vsel %vm4541, %v4623, 0.0
          %4625 = vadd.xlane.f32.xlu0 %v4624
          %v4626 = vpop.xlane.xlu0 %4625
          %v4627 = vsub.f32 %v4622, %v4626
          %s4628 = scalar_lea.vmem %s934, 1
          %4629 = vst.msk [vmem:[%s4628] sm:$0x1] %vm4536, %v4627
        $region76: #{_fused_forward.1} parent=67 // pred_fallthru
          _
        %s4630 = sand.u32 %s395, 1
        %s4631 = scalar_lea.sflag [#allocation8], %s4630
        %s4632 = sand.u32 %s395, 1
        %s4633 = smul.addr %s4632, 8
        %s4634 = scalar_lea.vmem [#allocation7], %s4633
        %s4635 = sand.u32 %s42, 1
        %s4636 = scalar_lea.sflag [#allocation10], %s4635
        %s4637 = sand.u32 %s423, 1
        %s4638 = smul.addr %s4637, 2
        %s4639 = scalar_lea.vmem [#allocation9], %s4638
        %s4640 = sand.u32 %s42, 1
        %s4641 = scalar_lea.sflag [#allocation10], %s4640
        %s4642 = sand.u32 %s451, 1
        %s4643 = smul.addr %s4642, 2
        %s4644 = scalar_lea.vmem [#allocation11], %s4643
        %s4645 = smul.u32 2, %s48
        %p4646 = scmp.lt.s32.totalorder %s47, 1
        %s4647 = scalar_select %p4646, %s47, 1
        %p4648 = scmp.lt.s32.totalorder %s4645, 1
        %s4649 = scalar_select %p4648, %s4645, 1
        %s4650 = smul.addr %s4647, 2
        %s4651 = sadd.s32 %s4649, %s4650
        %s4652 = scalar_lea.vmem %s16, %s4651
        %s4653 = smul.u32 2, %s48
        %p4654 = scmp.lt.s32.totalorder %s47, 1
        %s4655 = scalar_select %p4654, %s47, 1
        %p4656 = scmp.lt.s32.totalorder %s4653, 1
        %s4657 = scalar_select %p4656, %s4653, 1
        %s4658 = smul.addr %s4655, 2
        %s4659 = sadd.s32 %s4657, %s4658
        %s4660 = scalar_lea.vmem %s17, %s4659
        %s4661 = smul.u32 2, %s48
        %p4662 = scmp.lt.s32.totalorder %s47, 1
        %s4663 = scalar_select %p4662, %s47, 1
        %p4664 = scmp.lt.s32.totalorder %s4661, 1
        %s4665 = scalar_select %p4664, %s4661, 1
        %s4666 = smul.addr %s4663, 2
        %s4667 = sadd.s32 %s4665, %s4666
        %s4668 = scalar_lea.vmem %s18, %s4667
        // Predicated region
        $region77: #{_fused_forward.1} parent=67 // pred_check
          %p4669 = pneg %p405
        $region78: #{_fused_forward.1} parent=67 // pred_check_branch
          %4671 = sbr.rel (%p4669) target = $region80
        $region79: #{_fused_forward.1} parent=67 // pred_region
          %s4672 = smul.u32 2, %s48
          %s4673 = smul.u32 2, %s49
          %s4675 = ssub.s32 128, 128
          %4676 = vsyncadd %s4631, %s4675
          %s4677 = smul.addr %s4672, 2
          %s4678 = sadd.s32 %s4673, %s4677
          %s4679 = smul.addr %s47, 4
          %s4680 = sadd.s32 %s4678, %s4679
          %s4681 = smul.addr %s4680, 32
          %s4682 = scalar_lea.hbm %s13, %s4681
          %s4683 = sshll.u32 %s4634, 4
          %s4684 = int_to_ptr.vmem [resolvable:$true] %s4683
          %4689 = dma.vmem_to_hbm [thread:$0]  %s4684, 128, %s4682, %s4631, 64, 64, 4
        $region80: #{_fused_forward.1} parent=67 // pred_fallthru
          _
        // Predicated region
        $region81: #{_fused_forward.1} parent=67 // pred_check
          %p4690 = pneg %p433
        $region82: #{_fused_forward.1} parent=67 // pred_check_branch
          %4692 = sbr.rel (%p4690) target = $region84
        $region83: #{_fused_forward.1} parent=67 // pred_region
          %s4693 = smul.u32 2, %s48
          %s4695 = ssub.s32 32, 32
          %4696 = vsyncadd %s4636, %s4695
          %s4697 = smul.addr %s47, 2
          %s4698 = sadd.s32 %s4693, %s4697
          %s4699 = smul.addr %s4698, 16
          %s4700 = scalar_lea.hbm %s14, %s4699
          %s4701 = sshll.u32 %s4639, 4
          %s4702 = int_to_ptr.vmem [resolvable:$true] %s4701
          %4707 = dma.vmem_to_hbm [thread:$0]  %s4702, 32, %s4700, %s4636, 16, 16, 1
        $region84: #{_fused_forward.1} parent=67 // pred_fallthru
          _
        // Predicated region
        $region85: #{_fused_forward.1} parent=67 // pred_check
          %p4708 = pneg %p461
        $region86: #{_fused_forward.1} parent=67 // pred_check_branch
          %4710 = sbr.rel (%p4708) target = $region88
        $region87: #{_fused_forward.1} parent=67 // pred_region
          %s4711 = smul.u32 2, %s48
          %s4713 = ssub.s32 32, 32
          %4714 = vsyncadd %s4641, %s4713
          %s4715 = smul.addr %s47, 2
          %s4716 = sadd.s32 %s4711, %s4715
          %s4717 = smul.addr %s4716, 16
          %s4718 = scalar_lea.hbm %s15, %s4717
          %s4719 = sshll.u32 %s4644, 4
          %s4720 = int_to_ptr.vmem [resolvable:$true] %s4719
          %4725 = dma.vmem_to_hbm [thread:$0]  %s4720, 32, %s4718, %s4641, 16, 16, 1
        $region88: #{_fused_forward.1} parent=67 // pred_fallthru
          _
        // Predicated region
        $region89: #{_fused_forward.1} parent=67 // pred_check
          %p4726 = pneg %p489
        $region90: #{_fused_forward.1} parent=67 // pred_check_branch
          %4728 = sbr.rel (%p4726) target = $region92
        $region91: #{_fused_forward.1} parent=67 // pred_region
          %s4729 = smul.u32 2, %s48
        $region92: #{_fused_forward.1} parent=67 // pred_fallthru
          _
        // Predicated region
        $region93: #{_fused_forward.1} parent=67 // pred_check
          %p4730 = pneg %p517
        $region94: #{_fused_forward.1} parent=67 // pred_check_branch
          %4732 = sbr.rel (%p4730) target = $region96
        $region95: #{_fused_forward.1} parent=67 // pred_region
          %s4733 = smul.u32 2, %s48
        $region96: #{_fused_forward.1} parent=67 // pred_fallthru
          _
        // Predicated region
        $region97: #{_fused_forward.1} parent=67 // pred_check
          %p4734 = pneg %p545
        $region98: #{_fused_forward.1} parent=67 // pred_check_branch
          %4736 = sbr.rel (%p4734) target = $region100
        $region99: #{_fused_forward.1} parent=67 // pred_region
          %s4737 = smul.u32 2, %s48
        $region100: #{_fused_forward.1} parent=67 // pred_fallthru
          _
      $region68: #{_fused_forward.1} parent=5 // pred_fallthru
        _
      %p4738 = scmp.le.s32.totalorder 2, %s37
      // Predicated region
      $region101: #{_fused_forward.1} parent=5 // pred_check
        %p4739 = pneg %p4738
      $region102: #{_fused_forward.1} parent=5 // pred_check_branch
        %4741 = sbr.rel (%p4739) target = $region104
      $region103: #{_fused_forward.1} parent=5 // pred_region
        %s4742 = ssub.s32 %s37, 2
        // Predicated region
        $region105: #{_fused_forward.1} parent=103 // pred_check
          %p4743 = pneg %p411
        $region106: #{_fused_forward.1} parent=103 // pred_check_branch
          %4745 = sbr.rel (%p4743) target = $region108
        $region107: #{_fused_forward.1} parent=103 // pred_region
          %s4746 = sand.u32 %s396, 1
          %s4747 = scalar_lea.sflag [#allocation8], %s4746
          %s4748 = sand.u32 %s396, 1
          %s4749 = smul.addr %s4748, 8
          %s4750 = scalar_lea.vmem [#allocation7], %s4749
          %4751 = dma.done %s4747, 128
        $region108: #{_fused_forward.1} parent=103 // pred_fallthru
          _
        // Predicated region
        $region109: #{_fused_forward.1} parent=103 // pred_check
          %p4752 = pneg %p439
        $region110: #{_fused_forward.1} parent=103 // pred_check_branch
          %4754 = sbr.rel (%p4752) target = $region112
        $region111: #{_fused_forward.1} parent=103 // pred_region
          %s4755 = sand.u32 %s43, 1
          %s4756 = scalar_lea.sflag [#allocation10], %s4755
          %s4757 = sand.u32 %s424, 1
          %s4758 = smul.addr %s4757, 2
          %s4759 = scalar_lea.vmem [#allocation9], %s4758
          %4760 = dma.done %s4756, 32
        $region112: #{_fused_forward.1} parent=103 // pred_fallthru
          _
        // Predicated region
        $region113: #{_fused_forward.1} parent=103 // pred_check
          %p4761 = pneg %p467
        $region114: #{_fused_forward.1} parent=103 // pred_check_branch
          %4763 = sbr.rel (%p4761) target = $region116
        $region115: #{_fused_forward.1} parent=103 // pred_region
          %s4764 = sand.u32 %s43, 1
          %s4765 = scalar_lea.sflag [#allocation10], %s4764
          %s4766 = sand.u32 %s452, 1
          %s4767 = smul.addr %s4766, 2
          %s4768 = scalar_lea.vmem [#allocation11], %s4767
          %4769 = dma.done %s4765, 32
        $region116: #{_fused_forward.1} parent=103 // pred_fallthru
          _
        // Predicated region
        $region117: #{_fused_forward.1} parent=103 // pred_check
          %p4770 = pneg %p495
        $region118: #{_fused_forward.1} parent=103 // pred_check_branch
          %4772 = sbr.rel (%p4770) target = $region120
        $region119: #{_fused_forward.1} parent=103 // pred_region
          %s4773 = smul.u32 2, %s51
          %p4774 = scmp.lt.s32.totalorder %s50, 1
          %s4775 = scalar_select %p4774, %s50, 1
          %p4776 = scmp.lt.s32.totalorder %s4773, 1
          %s4777 = scalar_select %p4776, %s4773, 1
          %s4778 = smul.addr %s4775, 2
          %s4779 = sadd.s32 %s4777, %s4778
          %s4780 = scalar_lea.vmem %s16, %s4779
        $region120: #{_fused_forward.1} parent=103 // pred_fallthru
          _
        // Predicated region
        $region121: #{_fused_forward.1} parent=103 // pred_check
          %p4781 = pneg %p523
        $region122: #{_fused_forward.1} parent=103 // pred_check_branch
          %4783 = sbr.rel (%p4781) target = $region124
        $region123: #{_fused_forward.1} parent=103 // pred_region
          %s4784 = smul.u32 2, %s51
          %p4785 = scmp.lt.s32.totalorder %s50, 1
          %s4786 = scalar_select %p4785, %s50, 1
          %p4787 = scmp.lt.s32.totalorder %s4784, 1
          %s4788 = scalar_select %p4787, %s4784, 1
          %s4789 = smul.addr %s4786, 2
          %s4790 = sadd.s32 %s4788, %s4789
          %s4791 = scalar_lea.vmem %s17, %s4790
        $region124: #{_fused_forward.1} parent=103 // pred_fallthru
          _
        // Predicated region
        $region125: #{_fused_forward.1} parent=103 // pred_check
          %p4792 = pneg %p551
        $region126: #{_fused_forward.1} parent=103 // pred_check_branch
          %4794 = sbr.rel (%p4792) target = $region128
        $region127: #{_fused_forward.1} parent=103 // pred_region
          %s4795 = smul.u32 2, %s51
          %p4796 = scmp.lt.s32.totalorder %s50, 1
          %s4797 = scalar_select %p4796, %s50, 1
          %p4798 = scmp.lt.s32.totalorder %s4795, 1
          %s4799 = scalar_select %p4798, %s4795, 1
          %s4800 = smul.addr %s4797, 2
          %s4801 = sadd.s32 %s4799, %s4800
          %s4802 = scalar_lea.vmem %s18, %s4801
        $region128: #{_fused_forward.1} parent=103 // pred_fallthru
          _
      $region104: #{_fused_forward.1} parent=5 // pred_fallthru
        _
    $region6: #{_fused_forward.1} parent=1 // loop_footer
      %s41 = sadd.s32 1, %s37
    $region7: #{_fused_forward.1} parent=1 // loop_footer_branch
      %36 = sbr.rel target = $region3
    $region8: #{_fused_forward.1} parent=1 // loop_exit
      _
    %4803 = vsyncpa [#allocation8], 1
    %s4804 = scalar_lea.sflag [#allocation8], 1
    %4805 = vsyncpa %s4804, 1
    %4806 = vsyncpa [#allocation10], 1
    %s4807 = scalar_lea.sflag [#allocation10], 1
    %4808 = vsyncpa %s4807, 1

</llo_original>
